<compile_context>
chip_gen: v6e
topology: v6e:2x2x1
jax: 0.10.0
libtpu: 0.0.40
codegen_flags: <defaults>
</compile_context>

<pallas_src>
import numpy as np
import jax
import jax.numpy as jnp
from jax.experimental import pallas as pl
from jax.experimental.pallas import tpu as pltpu

_HI = jax.lax.Precision.HIGHEST
_INV_SQRT2 = 0.7071067811865476
_LANE = 128


# ---------------------------------------------------------------------------
# Kernel: a relayout-free chain of matmuls on a (rows, lanes = batch) slab.
# ---------------------------------------------------------------------------
def _convfuse_kernel(x_ref, gn_ref, m1_ref, vec1_ref, sel_ref, ge_ref,
                     m2_ref, mv_ref, mp_ref, vec2_ref, out_ref):
    x = x_ref[...]                                   # (C*H, Bt), lanes = batch
    n = x.shape[0]

    # GroupNorm(1, C, eps=1e-8): per-sample (= per-lane) stats over all C*H
    # rows, two-pass, then a fused per-row scale/shift (affine gnw/gnb).
    mean = jnp.sum(x, axis=0, keepdims=True) * (1.0 / n)        # (1, Bt)
    xc = x - mean
    var = jnp.sum(xc * xc, axis=0, keepdims=True) * (1.0 / n)
    inv_std = jax.lax.rsqrt(var + 1e-8)
    xn = (xc * inv_std) * gn_ref[:, 0:1] + gn_ref[:, 1:2]       # (C*H, Bt)

    # rfft along H fused with a[0] = Conv1d(2C->4C, k=1): one K=C*H matmul.
    h1 = jnp.dot(m1_ref[...], xn, preferred_element_type=jnp.float32,
                 precision=_HI) + vec1_ref[:, 0:1]              # (4C*F, Bt)

    # a[1]: GELU (exact erf form == torch.nn.GELU default).
    h1 = 0.5 * h1 * (1.0 + jax.lax.erf(h1 * _INV_SQRT2))

    # a[2]: GRN over the frequency axis.  Sum-of-squares per (channel,sample)
    # via a 0/1 selector matmul; Gx.mean over a size-1 axis is identity; the
    # per-(o,b) factor is broadcast back via a gamma-valued expander matmul;
    # algebraically factored as h1 * (gamma*Nx + 1) + beta.
    ssq = jnp.dot(sel_ref[...], h1 * h1,
                  preferred_element_type=jnp.float32)           # (4C, Bt)
    gx = jnp.sqrt(ssq)
    nx = gx * pl.reciprocal(gx + 1e-6, approx=True)
    scale = jnp.dot(ge_ref[...], nx,
                    preferred_element_type=jnp.float32) + 1.0   # (4C*F, Bt)
    h1 = h1 * scale + vec1_ref[:, 1:2]

    # a[3]: Dropout(0.1) -> identity at inference time.
    # TODO(synk): training-mode dropout (RNG mask) intentionally not emitted.

    # a[4] = Conv1d(4C->C, k=1) fused with irfft(n=H): one K=4C*F matmul.
    yt = jnp.dot(m2_ref[...], h1, preferred_element_type=jnp.float32,
                 precision=_HI) + vec2_ref[:, 0:1]              # (C/2*H, Bt)

    # v: Conv1d(C -> C/2, k=1) on the GroupNorm output, as (wv (x) I_H).
    vx = (jnp.dot(mv_ref[...], xn, preferred_element_type=jnp.float32)
          + vec2_ref[:, 1:2])
    z = yt * vx

    # proj: Conv1d(C/2 -> C/2, k=1) as (wp (x) I_H); lane-dense store.
    out_ref[...] = (jnp.dot(mp_ref[...], z, preferred_element_type=jnp.float32)
                    + vec2_ref[:, 2:3])


# ---------------------------------------------------------------------------
# Host-side operator fusion (float64, done once per parameter set).
# ---------------------------------------------------------------------------
def _build_consts(params, C, H):
    F = H // 2 + 1
    C2 = C // 2
    C4 = 4 * C

    # Real DFT / inverse-real-DFT matrices (so rfft / irfft become matmuls).
    hh = np.arange(H, dtype=np.float64)
    kk = np.arange(F, dtype=np.float64)
    ang = 2.0 * np.pi * np.outer(hh, kk) / H            # (H, F)
    dftc = np.cos(ang)                                   # real(rfft)
    dfts = -np.sin(ang)                                  # imag(rfft)

    ang2 = 2.0 * np.pi * np.outer(kk, hh) / H            # (F, H)
    w = np.full((F, 1), 2.0)
    w[0, 0] = 1.0
    if H % 2 == 0:
        w[-1, 0] = 1.0
    irc = (w / H) * np.cos(ang2)                         # (F, H)
    irs = -(2.0 / H) * np.sin(ang2)                      # sin rows 0 / Nyquist
    #                                                      are exactly zero.

    f64 = lambda a: np.asarray(a, dtype=np.float64)
    w1, b1 = f64(params["w1"]), f64(params["b1"]).ravel()
    w2, b2 = f64(params["w2"]), f64(params["b2"]).ravel()
    wv, bv = f64(params["wv"]), f64(params["bv"]).ravel()
    wp, bp = f64(params["wp"]), f64(params["bp"]).ravel()
    gamma = f64(params["gamma"]).ravel()
    beta = f64(params["beta"]).ravel()
    gnw = f64(params["gnw"]).ravel()
    gnb = f64(params["gnb"]).ravel()

    # M1[(o,f),(c,h)] = w1[o,c]*dftc[h,f] + w1[o,C+c]*dfts[h,f]   (4C*F, C*H)
    m1 = (np.einsum("oc,hf->ofch", w1[:, :C], dftc)
          + np.einsum("oc,hf->ofch", w1[:, C:], dfts)).reshape(C4 * F, C * H)
    b1e = np.repeat(b1, F)[:, None]                      # (4C*F, 1)

    # GRN helpers: selector (sum over f) and gamma-valued expander.
    sel = np.kron(np.eye(C4), np.ones((1, F)))           # (4C, 4C*F)
    ge = np.kron(np.diag(gamma), np.ones((F, 1)))        # (4C*F, 4C)
    betae = np.repeat(beta, F)[:, None]

    # M2[(c2,h),(i,f)] = w2[c2,i]*irc[f,h] + w2[C2+c2,i]*irs[f,h] (C2*H, 4C*F)
    m2 = (np.einsum("ci,fh->chif", w2[:C2], irc)
          + np.einsum("ci,fh->chif", w2[C2:], irs)).reshape(C2 * H, C4 * F)
    byt = (np.einsum("c,fh->ch", b2[:C2], irc)
           + np.einsum("c,fh->ch", b2[C2:], irs)).reshape(C2 * H, 1)

    mv = np.kron(wv, np.eye(H))                          # (C2*H, C*H)
    bve = np.repeat(bv, H)[:, None]
    mp = np.kron(wp, np.eye(H))                          # (C2*H, C2*H)
    bpe = np.repeat(bp, H)[:, None]

    gn = np.stack([np.repeat(gnw, H), np.repeat(gnb, H)], axis=1)  # (C*H, 2)
    vec1 = np.concatenate([b1e, betae], axis=1)          # (4C*F, 2)
    vec2 = np.concatenate([byt, bve, bpe], axis=1)       # (C2*H, 3)

    cvt = lambda a: jnp.asarray(a, jnp.float32)
    return (cvt(gn), cvt(m1), cvt(vec1), cvt(sel), cvt(ge),
            cvt(m2), cvt(mv), cvt(mp), cvt(vec2))


# ---------------------------------------------------------------------------
# Grid sizing (generation aware, lane-dense batch blocks).
# ---------------------------------------------------------------------------
def _num_tensorcores():
    """Best-effort TensorCore count (v7x: 2 per chip); safe fallback = 1."""
    try:
        info = pltpu.get_tpu_info()
    except Exception:
        return 1
    for name in ("num_cores", "core_count", "num_tensorcores",
                 "tensorcore_count", "num_cores_per_chip"):
        v = getattr(info, name, None)
        if isinstance(v, (int, np.integer)) and 0 < int(v) <= 8:
            return int(v)
    return 1


def _pick_grid(B, n_cores, block_b=None):
    if block_b is not None:
        bt = max(_LANE, ((block_b + _LANE - 1) // _LANE) * _LANE)
        Bp = ((max(B, 1) + bt - 1) // bt) * bt
        return Bp, bt, Bp // bt
    Bp = ((max(B, 1) + _LANE - 1) // _LANE) * _LANE      # batch padded to 128k
    tiles = Bp // _LANE
    # One grid step per TensorCore when the padded batch splits evenly
    # (v7x: 2 cores); otherwise a single step (v5e/v6e: grid is a serial loop).
    steps = n_cores if (n_cores > 1 and tiles % n_cores == 0) else 1
    # Keep per-step slabs <= 8 lane-tiles (1024 samples); VMEM stays tiny.
    while (tiles // steps) > 8 and tiles % (steps * 2) == 0:
        steps *= 2
    return Bp, (tiles // steps) * _LANE, steps


# ---------------------------------------------------------------------------
# Forward wrapper.
# ---------------------------------------------------------------------------
def convfuse_forward(x, params, block_b=None):
    B, C, H = x.shape
    assert C % 2 == 0, "dim must be even"
    C2 = C // 2
    CH = C * H
    F = H // 2 + 1
    rows1, rows2 = 4 * C * F, C2 * H

    consts = _build_consts(params, C, H)
    Bp, bt, steps = _pick_grid(B, _num_tensorcores(), block_b)

    xp = x if Bp == B else jnp.pad(x, ((0, Bp - B), (0, 0), (0, 0)))
    # Host layout plumbing: one small (Bp, C*H) -> (C*H, Bp) transpose so the
    # kernel sees a fixed lanes=batch layout end to end (lane-dense stores).
    x_t = xp.reshape(Bp, CH).T

    vmem = pl.BlockSpec(memory_space=pltpu.MemorySpace.VMEM)   # pinned consts
    in_specs = [pl.BlockSpec((CH, bt), lambda i: (0, i))] + [vmem] * len(consts)
    out_specs = pl.BlockSpec((rows2, bt), lambda i: (0, i))

    flops = 2 * Bp * (rows1 * CH + 2 * (4 * C) * rows1
                      + rows2 * rows1 + rows2 * CH + rows2 * rows2)
    cost = pl.CostEstimate(
        flops=int(flops),
        transcendentals=int(Bp * (rows1 + 8 * C + 1)),
        bytes_accessed=int(4 * (CH * Bp + rows2 * Bp
                                + sum(int(np.prod(c.shape)) for c in consts))))

    out_t = pl.pallas_call(
        _convfuse_kernel,
        out_shape=jax.ShapeDtypeStruct((rows2, Bp), jnp.float32),
        grid=(steps,),
        in_specs=in_specs,
        out_specs=out_specs,
        compiler_params=pltpu.CompilerParams(
            dimension_semantics=("parallel",)),
        cost_estimate=cost,
    )(x_t, *consts)

    out = out_t.T.reshape(Bp, C2, H)
    return out[:B]


# ---------------------------------------------------------------------------
# Parameter init and pure-JAX reference (jnp.fft + HIGHEST einsums).
# ---------------------------------------------------------------------------
def init_params(key, dim):
    ks = jax.random.split(key, 12)
    f32 = jnp.float32
    s = 0.2
    return {
        "gnw":   1.0 + s * jax.random.normal(ks[0], (dim, 1), f32),
        "gnb":   s * jax.random.normal(ks[1], (dim, 1), f32),
        "w1":    s * jax.random.normal(ks[2], (4 * dim, 2 * dim), f32),
        "b1":    s * jax.random.normal(ks[3], (4 * dim, 1), f32),
        "gamma": s * jax.random.normal(ks[4], (4 * dim, 1), f32),
        "beta":  s * jax.random.normal(ks[5], (4 * dim, 1), f32),
        "w2":    s * jax.random.normal(ks[6], (dim, 4 * dim), f32),
        "b2":    s * jax.random.normal(ks[7], (dim, 1), f32),
        "wv":    s * jax.random.normal(ks[8], (dim // 2, dim), f32),
        "bv":    s * jax.random.normal(ks[9], (dim // 2, 1), f32),
        "wp":    s * jax.random.normal(ks[10], (dim // 2, dim // 2), f32),
        "bp":    s * jax.random.normal(ks[11], (dim // 2, 1), f32),
    }


def convfuse_reference(x, p):
    B, C, H = x.shape
    hi = jax.lax.Precision.HIGHEST
    mean = jnp.mean(x, axis=(1, 2), keepdims=True)
    var = jnp.mean((x - mean) ** 2, axis=(1, 2), keepdims=True)
    xn = (x - mean) / jnp.sqrt(var + 1e-8)
    xn = xn * p["gnw"][None, :, 0, None] + p["gnb"][None, :, 0, None]
    y = jnp.fft.rfft(xn, axis=-1)
    yf = jnp.concatenate([y.real, y.imag], axis=1)
    h1 = jnp.einsum("oi,bif->bof", p["w1"], yf, precision=hi) + p["b1"][None, :, 0, None]
    h1 = 0.5 * h1 * (1.0 + jax.lax.erf(h1 / np.sqrt(2.0)))
    gx = jnp.linalg.norm(h1, axis=2, keepdims=True)
    nx = gx / (jnp.mean(gx, axis=-1, keepdims=True) + 1e-6)
    h1 = p["gamma"][None, :, 0, None] * (h1 * nx) + p["beta"][None, :, 0, None] + h1
    h2 = jnp.einsum("oi,bif->bof", p["w2"], h1, precision=hi) + p["b2"][None, :, 0, None]
    yr, yi = jnp.split(h2, 2, axis=1)
    yt = jnp.fft.irfft(yr + 1j * yi, n=H, axis=-1)
    vx = jnp.einsum("oi,bih->boh", p["wv"], xn, precision=hi) + p["bv"][None, :, 0, None]
    z = yt * vx
    return jnp.einsum("oi,bih->boh", p["wp"], z, precision=hi) + p["bp"][None, :, 0, None]


if __name__ == "__main__":
    root = jax.random.PRNGKey(0)
    # (B, dim, H): the second config exercises batch padding (B=70 -> 128).
    for (B, dim, H) in [(128, 8, 16), (70, 8, 16)]:
        kx, kp = jax.random.split(jax.random.fold_in(root, B))
        x = jax.random.normal(kx, (B, dim, H), jnp.float32)
        params = init_params(kp, dim)

        out = jax.block_until_ready(convfuse_forward(x, params))
        ref = jax.block_until_ready(convfuse_reference(x, params))
        np.testing.assert_allclose(np.asarray(out), np.asarray(ref),
                                   rtol=2e-2, atol=1e-2)

    print("KERNEL_OK")
</pallas_src>

<mosaic_0001>
module attributes {stable_mosaic.version = 11 : i64} {
  func.func @_convfuse_kernel(%arg0: i32, %arg1: memref<128x128xf32, #tpu.memory_space<vmem>>, %arg2: memref<128x2xf32, #tpu.memory_space<vmem>>, %arg3: memref<288x128xf32, #tpu.memory_space<vmem>>, %arg4: memref<288x2xf32, #tpu.memory_space<vmem>>, %arg5: memref<32x288xf32, #tpu.memory_space<vmem>>, %arg6: memref<288x32xf32, #tpu.memory_space<vmem>>, %arg7: memref<64x288xf32, #tpu.memory_space<vmem>>, %arg8: memref<64x128xf32, #tpu.memory_space<vmem>>, %arg9: memref<64x64xf32, #tpu.memory_space<vmem>>, %arg10: memref<64x3xf32, #tpu.memory_space<vmem>>, %arg11: memref<64x128xf32, #tpu.memory_space<vmem>>) attributes {dimension_semantics = [#tpu.dimension_semantics<parallel>], iteration_bounds = array<i64: 1>, scalar_prefetch = 0 : i64, scratch_operands = 0 : i64, tpu.core_type = #tpu.core_type<tc>, window_params = [{transform_indices = @transform_0, window_bounds = array<i64: 128, 128>}, {pipeline_mode = #tpu.pipeline_mode<synchronous>, transform_indices = @transform_1, window_bounds = array<i64: 128, 2>}, {pipeline_mode = #tpu.pipeline_mode<synchronous>, transform_indices = @transform_2, window_bounds = array<i64: 288, 128>}, {pipeline_mode = #tpu.pipeline_mode<synchronous>, transform_indices = @transform_3, window_bounds = array<i64: 288, 2>}, {pipeline_mode = #tpu.pipeline_mode<synchronous>, transform_indices = @transform_4, window_bounds = array<i64: 32, 288>}, {pipeline_mode = #tpu.pipeline_mode<synchronous>, transform_indices = @transform_5, window_bounds = array<i64: 288, 32>}, {pipeline_mode = #tpu.pipeline_mode<synchronous>, transform_indices = @transform_6, window_bounds = array<i64: 64, 288>}, {pipeline_mode = #tpu.pipeline_mode<synchronous>, transform_indices = @transform_7, window_bounds = array<i64: 64, 128>}, {pipeline_mode = #tpu.pipeline_mode<synchronous>, transform_indices = @transform_8, window_bounds = array<i64: 64, 64>}, {pipeline_mode = #tpu.pipeline_mode<synchronous>, transform_indices = @transform_9, window_bounds = array<i64: 64, 3>}, {transform_indices = @transform_10, window_bounds = array<i64: 64, 128>}]} {
    %c0 = arith.constant 0 : index
    %c0_0 = arith.constant 0 : index
    %0 = vector.load %arg1[%c0, %c0_0] : memref<128x128xf32, #tpu.memory_space<vmem>>, vector<128x128xf32>
    %cst = arith.constant dense<0.000000e+00> : vector<128xf32>
    %1 = vector.multi_reduction <add>, %0, %cst [0] : vector<128x128xf32> to vector<128xf32>
    %2 = vector.shape_cast %1 : vector<128xf32> to vector<1x128xf32>
    %cst_1 = arith.constant 7.812500e-03 : f32
    %3 = vector.broadcast %cst_1 : f32 to vector<1x128xf32>
    %4 = arith.mulf %2, %3 : vector<1x128xf32>
    %5 = vector.broadcast %4 : vector<1x128xf32> to vector<128x128xf32>
    %6 = arith.subf %0, %5 : vector<128x128xf32>
    %7 = arith.mulf %6, %6 : vector<128x128xf32>
    %cst_2 = arith.constant dense<0.000000e+00> : vector<128xf32>
    %8 = vector.multi_reduction <add>, %7, %cst_2 [0] : vector<128x128xf32> to vector<128xf32>
    %9 = vector.shape_cast %8 : vector<128xf32> to vector<1x128xf32>
    %cst_3 = arith.constant 7.812500e-03 : f32
    %10 = vector.broadcast %cst_3 : f32 to vector<1x128xf32>
    %11 = arith.mulf %9, %10 : vector<1x128xf32>
    %cst_4 = arith.constant 9.99999993E-9 : f32
    %12 = vector.broadcast %cst_4 : f32 to vector<1x128xf32>
    %13 = arith.addf %11, %12 : vector<1x128xf32>
    %14 = math.rsqrt %13 : vector<1x128xf32>
    %15 = vector.broadcast %14 : vector<1x128xf32> to vector<128x128xf32>
    %16 = arith.mulf %6, %15 : vector<128x128xf32>
    %c0_5 = arith.constant 0 : index
    %c0_6 = arith.constant 0 : index
    %17 = vector.load %arg2[%c0_5, %c0_6] : memref<128x2xf32, #tpu.memory_space<vmem>>, vector<128x1xf32>
    %18 = vector.broadcast %17 : vector<128x1xf32> to vector<128x128xf32>
    %19 = arith.mulf %16, %18 : vector<128x128xf32>
    %c0_7 = arith.constant 0 : index
    %c1 = arith.constant 1 : index
    %20 = vector.load %arg2[%c0_7, %c1] : memref<128x2xf32, #tpu.memory_space<vmem>>, vector<128x1xf32>
    %21 = vector.broadcast %20 : vector<128x1xf32> to vector<128x128xf32>
    %22 = arith.addf %19, %21 : vector<128x128xf32>
    %c0_8 = arith.constant 0 : index
    %c0_9 = arith.constant 0 : index
    %23 = vector.load %arg3[%c0_8, %c0_9] : memref<288x128xf32, #tpu.memory_space<vmem>>, vector<288x128xf32>
    %cst_10 = arith.constant dense<0.000000e+00> : vector<288x128xf32>
    %24 = tpu.matmul %23, %22, %cst_10 {dimension_numbers = #tpu.dot_dimension_numbers<[1], [0], [0], [1], [0, 0, 1, 1], [], []>, precision = #tpu.contract_precision<fp32>} : vector<288x128xf32>, vector<128x128xf32>, vector<288x128xf32> -> vector<288x128xf32>
    %c0_11 = arith.constant 0 : index
    %c0_12 = arith.constant 0 : index
    %25 = vector.load %arg4[%c0_11, %c0_12] : memref<288x2xf32, #tpu.memory_space<vmem>>, vector<288x1xf32>
    %26 = vector.broadcast %25 : vector<288x1xf32> to vector<288x128xf32>
    %27 = arith.addf %24, %26 : vector<288x128xf32>
    %cst_13 = arith.constant 5.000000e-01 : f32
    %28 = vector.broadcast %cst_13 : f32 to vector<288x128xf32>
    %29 = arith.mulf %28, %27 : vector<288x128xf32>
    %cst_14 = arith.constant 0.707106769 : f32
    %30 = vector.broadcast %cst_14 : f32 to vector<288x128xf32>
    %31 = arith.mulf %27, %30 : vector<288x128xf32>
    %32 = math.erf %31 : vector<288x128xf32>
    %cst_15 = arith.constant 1.000000e+00 : f32
    %33 = vector.broadcast %cst_15 : f32 to vector<288x128xf32>
    %34 = arith.addf %33, %32 : vector<288x128xf32>
    %35 = arith.mulf %29, %34 : vector<288x128xf32>
    %c0_16 = arith.constant 0 : index
    %c0_17 = arith.constant 0 : index
    %36 = vector.load %arg5[%c0_16, %c0_17] : memref<32x288xf32, #tpu.memory_space<vmem>>, vector<32x288xf32>
    %37 = arith.mulf %35, %35 : vector<288x128xf32>
    %cst_18 = arith.constant dense<0.000000e+00> : vector<32x128xf32>
    %38 = tpu.matmul %36, %37, %cst_18 {dimension_numbers = #tpu.dot_dimension_numbers<[1], [0], [0], [1], [0, 0, 1, 1], [], []>} : vector<32x288xf32>, vector<288x128xf32>, vector<32x128xf32> -> vector<32x128xf32>
    %39 = math.sqrt %38 : vector<32x128xf32>
    %cst_19 = arith.constant 9.99999997E-7 : f32
    %40 = vector.broadcast %cst_19 : f32 to vector<32x128xf32>
    %41 = arith.addf %39, %40 : vector<32x128xf32>
    %42 = tpu.reciprocal %41 {approx = true} : vector<32x128xf32> -> vector<32x128xf32>
    %43 = arith.mulf %39, %42 : vector<32x128xf32>
    %c0_20 = arith.constant 0 : index
    %c0_21 = arith.constant 0 : index
    %44 = vector.load %arg6[%c0_20, %c0_21] : memref<288x32xf32, #tpu.memory_space<vmem>>, vector<288x32xf32>
    %cst_22 = arith.constant dense<0.000000e+00> : vector<288x128xf32>
    %45 = tpu.matmul %44, %43, %cst_22 {dimension_numbers = #tpu.dot_dimension_numbers<[1], [0], [0], [1], [0, 0, 1, 1], [], []>} : vector<288x32xf32>, vector<32x128xf32>, vector<288x128xf32> -> vector<288x128xf32>
    %cst_23 = arith.constant 1.000000e+00 : f32
    %46 = vector.broadcast %cst_23 : f32 to vector<288x128xf32>
    %47 = arith.addf %45, %46 : vector<288x128xf32>
    %48 = arith.mulf %35, %47 : vector<288x128xf32>
    %c0_24 = arith.constant 0 : index
    %c1_25 = arith.constant 1 : index
    %49 = vector.load %arg4[%c0_24, %c1_25] : memref<288x2xf32, #tpu.memory_space<vmem>>, vector<288x1xf32>
    %50 = vector.broadcast %49 : vector<288x1xf32> to vector<288x128xf32>
    %51 = arith.addf %48, %50 : vector<288x128xf32>
    %c0_26 = arith.constant 0 : index
    %c0_27 = arith.constant 0 : index
    %52 = vector.load %arg7[%c0_26, %c0_27] : memref<64x288xf32, #tpu.memory_space<vmem>>, vector<64x288xf32>
    %cst_28 = arith.constant dense<0.000000e+00> : vector<64x128xf32>
    %53 = tpu.matmul %52, %51, %cst_28 {dimension_numbers = #tpu.dot_dimension_numbers<[1], [0], [0], [1], [0, 0, 1, 1], [], []>, precision = #tpu.contract_precision<fp32>} : vector<64x288xf32>, vector<288x128xf32>, vector<64x128xf32> -> vector<64x128xf32>
    %c0_29 = arith.constant 0 : index
    %c0_30 = arith.constant 0 : index
    %54 = vector.load %arg10[%c0_29, %c0_30] : memref<64x3xf32, #tpu.memory_space<vmem>>, vector<64x1xf32>
    %55 = vector.broadcast %54 : vector<64x1xf32> to vector<64x128xf32>
    %56 = arith.addf %53, %55 : vector<64x128xf32>
    %c0_31 = arith.constant 0 : index
    %c0_32 = arith.constant 0 : index
    %57 = vector.load %arg8[%c0_31, %c0_32] : memref<64x128xf32, #tpu.memory_space<vmem>>, vector<64x128xf32>
    %cst_33 = arith.constant dense<0.000000e+00> : vector<64x128xf32>
    %58 = tpu.matmul %57, %22, %cst_33 {dimension_numbers = #tpu.dot_dimension_numbers<[1], [0], [0], [1], [0, 0, 1, 1], [], []>} : vector<64x128xf32>, vector<128x128xf32>, vector<64x128xf32> -> vector<64x128xf32>
    %c0_34 = arith.constant 0 : index
    %c1_35 = arith.constant 1 : index
    %59 = vector.load %arg10[%c0_34, %c1_35] : memref<64x3xf32, #tpu.memory_space<vmem>>, vector<64x1xf32>
    %60 = vector.broadcast %59 : vector<64x1xf32> to vector<64x128xf32>
    %61 = arith.addf %58, %60 : vector<64x128xf32>
    %62 = arith.mulf %56, %61 : vector<64x128xf32>
    %c0_36 = arith.constant 0 : index
    %c0_37 = arith.constant 0 : index
    %63 = vector.load %arg9[%c0_36, %c0_37] : memref<64x64xf32, #tpu.memory_space<vmem>>, vector<64x64xf32>
    %cst_38 = arith.constant dense<0.000000e+00> : vector<64x128xf32>
    %64 = tpu.matmul %63, %62, %cst_38 {dimension_numbers = #tpu.dot_dimension_numbers<[1], [0], [0], [1], [0, 0, 1, 1], [], []>} : vector<64x64xf32>, vector<64x128xf32>, vector<64x128xf32> -> vector<64x128xf32>
    %c0_39 = arith.constant 0 : index
    %c2 = arith.constant 2 : index
    %65 = vector.load %arg10[%c0_39, %c2] : memref<64x3xf32, #tpu.memory_space<vmem>>, vector<64x1xf32>
    %66 = vector.broadcast %65 : vector<64x1xf32> to vector<64x128xf32>
    %67 = arith.addf %64, %66 : vector<64x128xf32>
    %c0_40 = arith.constant 0 : index
    %c0_41 = arith.constant 0 : index
    %68 = vector.load %arg11[%c0_40, %c0_41] : memref<64x128xf32, #tpu.memory_space<vmem>>, vector<64x128xf32>
    tpu.vector_store %arg11[%c0_40, %c0_41], %67 {strides = array<i32>} : memref<64x128xf32, #tpu.memory_space<vmem>>, vector<64x128xf32>,
    return
  }
  func.func @transform_0(%arg0: i32) -> (i32, i32) {
    %c0_i32 = arith.constant 0 : i32
    %c0_i32_0 = arith.constant 0 : i32
    return %c0_i32, %arg0 : i32, i32
  }
  func.func @transform_1(%arg0: i32) -> (i32, i32) {
    %c0_i32 = arith.constant 0 : i32
    %c0_i32_0 = arith.constant 0 : i32
    %c0_i32_1 = arith.constant 0 : i32
    return %c0_i32, %c0_i32_0 : i32, i32
  }
  func.func @transform_2(%arg0: i32) -> (i32, i32) {
    %c0_i32 = arith.constant 0 : i32
    %c0_i32_0 = arith.constant 0 : i32
    %c0_i32_1 = arith.constant 0 : i32
    return %c0_i32, %c0_i32_0 : i32, i32
  }
  func.func @transform_3(%arg0: i32) -> (i32, i32) {
    %c0_i32 = arith.constant 0 : i32
    %c0_i32_0 = arith.constant 0 : i32
    %c0_i32_1 = arith.constant 0 : i32
    return %c0_i32, %c0_i32_0 : i32, i32
  }
  func.func @transform_4(%arg0: i32) -> (i32, i32) {
    %c0_i32 = arith.constant 0 : i32
    %c0_i32_0 = arith.constant 0 : i32
    %c0_i32_1 = arith.constant 0 : i32
    return %c0_i32, %c0_i32_0 : i32, i32
  }
  func.func @transform_5(%arg0: i32) -> (i32, i32) {
    %c0_i32 = arith.constant 0 : i32
    %c0_i32_0 = arith.constant 0 : i32
    %c0_i32_1 = arith.constant 0 : i32
    return %c0_i32, %c0_i32_0 : i32, i32
  }
  func.func @transform_6(%arg0: i32) -> (i32, i32) {
    %c0_i32 = arith.constant 0 : i32
    %c0_i32_0 = arith.constant 0 : i32
    %c0_i32_1 = arith.constant 0 : i32
    return %c0_i32, %c0_i32_0 : i32, i32
  }
  func.func @transform_7(%arg0: i32) -> (i32, i32) {
    %c0_i32 = arith.constant 0 : i32
    %c0_i32_0 = arith.constant 0 : i32
    %c0_i32_1 = arith.constant 0 : i32
    return %c0_i32, %c0_i32_0 : i32, i32
  }
  func.func @transform_8(%arg0: i32) -> (i32, i32) {
    %c0_i32 = arith.constant 0 : i32
    %c0_i32_0 = arith.constant 0 : i32
    %c0_i32_1 = arith.constant 0 : i32
    return %c0_i32, %c0_i32_0 : i32, i32
  }
  func.func @transform_9(%arg0: i32) -> (i32, i32) {
    %c0_i32 = arith.constant 0 : i32
    %c0_i32_0 = arith.constant 0 : i32
    %c0_i32_1 = arith.constant 0 : i32
    return %c0_i32, %c0_i32_0 : i32, i32
  }
  func.func @transform_10(%arg0: i32) -> (i32, i32) {
    %c0_i32 = arith.constant 0 : i32
    %c0_i32_0 = arith.constant 0 : i32
    return %c0_i32, %arg0 : i32, i32
  }
}

</mosaic_0001>

<llo_original>
// kernel: tpu_custom_call.1
$region0: #{tpu_custom_call.1}
  #allocation0 [shape = 'u32[]', space=smem, size = 0x4, offset = 0x4, fixed_abs, tag = 'smem constant byte address 0x4 - core index']
  #allocation1 [shape = 'u32[144,128]{1,0:T(1,128)}', space=vmem, size = 0x12000, scoped, tag = 'internal scratch']
  %s0 = inlined_call_operand.vmem [shape: f32[128,128], index: 0, kind: input, shape index: {}]
  %s1 = inlined_call_operand.vmem [shape: f32[128,2], index: 1, kind: input, shape index: {}]
  %s2 = inlined_call_operand.vmem [shape: f32[288,128], index: 2, kind: input, shape index: {}]
  %s3 = inlined_call_operand.vmem [shape: f32[288,2], index: 3, kind: input, shape index: {}]
  %s4 = inlined_call_operand.vmem [shape: f32[32,288], index: 4, kind: input, shape index: {}]
  %s5 = inlined_call_operand.vmem [shape: f32[288,32], index: 5, kind: input, shape index: {}]
  %s6 = inlined_call_operand.vmem [shape: f32[64,288], index: 6, kind: input, shape index: {}]
  %s7 = inlined_call_operand.vmem [shape: f32[64,128], index: 7, kind: input, shape index: {}]
  %s8 = inlined_call_operand.hbm [shape: f32[64,64], index: 8, kind: input, shape index: {}]
  %s9 = inlined_call_operand.vmem [shape: f32[64,3], index: 9, kind: input, shape index: {}]
  %s10 = inlined_call_operand.hbm [shape: f32[64,128], index: 10, kind: output, shape index: {}]
  %s11 = sld [smem:[#allocation0]]
  $region54: #{tpu_custom_call.1} parent=0
    _
  %s13 = ssub.s32 1, %s11
  %s14 = scalar_select 0, %s13, %s11
  $region1: #{tpu_custom_call.1} parent=0
    #allocation2 [shape = 'u8[32768]{0}', space=vmem, size = 0x8000, scoped, tag = 'input window, operand 8, single buffered']
    #allocation3 [shape = 's32[1]{0}', space=sflag, size = 0x4, scoped, tag = 'scoped memory for tpu_custom_call.1']
    #allocation4 [shape = 's32[1]{0}', space=sflag, size = 0x4, scoped, tag = 'scoped memory for tpu_custom_call.1']
    #allocation5 [shape = 'u8[32768]{0}', space=vmem, size = 0x8000, scoped, tag = 'output window, operand 0, single buffered']
    %15 = vsyncpa [#allocation3], 0
    %16 = vsyncpa [#allocation4], 0
    // Predicated region
    $region2: #{tpu_custom_call.1} parent=1 // pred_check
      _
    $region3: #{tpu_custom_call.1} parent=1 // pred_check_branch
      %18 = sbr.rel (0) target = $region5
    $region4: #{tpu_custom_call.1} parent=1 // pred_region
      _
    $region5: #{tpu_custom_call.1} parent=1 // pred_fallthru
      _
    // Predicated region
    $region6: #{tpu_custom_call.1} parent=1 // pred_check
      _
    $region7: #{tpu_custom_call.1} parent=1 // pred_check_branch
      %20 = sbr.rel (0) target = $region9
    $region8: #{tpu_custom_call.1} parent=1 // pred_region
      _
    $region9: #{tpu_custom_call.1} parent=1 // pred_fallthru
      _
    // Predicated region
    $region10: #{tpu_custom_call.1} parent=1 // pred_check
      _
    $region11: #{tpu_custom_call.1} parent=1 // pred_check_branch
      %22 = sbr.rel (0) target = $region13
    $region12: #{tpu_custom_call.1} parent=1 // pred_region
      _
    $region13: #{tpu_custom_call.1} parent=1 // pred_fallthru
      _
    // Predicated region
    $region14: #{tpu_custom_call.1} parent=1 // pred_check
      _
    $region15: #{tpu_custom_call.1} parent=1 // pred_check_branch
      %24 = sbr.rel (0) target = $region17
    $region16: #{tpu_custom_call.1} parent=1 // pred_region
      _
    $region17: #{tpu_custom_call.1} parent=1 // pred_fallthru
      _
    // Predicated region
    $region18: #{tpu_custom_call.1} parent=1 // pred_check
      _
    $region19: #{tpu_custom_call.1} parent=1 // pred_check_branch
      %26 = sbr.rel (0) target = $region21
    $region20: #{tpu_custom_call.1} parent=1 // pred_region
      _
    $region21: #{tpu_custom_call.1} parent=1 // pred_fallthru
      _
    // Predicated region
    $region22: #{tpu_custom_call.1} parent=1 // pred_check
      _
    $region23: #{tpu_custom_call.1} parent=1 // pred_check_branch
      %28 = sbr.rel (0) target = $region25
    $region24: #{tpu_custom_call.1} parent=1 // pred_region
      _
    $region25: #{tpu_custom_call.1} parent=1 // pred_fallthru
      _
    // Predicated region
    $region26: #{tpu_custom_call.1} parent=1 // pred_check
      _
    $region27: #{tpu_custom_call.1} parent=1 // pred_check_branch
      %30 = sbr.rel (0) target = $region29
    $region28: #{tpu_custom_call.1} parent=1 // pred_region
      _
    $region29: #{tpu_custom_call.1} parent=1 // pred_fallthru
      _
    // Predicated region
    $region30: #{tpu_custom_call.1} parent=1 // pred_check
      _
    $region31: #{tpu_custom_call.1} parent=1 // pred_check_branch
      %32 = sbr.rel (0) target = $region33
    $region32: #{tpu_custom_call.1} parent=1 // pred_region
      _
    $region33: #{tpu_custom_call.1} parent=1 // pred_fallthru
      _
    // Predicated region
    $region34: #{tpu_custom_call.1} parent=1 // pred_check
      _
    $region35: #{tpu_custom_call.1} parent=1 // pred_check_branch
      %34 = sbr.rel (0) target = $region37
    $region36: #{tpu_custom_call.1} parent=1 // pred_region
      %s36 = ssub.s32 1024, 1024
      %37 = vsyncadd [#allocation3], %s36
      %s38 = sshll.u32 [#allocation2], 4
      %s39 = int_to_ptr.vmem [resolvable:$true] %s38
      %44 = dma.hbm_to_vmem [thread:$0]  %s8, 1024, %s39, [#allocation3], 128, 128, 8
    $region37: #{tpu_custom_call.1} parent=1 // pred_fallthru
      _
    // Predicated region
    $region38: #{tpu_custom_call.1} parent=1 // pred_check
      _
    $region39: #{tpu_custom_call.1} parent=1 // pred_check_branch
      %46 = sbr.rel (0) target = $region41
    $region40: #{tpu_custom_call.1} parent=1 // pred_region
      _
    $region41: #{tpu_custom_call.1} parent=1 // pred_fallthru
      _
    // Predicated region
    $region42: #{tpu_custom_call.1} parent=1 // pred_check
      _
    $region43: #{tpu_custom_call.1} parent=1 // pred_check_branch
      %48 = sbr.rel (0) target = $region45
    $region44: #{tpu_custom_call.1} parent=1 // pred_region
      %49 = dma.done [#allocation3], 1024
    $region45: #{tpu_custom_call.1} parent=1 // pred_fallthru
      _
    %v50 = vld [vmem:[%s0] sm:$0xff]
    %v51 = vld [vmem:[%s0 + $0x8] sm:$0xff]
    %v52 = vld [vmem:[%s0 + $0x10] sm:$0xff]
    %v53 = vld [vmem:[%s0 + $0x18] sm:$0xff]
    %v54 = vld [vmem:[%s0 + $0x20] sm:$0xff]
    %v55 = vld [vmem:[%s0 + $0x28] sm:$0xff]
    %v56 = vld [vmem:[%s0 + $0x30] sm:$0xff]
    %v57 = vld [vmem:[%s0 + $0x38] sm:$0xff]
    %v58 = vld [vmem:[%s0 + $0x40] sm:$0xff]
    %v59 = vld [vmem:[%s0 + $0x48] sm:$0xff]
    %v60 = vld [vmem:[%s0 + $0x50] sm:$0xff]
    %v61 = vld [vmem:[%s0 + $0x58] sm:$0xff]
    %v62 = vld [vmem:[%s0 + $0x60] sm:$0xff]
    %v63 = vld [vmem:[%s0 + $0x68] sm:$0xff]
    %v64 = vld [vmem:[%s0 + $0x70] sm:$0xff]
    %v65 = vld [vmem:[%s0 + $0x78] sm:$0xff]
    %v66 = vadd.f32 %v50, %v51
    %v67 = vadd.f32 %v66, %v52
    %v68 = vadd.f32 %v67, %v53
    %v69 = vadd.f32 %v68, %v54
    %v70 = vadd.f32 %v69, %v55
    %v71 = vadd.f32 %v70, %v56
    %v72 = vadd.f32 %v71, %v57
    %v73 = vadd.f32 %v72, %v58
    %v74 = vadd.f32 %v73, %v59
    %v75 = vadd.f32 %v74, %v60
    %v76 = vadd.f32 %v75, %v61
    %v77 = vadd.f32 %v76, %v62
    %v78 = vadd.f32 %v77, %v63
    %v79 = vadd.f32 %v78, %v64
    %v80 = vadd.f32 %v79, %v65
    %v81 = vrot.slane %v80, 4
    %v82 = vadd.f32 %v80, %v81
    %v83 = vrot.slane %v82, 2
    %v84 = vadd.f32 %v82, %v83
    %v85 = vrot.slane %v84, 1
    %v86 = vadd.f32 %v84, %v85
    %v87 = vmul.f32 %v86, 0.0078125
    %v88 = vsub.f32 %v50, %v87
    %v89 = vsub.f32 %v51, %v87
    %v90 = vsub.f32 %v52, %v87
    %v91 = vsub.f32 %v53, %v87
    %v92 = vsub.f32 %v54, %v87
    %v93 = vsub.f32 %v55, %v87
    %v94 = vsub.f32 %v56, %v87
    %v95 = vsub.f32 %v57, %v87
    %v96 = vsub.f32 %v58, %v87
    %v97 = vsub.f32 %v59, %v87
    %v98 = vsub.f32 %v60, %v87
    %v99 = vsub.f32 %v61, %v87
    %v100 = vsub.f32 %v62, %v87
    %v101 = vsub.f32 %v63, %v87
    %v102 = vsub.f32 %v64, %v87
    %v103 = vsub.f32 %v65, %v87
    %v104 = vmul.f32 %v88, %v88
    %v105 = vmul.f32 %v89, %v89
    %v106 = vmul.f32 %v90, %v90
    %v107 = vmul.f32 %v91, %v91
    %v108 = vmul.f32 %v92, %v92
    %v109 = vmul.f32 %v93, %v93
    %v110 = vmul.f32 %v94, %v94
    %v111 = vmul.f32 %v95, %v95
    %v112 = vmul.f32 %v96, %v96
    %v113 = vmul.f32 %v97, %v97
    %v114 = vmul.f32 %v98, %v98
    %v115 = vmul.f32 %v99, %v99
    %v116 = vmul.f32 %v100, %v100
    %v117 = vmul.f32 %v101, %v101
    %v118 = vmul.f32 %v102, %v102
    %v119 = vmul.f32 %v103, %v103
    %v120 = vadd.f32 %v104, %v105
    %v121 = vadd.f32 %v120, %v106
    %v122 = vadd.f32 %v121, %v107
    %v123 = vadd.f32 %v122, %v108
    %v124 = vadd.f32 %v123, %v109
    %v125 = vadd.f32 %v124, %v110
    %v126 = vadd.f32 %v125, %v111
    %v127 = vadd.f32 %v126, %v112
    %v128 = vadd.f32 %v127, %v113
    %v129 = vadd.f32 %v128, %v114
    %v130 = vadd.f32 %v129, %v115
    %v131 = vadd.f32 %v130, %v116
    %v132 = vadd.f32 %v131, %v117
    %v133 = vadd.f32 %v132, %v118
    %v134 = vadd.f32 %v133, %v119
    %v135 = vrot.slane %v134, 4
    %v136 = vadd.f32 %v134, %v135
    %v137 = vrot.slane %v136, 2
    %v138 = vadd.f32 %v136, %v137
    %v139 = vrot.slane %v138, 1
    %v140 = vadd.f32 %v138, %v139
    %v141 = vmul.f32 %v140, 0.0078125
    %v142 = vadd.f32 %v141, 1e-08
    %v143 = vrsqrt.pop %v142
    %v144 = vmul.f32 %v88, %v143
    %v145 = vmul.f32 %v89, %v143
    %v146 = vmul.f32 %v90, %v143
    %v147 = vmul.f32 %v91, %v143
    %v148 = vmul.f32 %v92, %v143
    %v149 = vmul.f32 %v93, %v143
    %v150 = vmul.f32 %v94, %v143
    %v151 = vmul.f32 %v95, %v143
    %v152 = vmul.f32 %v96, %v143
    %v153 = vmul.f32 %v97, %v143
    %v154 = vmul.f32 %v98, %v143
    %v155 = vmul.f32 %v99, %v143
    %v156 = vmul.f32 %v100, %v143
    %v157 = vmul.f32 %v101, %v143
    %v158 = vmul.f32 %v102, %v143
    %v159 = vmul.f32 %v103, %v143
    %v160 = vld [vmem:[%s1] sm:$0xff]
    %v161 = vld [vmem:[%s1 + $0x8] sm:$0xff]
    %v162 = vld [vmem:[%s1 + $0x10] sm:$0xff]
    %v163 = vld [vmem:[%s1 + $0x18] sm:$0xff]
    %v164 = vld [vmem:[%s1 + $0x20] sm:$0xff]
    %v165 = vld [vmem:[%s1 + $0x28] sm:$0xff]
    %v166 = vld [vmem:[%s1 + $0x30] sm:$0xff]
    %v167 = vld [vmem:[%s1 + $0x38] sm:$0xff]
    %v168 = vld [vmem:[%s1 + $0x40] sm:$0xff]
    %v169 = vld [vmem:[%s1 + $0x48] sm:$0xff]
    %v170 = vld [vmem:[%s1 + $0x50] sm:$0xff]
    %v171 = vld [vmem:[%s1 + $0x58] sm:$0xff]
    %v172 = vld [vmem:[%s1 + $0x60] sm:$0xff]
    %v173 = vld [vmem:[%s1 + $0x68] sm:$0xff]
    %v174 = vld [vmem:[%s1 + $0x70] sm:$0xff]
    %v175 = vld [vmem:[%s1 + $0x78] sm:$0xff]
    %177 = vset.pattern.permute.xlu0 0
    %178 = vperm.xlu0 %177, %v160
    %v179 = vpop.permute.xlu0 %178
    %182 = vset.pattern.permute.xlu0 0
    %183 = vperm.xlu0 %182, %v161
    %v184 = vpop.permute.xlu0 %183
    %187 = vset.pattern.permute.xlu0 0
    %188 = vperm.xlu0 %187, %v162
    %v189 = vpop.permute.xlu0 %188
    %192 = vset.pattern.permute.xlu0 0
    %193 = vperm.xlu0 %192, %v163
    %v194 = vpop.permute.xlu0 %193
    %197 = vset.pattern.permute.xlu0 0
    %198 = vperm.xlu0 %197, %v164
    %v199 = vpop.permute.xlu0 %198
    %202 = vset.pattern.permute.xlu0 0
    %203 = vperm.xlu0 %202, %v165
    %v204 = vpop.permute.xlu0 %203
    %207 = vset.pattern.permute.xlu0 0
    %208 = vperm.xlu0 %207, %v166
    %v209 = vpop.permute.xlu0 %208
    %212 = vset.pattern.permute.xlu0 0
    %213 = vperm.xlu0 %212, %v167
    %v214 = vpop.permute.xlu0 %213
    %217 = vset.pattern.permute.xlu0 0
    %218 = vperm.xlu0 %217, %v168
    %v219 = vpop.permute.xlu0 %218
    %222 = vset.pattern.permute.xlu0 0
    %223 = vperm.xlu0 %222, %v169
    %v224 = vpop.permute.xlu0 %223
    %227 = vset.pattern.permute.xlu0 0
    %228 = vperm.xlu0 %227, %v170
    %v229 = vpop.permute.xlu0 %228
    %232 = vset.pattern.permute.xlu0 0
    %233 = vperm.xlu0 %232, %v171
    %v234 = vpop.permute.xlu0 %233
    %237 = vset.pattern.permute.xlu0 0
    %238 = vperm.xlu0 %237, %v172
    %v239 = vpop.permute.xlu0 %238
    %242 = vset.pattern.permute.xlu0 0
    %243 = vperm.xlu0 %242, %v173
    %v244 = vpop.permute.xlu0 %243
    %247 = vset.pattern.permute.xlu0 0
    %248 = vperm.xlu0 %247, %v174
    %v249 = vpop.permute.xlu0 %248
    %252 = vset.pattern.permute.xlu0 0
    %253 = vperm.xlu0 %252, %v175
    %v254 = vpop.permute.xlu0 %253
    %v256 = vmul.f32 %v144, %v179
    %v257 = vmul.f32 %v145, %v184
    %v258 = vmul.f32 %v146, %v189
    %v259 = vmul.f32 %v147, %v194
    %v260 = vmul.f32 %v148, %v199
    %v261 = vmul.f32 %v149, %v204
    %v262 = vmul.f32 %v150, %v209
    %v263 = vmul.f32 %v151, %v214
    %v264 = vmul.f32 %v152, %v219
    %v265 = vmul.f32 %v153, %v224
    %v266 = vmul.f32 %v154, %v229
    %v267 = vmul.f32 %v155, %v234
    %v268 = vmul.f32 %v156, %v239
    %v269 = vmul.f32 %v157, %v244
    %v270 = vmul.f32 %v158, %v249
    %v271 = vmul.f32 %v159, %v254
    %272 = vset.pattern.permute.xlu0 1
    %273 = vperm.xlu0 %272, %v160
    %v274 = vpop.permute.xlu0 %273
    %276 = vset.pattern.permute.xlu0 1
    %277 = vperm.xlu0 %276, %v161
    %v278 = vpop.permute.xlu0 %277
    %280 = vset.pattern.permute.xlu0 1
    %281 = vperm.xlu0 %280, %v162
    %v282 = vpop.permute.xlu0 %281
    %284 = vset.pattern.permute.xlu0 1
    %285 = vperm.xlu0 %284, %v163
    %v286 = vpop.permute.xlu0 %285
    %288 = vset.pattern.permute.xlu0 1
    %289 = vperm.xlu0 %288, %v164
    %v290 = vpop.permute.xlu0 %289
    %292 = vset.pattern.permute.xlu0 1
    %293 = vperm.xlu0 %292, %v165
    %v294 = vpop.permute.xlu0 %293
    %296 = vset.pattern.permute.xlu0 1
    %297 = vperm.xlu0 %296, %v166
    %v298 = vpop.permute.xlu0 %297
    %300 = vset.pattern.permute.xlu0 1
    %301 = vperm.xlu0 %300, %v167
    %v302 = vpop.permute.xlu0 %301
    %304 = vset.pattern.permute.xlu0 1
    %305 = vperm.xlu0 %304, %v168
    %v306 = vpop.permute.xlu0 %305
    %308 = vset.pattern.permute.xlu0 1
    %309 = vperm.xlu0 %308, %v169
    %v310 = vpop.permute.xlu0 %309
    %312 = vset.pattern.permute.xlu0 1
    %313 = vperm.xlu0 %312, %v170
    %v314 = vpop.permute.xlu0 %313
    %316 = vset.pattern.permute.xlu0 1
    %317 = vperm.xlu0 %316, %v171
    %v318 = vpop.permute.xlu0 %317
    %320 = vset.pattern.permute.xlu0 1
    %321 = vperm.xlu0 %320, %v172
    %v322 = vpop.permute.xlu0 %321
    %324 = vset.pattern.permute.xlu0 1
    %325 = vperm.xlu0 %324, %v173
    %v326 = vpop.permute.xlu0 %325
    %328 = vset.pattern.permute.xlu0 1
    %329 = vperm.xlu0 %328, %v174
    %v330 = vpop.permute.xlu0 %329
    %332 = vset.pattern.permute.xlu0 1
    %333 = vperm.xlu0 %332, %v175
    %v334 = vpop.permute.xlu0 %333
    %v336 = vadd.f32 %v256, %v274
    %v337 = vadd.f32 %v257, %v278
    %v338 = vadd.f32 %v258, %v282
    %v339 = vadd.f32 %v259, %v286
    %v340 = vadd.f32 %v260, %v290
    %v341 = vadd.f32 %v261, %v294
    %v342 = vadd.f32 %v262, %v298
    %v343 = vadd.f32 %v263, %v302
    %v344 = vadd.f32 %v264, %v306
    %v345 = vadd.f32 %v265, %v310
    %v346 = vadd.f32 %v266, %v314
    %v347 = vadd.f32 %v267, %v318
    %v348 = vadd.f32 %v268, %v322
    %v349 = vadd.f32 %v269, %v326
    %v350 = vadd.f32 %v270, %v330
    %v351 = vadd.f32 %v271, %v334
    %v352 = vld [vmem:[%s2] sm:$0xff]
    %v353 = vld [vmem:[%s2 + $0x8] sm:$0xff]
    %v354 = vld [vmem:[%s2 + $0x10] sm:$0xff]
    %v355 = vld [vmem:[%s2 + $0x18] sm:$0xff]
    %v356 = vld [vmem:[%s2 + $0x20] sm:$0xff]
    %v357 = vld [vmem:[%s2 + $0x28] sm:$0xff]
    %v358 = vld [vmem:[%s2 + $0x30] sm:$0xff]
    %v359 = vld [vmem:[%s2 + $0x38] sm:$0xff]
    %v360 = vld [vmem:[%s2 + $0x40] sm:$0xff]
    %v361 = vld [vmem:[%s2 + $0x48] sm:$0xff]
    %v362 = vld [vmem:[%s2 + $0x50] sm:$0xff]
    %v363 = vld [vmem:[%s2 + $0x58] sm:$0xff]
    %v364 = vld [vmem:[%s2 + $0x60] sm:$0xff]
    %v365 = vld [vmem:[%s2 + $0x68] sm:$0xff]
    %v366 = vld [vmem:[%s2 + $0x70] sm:$0xff]
    %v367 = vld [vmem:[%s2 + $0x78] sm:$0xff]
    %v368 = vld [vmem:[%s2 + $0x80] sm:$0xff]
    %v369 = vld [vmem:[%s2 + $0x88] sm:$0xff]
    %v370 = vld [vmem:[%s2 + $0x90] sm:$0xff]
    %v371 = vld [vmem:[%s2 + $0x98] sm:$0xff]
    %v372 = vld [vmem:[%s2 + $0xa0] sm:$0xff]
    %v373 = vld [vmem:[%s2 + $0xa8] sm:$0xff]
    %v374 = vld [vmem:[%s2 + $0xb0] sm:$0xff]
    %v375 = vld [vmem:[%s2 + $0xb8] sm:$0xff]
    %v376 = vld [vmem:[%s2 + $0xc0] sm:$0xff]
    %v377 = vld [vmem:[%s2 + $0xc8] sm:$0xff]
    %v378 = vld [vmem:[%s2 + $0xd0] sm:$0xff]
    %v379 = vld [vmem:[%s2 + $0xd8] sm:$0xff]
    %v380 = vld [vmem:[%s2 + $0xe0] sm:$0xff]
    %v381 = vld [vmem:[%s2 + $0xe8] sm:$0xff]
    %v382 = vld [vmem:[%s2 + $0xf0] sm:$0xff]
    %v383 = vld [vmem:[%s2 + $0xf8] sm:$0xff]
    %v384 = vld [vmem:[%s2 + $0x100] sm:$0xff]
    %v385 = vld [vmem:[%s2 + $0x108] sm:$0xff]
    %v386 = vld [vmem:[%s2 + $0x110] sm:$0xff]
    %v387 = vld [vmem:[%s2 + $0x118] sm:$0xff]
    %v388 = vld [vmem:[%s3] sm:$0xff]
    %v389 = vld [vmem:[%s3 + $0x8] sm:$0xff]
    %v390 = vld [vmem:[%s3 + $0x10] sm:$0xff]
    %v391 = vld [vmem:[%s3 + $0x18] sm:$0xff]
    %v392 = vld [vmem:[%s3 + $0x20] sm:$0xff]
    %v393 = vld [vmem:[%s3 + $0x28] sm:$0xff]
    %v394 = vld [vmem:[%s3 + $0x30] sm:$0xff]
    %v395 = vld [vmem:[%s3 + $0x38] sm:$0xff]
    %v396 = vld [vmem:[%s3 + $0x40] sm:$0xff]
    %v397 = vld [vmem:[%s3 + $0x48] sm:$0xff]
    %v398 = vld [vmem:[%s3 + $0x50] sm:$0xff]
    %v399 = vld [vmem:[%s3 + $0x58] sm:$0xff]
    %v400 = vld [vmem:[%s3 + $0x60] sm:$0xff]
    %v401 = vld [vmem:[%s3 + $0x68] sm:$0xff]
    %v402 = vld [vmem:[%s3 + $0x70] sm:$0xff]
    %v403 = vld [vmem:[%s3 + $0x78] sm:$0xff]
    %v404 = vld [vmem:[%s3 + $0x80] sm:$0xff]
    %v405 = vld [vmem:[%s3 + $0x88] sm:$0xff]
    %v406 = vld [vmem:[%s3 + $0x90] sm:$0xff]
    %v407 = vld [vmem:[%s3 + $0x98] sm:$0xff]
    %v408 = vld [vmem:[%s3 + $0xa0] sm:$0xff]
    %v409 = vld [vmem:[%s3 + $0xa8] sm:$0xff]
    %v410 = vld [vmem:[%s3 + $0xb0] sm:$0xff]
    %v411 = vld [vmem:[%s3 + $0xb8] sm:$0xff]
    %v412 = vld [vmem:[%s3 + $0xc0] sm:$0xff]
    %v413 = vld [vmem:[%s3 + $0xc8] sm:$0xff]
    %v414 = vld [vmem:[%s3 + $0xd0] sm:$0xff]
    %v415 = vld [vmem:[%s3 + $0xd8] sm:$0xff]
    %v416 = vld [vmem:[%s3 + $0xe0] sm:$0xff]
    %v417 = vld [vmem:[%s3 + $0xe8] sm:$0xff]
    %v418 = vld [vmem:[%s3 + $0xf0] sm:$0xff]
    %v419 = vld [vmem:[%s3 + $0xf8] sm:$0xff]
    %v420 = vld [vmem:[%s3 + $0x100] sm:$0xff]
    %v421 = vld [vmem:[%s3 + $0x108] sm:$0xff]
    %v422 = vld [vmem:[%s3 + $0x110] sm:$0xff]
    %v423 = vld [vmem:[%s3 + $0x118] sm:$0xff]
    %425 = vset.pattern.permute.xlu0 0
    %426 = vperm.xlu0 %425, %v388
    %v427 = vpop.permute.xlu0 %426
    %430 = vset.pattern.permute.xlu0 0
    %431 = vperm.xlu0 %430, %v389
    %v432 = vpop.permute.xlu0 %431
    %435 = vset.pattern.permute.xlu0 0
    %436 = vperm.xlu0 %435, %v390
    %v437 = vpop.permute.xlu0 %436
    %440 = vset.pattern.permute.xlu0 0
    %441 = vperm.xlu0 %440, %v391
    %v442 = vpop.permute.xlu0 %441
    %445 = vset.pattern.permute.xlu0 0
    %446 = vperm.xlu0 %445, %v392
    %v447 = vpop.permute.xlu0 %446
    %450 = vset.pattern.permute.xlu0 0
    %451 = vperm.xlu0 %450, %v393
    %v452 = vpop.permute.xlu0 %451
    %455 = vset.pattern.permute.xlu0 0
    %456 = vperm.xlu0 %455, %v394
    %v457 = vpop.permute.xlu0 %456
    %460 = vset.pattern.permute.xlu0 0
    %461 = vperm.xlu0 %460, %v395
    %v462 = vpop.permute.xlu0 %461
    %465 = vset.pattern.permute.xlu0 0
    %466 = vperm.xlu0 %465, %v396
    %v467 = vpop.permute.xlu0 %466
    %470 = vset.pattern.permute.xlu0 0
    %471 = vperm.xlu0 %470, %v397
    %v472 = vpop.permute.xlu0 %471
    %475 = vset.pattern.permute.xlu0 0
    %476 = vperm.xlu0 %475, %v398
    %v477 = vpop.permute.xlu0 %476
    %480 = vset.pattern.permute.xlu0 0
    %481 = vperm.xlu0 %480, %v399
    %v482 = vpop.permute.xlu0 %481
    %485 = vset.pattern.permute.xlu0 0
    %486 = vperm.xlu0 %485, %v400
    %v487 = vpop.permute.xlu0 %486
    %490 = vset.pattern.permute.xlu0 0
    %491 = vperm.xlu0 %490, %v401
    %v492 = vpop.permute.xlu0 %491
    %495 = vset.pattern.permute.xlu0 0
    %496 = vperm.xlu0 %495, %v402
    %v497 = vpop.permute.xlu0 %496
    %500 = vset.pattern.permute.xlu0 0
    %501 = vperm.xlu0 %500, %v403
    %v502 = vpop.permute.xlu0 %501
    %505 = vset.pattern.permute.xlu0 0
    %506 = vperm.xlu0 %505, %v404
    %v507 = vpop.permute.xlu0 %506
    %510 = vset.pattern.permute.xlu0 0
    %511 = vperm.xlu0 %510, %v405
    %v512 = vpop.permute.xlu0 %511
    %515 = vset.pattern.permute.xlu0 0
    %516 = vperm.xlu0 %515, %v406
    %v517 = vpop.permute.xlu0 %516
    %520 = vset.pattern.permute.xlu0 0
    %521 = vperm.xlu0 %520, %v407
    %v522 = vpop.permute.xlu0 %521
    %525 = vset.pattern.permute.xlu0 0
    %526 = vperm.xlu0 %525, %v408
    %v527 = vpop.permute.xlu0 %526
    %530 = vset.pattern.permute.xlu0 0
    %531 = vperm.xlu0 %530, %v409
    %v532 = vpop.permute.xlu0 %531
    %535 = vset.pattern.permute.xlu0 0
    %536 = vperm.xlu0 %535, %v410
    %v537 = vpop.permute.xlu0 %536
    %540 = vset.pattern.permute.xlu0 0
    %541 = vperm.xlu0 %540, %v411
    %v542 = vpop.permute.xlu0 %541
    %545 = vset.pattern.permute.xlu0 0
    %546 = vperm.xlu0 %545, %v412
    %v547 = vpop.permute.xlu0 %546
    %550 = vset.pattern.permute.xlu0 0
    %551 = vperm.xlu0 %550, %v413
    %v552 = vpop.permute.xlu0 %551
    %555 = vset.pattern.permute.xlu0 0
    %556 = vperm.xlu0 %555, %v414
    %v557 = vpop.permute.xlu0 %556
    %560 = vset.pattern.permute.xlu0 0
    %561 = vperm.xlu0 %560, %v415
    %v562 = vpop.permute.xlu0 %561
    %565 = vset.pattern.permute.xlu0 0
    %566 = vperm.xlu0 %565, %v416
    %v567 = vpop.permute.xlu0 %566
    %570 = vset.pattern.permute.xlu0 0
    %571 = vperm.xlu0 %570, %v417
    %v572 = vpop.permute.xlu0 %571
    %575 = vset.pattern.permute.xlu0 0
    %576 = vperm.xlu0 %575, %v418
    %v577 = vpop.permute.xlu0 %576
    %580 = vset.pattern.permute.xlu0 0
    %581 = vperm.xlu0 %580, %v419
    %v582 = vpop.permute.xlu0 %581
    %585 = vset.pattern.permute.xlu0 0
    %586 = vperm.xlu0 %585, %v420
    %v587 = vpop.permute.xlu0 %586
    %590 = vset.pattern.permute.xlu0 0
    %591 = vperm.xlu0 %590, %v421
    %v592 = vpop.permute.xlu0 %591
    %595 = vset.pattern.permute.xlu0 0
    %596 = vperm.xlu0 %595, %v422
    %v597 = vpop.permute.xlu0 %596
    %600 = vset.pattern.permute.xlu0 0
    %601 = vperm.xlu0 %600, %v423
    %v602 = vpop.permute.xlu0 %601
    %604 = vmatprep.subr.mxu0 0.0
    %v605 = vand.u32 %v351, 4294901760
    %606 = vmatpush1.msra.mxu0 %v605
    %607 = vmatprep.subr.mxu0 0.0
    %v608 = vand.u32 %v350, 4294901760
    %609 = vmatpush1.msra.mxu0 %v608
    %610 = vmatprep.subr.mxu0 0.0
    %v611 = vand.u32 %v349, 4294901760
    %612 = vmatpush1.msra.mxu0 %v611
    %613 = vmatprep.subr.mxu0 0.0
    %v614 = vand.u32 %v348, 4294901760
    %615 = vmatpush1.msra.mxu0 %v614
    %616 = vmatprep.subr.mxu0 0.0
    %v617 = vand.u32 %v347, 4294901760
    %618 = vmatpush1.msra.mxu0 %v617
    %619 = vmatprep.subr.mxu0 0.0
    %v620 = vand.u32 %v346, 4294901760
    %621 = vmatpush1.msra.mxu0 %v620
    %622 = vmatprep.subr.mxu0 0.0
    %v623 = vand.u32 %v345, 4294901760
    %624 = vmatpush1.msra.mxu0 %v623
    %625 = vmatprep.subr.mxu0 0.0
    %v626 = vand.u32 %v344, 4294901760
    %627 = vmatpush1.msra.mxu0 %v626
    %628 = vmatprep.subr.mxu0 0.0
    %v629 = vand.u32 %v343, 4294901760
    %630 = vmatpush1.msra.mxu0 %v629
    %631 = vmatprep.subr.mxu0 0.0
    %v632 = vand.u32 %v342, 4294901760
    %633 = vmatpush1.msra.mxu0 %v632
    %634 = vmatprep.subr.mxu0 0.0
    %v635 = vand.u32 %v341, 4294901760
    %636 = vmatpush1.msra.mxu0 %v635
    %637 = vmatprep.subr.mxu0 0.0
    %v638 = vand.u32 %v340, 4294901760
    %639 = vmatpush1.msra.mxu0 %v638
    %640 = vmatprep.subr.mxu0 0.0
    %v641 = vand.u32 %v339, 4294901760
    %642 = vmatpush1.msra.mxu0 %v641
    %643 = vmatprep.subr.mxu0 0.0
    %v644 = vand.u32 %v338, 4294901760
    %645 = vmatpush1.msra.mxu0 %v644
    %646 = vmatprep.subr.mxu0 0.0
    %v647 = vand.u32 %v337, 4294901760
    %648 = vmatpush1.msra.mxu0 %v647
    %649 = vmatprep.subr.mxu0 0.0
    %v650 = vand.u32 %v336, 4294901760
    %651 = vmatpush1.msra.mxu0 %v650
    %652 = vmatprep.subr.mxu0 0.0
    %653 = vmatpush2.msra.mxu0 0.0
    %654 = vmatprep.subr.mxu0 0.0
    %655 = vmatpush2.msra.mxu0 0.0
    %656 = vmatprep.subr.mxu0 0.0
    %657 = vmatpush2.msra.mxu0 0.0
    %658 = vmatprep.subr.mxu0 0.0
    %659 = vmatpush2.msra.mxu0 0.0
    %660 = vmatprep.subr.mxu0 0.0
    %661 = vmatpush2.msra.mxu0 0.0
    %662 = vmatprep.subr.mxu0 0.0
    %663 = vmatpush2.msra.mxu0 0.0
    %664 = vmatprep.subr.mxu0 0.0
    %665 = vmatpush2.msra.mxu0 0.0
    %666 = vmatprep.subr.mxu0 0.0
    %667 = vmatpush2.msra.mxu0 0.0
    %668 = vmatprep.subr.mxu0 0.0
    %669 = vmatpush2.msra.mxu0 0.0
    %670 = vmatprep.subr.mxu0 0.0
    %671 = vmatpush2.msra.mxu0 0.0
    %672 = vmatprep.subr.mxu0 0.0
    %673 = vmatpush2.msra.mxu0 0.0
    %674 = vmatprep.subr.mxu0 0.0
    %675 = vmatpush2.msra.mxu0 0.0
    %676 = vmatprep.subr.mxu0 0.0
    %677 = vmatpush2.msra.mxu0 0.0
    %678 = vmatprep.subr.mxu0 0.0
    %679 = vmatpush2.msra.mxu0 0.0
    %680 = vmatprep.subr.mxu0 0.0
    %681 = vmatpush2.msra.mxu0 0.0
    %682 = vmatprep.subr.mxu0 0.0
    %683 = vmatpush2.msra.mxu0 0.0
    %684 = vmatprep.mubr.f32.mxu0 0.0
    %v685 = vand.u32 %v352, 4294901760
    %v686 = vsub.f32 %v352, %v685
    %v687 = vand.u32 %v686, 4294901760
    %v688 = vsub.f32 %v686, %v687
    %v689 = vand.u32 %v688, 4294901760
    %690 = vmatmul.mubr.f32.gmra.mxu0 %v689
    %v691 = vpop.f32.mrf.mxu0
    %v692 = vadd.f32 %v427, %v691
    %v693 = vpop.f32.mrf.mxu0
    %694 = vmatprep.mubr.f32.mxu0 0.0
    %v695 = vand.u32 %v353, 4294901760
    %v696 = vsub.f32 %v353, %v695
    %v697 = vand.u32 %v696, 4294901760
    %v698 = vsub.f32 %v696, %v697
    %v699 = vand.u32 %v698, 4294901760
    %700 = vmatmul.mubr.f32.gmra.mxu0 %v699
    %v701 = vpop.f32.mrf.mxu0
    %v702 = vadd.f32 %v432, %v701
    %v703 = vpop.f32.mrf.mxu0
    %704 = vmatprep.mubr.f32.mxu0 0.0
    %v705 = vand.u32 %v354, 4294901760
    %v706 = vsub.f32 %v354, %v705
    %v707 = vand.u32 %v706, 4294901760
    %v708 = vsub.f32 %v706, %v707
    %v709 = vand.u32 %v708, 4294901760
    %710 = vmatmul.mubr.f32.gmra.mxu0 %v709
    %v711 = vpop.f32.mrf.mxu0
    %v712 = vadd.f32 %v437, %v711
    %v713 = vpop.f32.mrf.mxu0
    %714 = vmatprep.mubr.f32.mxu0 0.0
    %v715 = vand.u32 %v355, 4294901760
    %v716 = vsub.f32 %v355, %v715
    %v717 = vand.u32 %v716, 4294901760
    %v718 = vsub.f32 %v716, %v717
    %v719 = vand.u32 %v718, 4294901760
    %720 = vmatmul.mubr.f32.gmra.mxu0 %v719
    %v721 = vpop.f32.mrf.mxu0
    %v722 = vadd.f32 %v442, %v721
    %v723 = vpop.f32.mrf.mxu0
    %724 = vmatprep.mubr.f32.mxu0 0.0
    %v725 = vand.u32 %v356, 4294901760
    %v726 = vsub.f32 %v356, %v725
    %v727 = vand.u32 %v726, 4294901760
    %v728 = vsub.f32 %v726, %v727
    %v729 = vand.u32 %v728, 4294901760
    %730 = vmatmul.mubr.f32.gmra.mxu0 %v729
    %v731 = vpop.f32.mrf.mxu0
    %v732 = vadd.f32 %v447, %v731
    %v733 = vpop.f32.mrf.mxu0
    %734 = vmatprep.mubr.f32.mxu0 0.0
    %v735 = vand.u32 %v357, 4294901760
    %v736 = vsub.f32 %v357, %v735
    %v737 = vand.u32 %v736, 4294901760
    %v738 = vsub.f32 %v736, %v737
    %v739 = vand.u32 %v738, 4294901760
    %740 = vmatmul.mubr.f32.gmra.mxu0 %v739
    %v741 = vpop.f32.mrf.mxu0
    %v742 = vadd.f32 %v452, %v741
    %v743 = vpop.f32.mrf.mxu0
    %744 = vmatprep.mubr.f32.mxu0 0.0
    %v745 = vand.u32 %v358, 4294901760
    %v746 = vsub.f32 %v358, %v745
    %v747 = vand.u32 %v746, 4294901760
    %v748 = vsub.f32 %v746, %v747
    %v749 = vand.u32 %v748, 4294901760
    %750 = vmatmul.mubr.f32.gmra.mxu0 %v749
    %v751 = vpop.f32.mrf.mxu0
    %v752 = vadd.f32 %v457, %v751
    %v753 = vpop.f32.mrf.mxu0
    %754 = vmatprep.mubr.f32.mxu0 0.0
    %v755 = vand.u32 %v359, 4294901760
    %v756 = vsub.f32 %v359, %v755
    %v757 = vand.u32 %v756, 4294901760
    %v758 = vsub.f32 %v756, %v757
    %v759 = vand.u32 %v758, 4294901760
    %760 = vmatmul.mubr.f32.gmra.mxu0 %v759
    %v761 = vpop.f32.mrf.mxu0
    %v762 = vadd.f32 %v462, %v761
    %v763 = vpop.f32.mrf.mxu0
    %764 = vmatprep.mubr.f32.mxu0 0.0
    %v765 = vand.u32 %v360, 4294901760
    %v766 = vsub.f32 %v360, %v765
    %v767 = vand.u32 %v766, 4294901760
    %v768 = vsub.f32 %v766, %v767
    %v769 = vand.u32 %v768, 4294901760
    %770 = vmatmul.mubr.f32.gmra.mxu0 %v769
    %v771 = vpop.f32.mrf.mxu0
    %v772 = vadd.f32 %v467, %v771
    %v773 = vpop.f32.mrf.mxu0
    %774 = vmatprep.mubr.f32.mxu0 0.0
    %v775 = vand.u32 %v361, 4294901760
    %v776 = vsub.f32 %v361, %v775
    %v777 = vand.u32 %v776, 4294901760
    %v778 = vsub.f32 %v776, %v777
    %v779 = vand.u32 %v778, 4294901760
    %780 = vmatmul.mubr.f32.gmra.mxu0 %v779
    %v781 = vpop.f32.mrf.mxu0
    %v782 = vadd.f32 %v472, %v781
    %v783 = vpop.f32.mrf.mxu0
    %784 = vmatprep.mubr.f32.mxu0 0.0
    %v785 = vand.u32 %v362, 4294901760
    %v786 = vsub.f32 %v362, %v785
    %v787 = vand.u32 %v786, 4294901760
    %v788 = vsub.f32 %v786, %v787
    %v789 = vand.u32 %v788, 4294901760
    %790 = vmatmul.mubr.f32.gmra.mxu0 %v789
    %v791 = vpop.f32.mrf.mxu0
    %v792 = vadd.f32 %v477, %v791
    %v793 = vpop.f32.mrf.mxu0
    %794 = vmatprep.mubr.f32.mxu0 0.0
    %v795 = vand.u32 %v363, 4294901760
    %v796 = vsub.f32 %v363, %v795
    %v797 = vand.u32 %v796, 4294901760
    %v798 = vsub.f32 %v796, %v797
    %v799 = vand.u32 %v798, 4294901760
    %800 = vmatmul.mubr.f32.gmra.mxu0 %v799
    %v801 = vpop.f32.mrf.mxu0
    %v802 = vadd.f32 %v482, %v801
    %v803 = vpop.f32.mrf.mxu0
    %804 = vmatprep.mubr.f32.mxu0 0.0
    %v805 = vand.u32 %v364, 4294901760
    %v806 = vsub.f32 %v364, %v805
    %v807 = vand.u32 %v806, 4294901760
    %v808 = vsub.f32 %v806, %v807
    %v809 = vand.u32 %v808, 4294901760
    %810 = vmatmul.mubr.f32.gmra.mxu0 %v809
    %v811 = vpop.f32.mrf.mxu0
    %v812 = vadd.f32 %v487, %v811
    %v813 = vpop.f32.mrf.mxu0
    %814 = vmatprep.mubr.f32.mxu0 0.0
    %v815 = vand.u32 %v365, 4294901760
    %v816 = vsub.f32 %v365, %v815
    %v817 = vand.u32 %v816, 4294901760
    %v818 = vsub.f32 %v816, %v817
    %v819 = vand.u32 %v818, 4294901760
    %820 = vmatmul.mubr.f32.gmra.mxu0 %v819
    %v821 = vpop.f32.mrf.mxu0
    %v822 = vadd.f32 %v492, %v821
    %v823 = vpop.f32.mrf.mxu0
    %824 = vmatprep.mubr.f32.mxu0 0.0
    %v825 = vand.u32 %v366, 4294901760
    %v826 = vsub.f32 %v366, %v825
    %v827 = vand.u32 %v826, 4294901760
    %v828 = vsub.f32 %v826, %v827
    %v829 = vand.u32 %v828, 4294901760
    %830 = vmatmul.mubr.f32.gmra.mxu0 %v829
    %v831 = vpop.f32.mrf.mxu0
    %v832 = vadd.f32 %v497, %v831
    %v833 = vpop.f32.mrf.mxu0
    %834 = vmatprep.mubr.f32.mxu0 0.0
    %v835 = vand.u32 %v367, 4294901760
    %v836 = vsub.f32 %v367, %v835
    %v837 = vand.u32 %v836, 4294901760
    %v838 = vsub.f32 %v836, %v837
    %v839 = vand.u32 %v838, 4294901760
    %840 = vmatmul.mubr.f32.gmra.mxu0 %v839
    %v841 = vpop.f32.mrf.mxu0
    %v842 = vadd.f32 %v502, %v841
    %v843 = vpop.f32.mrf.mxu0
    %844 = vmatprep.mubr.f32.mxu0 0.0
    %v845 = vand.u32 %v368, 4294901760
    %v846 = vsub.f32 %v368, %v845
    %v847 = vand.u32 %v846, 4294901760
    %v848 = vsub.f32 %v846, %v847
    %v849 = vand.u32 %v848, 4294901760
    %850 = vmatmul.mubr.f32.gmra.mxu0 %v849
    %v851 = vpop.f32.mrf.mxu0
    %v852 = vadd.f32 %v507, %v851
    %v853 = vpop.f32.mrf.mxu0
    %854 = vmatprep.mubr.f32.mxu0 0.0
    %v855 = vand.u32 %v369, 4294901760
    %v856 = vsub.f32 %v369, %v855
    %v857 = vand.u32 %v856, 4294901760
    %v858 = vsub.f32 %v856, %v857
    %v859 = vand.u32 %v858, 4294901760
    %860 = vmatmul.mubr.f32.gmra.mxu0 %v859
    %v861 = vpop.f32.mrf.mxu0
    %v862 = vadd.f32 %v512, %v861
    %v863 = vpop.f32.mrf.mxu0
    %864 = vmatprep.mubr.f32.mxu0 0.0
    %v865 = vand.u32 %v370, 4294901760
    %v866 = vsub.f32 %v370, %v865
    %v867 = vand.u32 %v866, 4294901760
    %v868 = vsub.f32 %v866, %v867
    %v869 = vand.u32 %v868, 4294901760
    %870 = vmatmul.mubr.f32.gmra.mxu0 %v869
    %v871 = vpop.f32.mrf.mxu0
    %v872 = vadd.f32 %v517, %v871
    %v873 = vpop.f32.mrf.mxu0
    %874 = vmatprep.mubr.f32.mxu0 0.0
    %v875 = vand.u32 %v371, 4294901760
    %v876 = vsub.f32 %v371, %v875
    %v877 = vand.u32 %v876, 4294901760
    %v878 = vsub.f32 %v876, %v877
    %v879 = vand.u32 %v878, 4294901760
    %880 = vmatmul.mubr.f32.gmra.mxu0 %v879
    %v881 = vpop.f32.mrf.mxu0
    %v882 = vadd.f32 %v522, %v881
    %v883 = vpop.f32.mrf.mxu0
    %884 = vmatprep.mubr.f32.mxu0 0.0
    %v885 = vand.u32 %v372, 4294901760
    %v886 = vsub.f32 %v372, %v885
    %v887 = vand.u32 %v886, 4294901760
    %v888 = vsub.f32 %v886, %v887
    %v889 = vand.u32 %v888, 4294901760
    %890 = vmatmul.mubr.f32.gmra.mxu0 %v889
    %v891 = vpop.f32.mrf.mxu0
    %v892 = vadd.f32 %v527, %v891
    %v893 = vpop.f32.mrf.mxu0
    %894 = vmatprep.mubr.f32.mxu0 0.0
    %v895 = vand.u32 %v373, 4294901760
    %v896 = vsub.f32 %v373, %v895
    %v897 = vand.u32 %v896, 4294901760
    %v898 = vsub.f32 %v896, %v897
    %v899 = vand.u32 %v898, 4294901760
    %900 = vmatmul.mubr.f32.gmra.mxu0 %v899
    %v901 = vpop.f32.mrf.mxu0
    %v902 = vadd.f32 %v532, %v901
    %v903 = vpop.f32.mrf.mxu0
    %904 = vmatprep.mubr.f32.mxu0 0.0
    %v905 = vand.u32 %v374, 4294901760
    %v906 = vsub.f32 %v374, %v905
    %v907 = vand.u32 %v906, 4294901760
    %v908 = vsub.f32 %v906, %v907
    %v909 = vand.u32 %v908, 4294901760
    %910 = vmatmul.mubr.f32.gmra.mxu0 %v909
    %v911 = vpop.f32.mrf.mxu0
    %v912 = vadd.f32 %v537, %v911
    %v913 = vpop.f32.mrf.mxu0
    %914 = vmatprep.mubr.f32.mxu0 0.0
    %v915 = vand.u32 %v375, 4294901760
    %v916 = vsub.f32 %v375, %v915
    %v917 = vand.u32 %v916, 4294901760
    %v918 = vsub.f32 %v916, %v917
    %v919 = vand.u32 %v918, 4294901760
    %920 = vmatmul.mubr.f32.gmra.mxu0 %v919
    %v921 = vpop.f32.mrf.mxu0
    %v922 = vadd.f32 %v542, %v921
    %v923 = vpop.f32.mrf.mxu0
    %924 = vmatprep.mubr.f32.mxu0 0.0
    %v925 = vand.u32 %v376, 4294901760
    %v926 = vsub.f32 %v376, %v925
    %v927 = vand.u32 %v926, 4294901760
    %v928 = vsub.f32 %v926, %v927
    %v929 = vand.u32 %v928, 4294901760
    %930 = vmatmul.mubr.f32.gmra.mxu0 %v929
    %v931 = vpop.f32.mrf.mxu0
    %v932 = vadd.f32 %v547, %v931
    %v933 = vpop.f32.mrf.mxu0
    %934 = vmatprep.mubr.f32.mxu0 0.0
    %v935 = vand.u32 %v377, 4294901760
    %v936 = vsub.f32 %v377, %v935
    %v937 = vand.u32 %v936, 4294901760
    %v938 = vsub.f32 %v936, %v937
    %v939 = vand.u32 %v938, 4294901760
    %940 = vmatmul.mubr.f32.gmra.mxu0 %v939
    %v941 = vpop.f32.mrf.mxu0
    %v942 = vadd.f32 %v552, %v941
    %v943 = vpop.f32.mrf.mxu0
    %944 = vmatprep.mubr.f32.mxu0 0.0
    %v945 = vand.u32 %v378, 4294901760
    %v946 = vsub.f32 %v378, %v945
    %v947 = vand.u32 %v946, 4294901760
    %v948 = vsub.f32 %v946, %v947
    %v949 = vand.u32 %v948, 4294901760
    %950 = vmatmul.mubr.f32.gmra.mxu0 %v949
    %v951 = vpop.f32.mrf.mxu0
    %v952 = vadd.f32 %v557, %v951
    %v953 = vpop.f32.mrf.mxu0
    %954 = vmatprep.mubr.f32.mxu0 0.0
    %v955 = vand.u32 %v379, 4294901760
    %v956 = vsub.f32 %v379, %v955
    %v957 = vand.u32 %v956, 4294901760
    %v958 = vsub.f32 %v956, %v957
    %v959 = vand.u32 %v958, 4294901760
    %960 = vmatmul.mubr.f32.gmra.mxu0 %v959
    %v961 = vpop.f32.mrf.mxu0
    %v962 = vadd.f32 %v562, %v961
    %v963 = vpop.f32.mrf.mxu0
    %964 = vmatprep.mubr.f32.mxu0 0.0
    %v965 = vand.u32 %v380, 4294901760
    %v966 = vsub.f32 %v380, %v965
    %v967 = vand.u32 %v966, 4294901760
    %v968 = vsub.f32 %v966, %v967
    %v969 = vand.u32 %v968, 4294901760
    %970 = vmatmul.mubr.f32.gmra.mxu0 %v969
    %v971 = vpop.f32.mrf.mxu0
    %v972 = vadd.f32 %v567, %v971
    %v973 = vpop.f32.mrf.mxu0
    %974 = vmatprep.mubr.f32.mxu0 0.0
    %v975 = vand.u32 %v381, 4294901760
    %v976 = vsub.f32 %v381, %v975
    %v977 = vand.u32 %v976, 4294901760
    %v978 = vsub.f32 %v976, %v977
    %v979 = vand.u32 %v978, 4294901760
    %980 = vmatmul.mubr.f32.gmra.mxu0 %v979
    %v981 = vpop.f32.mrf.mxu0
    %v982 = vadd.f32 %v572, %v981
    %v983 = vpop.f32.mrf.mxu0
    %984 = vmatprep.mubr.f32.mxu0 0.0
    %v985 = vand.u32 %v382, 4294901760
    %v986 = vsub.f32 %v382, %v985
    %v987 = vand.u32 %v986, 4294901760
    %v988 = vsub.f32 %v986, %v987
    %v989 = vand.u32 %v988, 4294901760
    %990 = vmatmul.mubr.f32.gmra.mxu0 %v989
    %v991 = vpop.f32.mrf.mxu0
    %v992 = vadd.f32 %v577, %v991
    %v993 = vpop.f32.mrf.mxu0
    %994 = vmatprep.mubr.f32.mxu0 0.0
    %v995 = vand.u32 %v383, 4294901760
    %v996 = vsub.f32 %v383, %v995
    %v997 = vand.u32 %v996, 4294901760
    %v998 = vsub.f32 %v996, %v997
    %v999 = vand.u32 %v998, 4294901760
    %1000 = vmatmul.mubr.f32.gmra.mxu0 %v999
    %v1001 = vpop.f32.mrf.mxu0
    %v1002 = vadd.f32 %v582, %v1001
    %v1003 = vpop.f32.mrf.mxu0
    %1004 = vmatprep.mubr.f32.mxu0 0.0
    %v1005 = vand.u32 %v384, 4294901760
    %v1006 = vsub.f32 %v384, %v1005
    %v1007 = vand.u32 %v1006, 4294901760
    %v1008 = vsub.f32 %v1006, %v1007
    %v1009 = vand.u32 %v1008, 4294901760
    %1010 = vmatmul.mubr.f32.gmra.mxu0 %v1009
    %v1011 = vpop.f32.mrf.mxu0
    %v1012 = vadd.f32 %v587, %v1011
    %v1013 = vpop.f32.mrf.mxu0
    %1014 = vmatprep.mubr.f32.mxu0 0.0
    %v1015 = vand.u32 %v385, 4294901760
    %v1016 = vsub.f32 %v385, %v1015
    %v1017 = vand.u32 %v1016, 4294901760
    %v1018 = vsub.f32 %v1016, %v1017
    %v1019 = vand.u32 %v1018, 4294901760
    %1020 = vmatmul.mubr.f32.gmra.mxu0 %v1019
    %v1021 = vpop.f32.mrf.mxu0
    %v1022 = vadd.f32 %v592, %v1021
    %v1023 = vpop.f32.mrf.mxu0
    %1024 = vmatprep.mubr.f32.mxu0 0.0
    %v1025 = vand.u32 %v386, 4294901760
    %v1026 = vsub.f32 %v386, %v1025
    %v1027 = vand.u32 %v1026, 4294901760
    %v1028 = vsub.f32 %v1026, %v1027
    %v1029 = vand.u32 %v1028, 4294901760
    %1030 = vmatmul.mubr.f32.gmra.mxu0 %v1029
    %v1031 = vpop.f32.mrf.mxu0
    %v1032 = vadd.f32 %v597, %v1031
    %v1033 = vpop.f32.mrf.mxu0
    %1034 = vmatprep.mubr.f32.mxu0 0.0
    %v1035 = vand.u32 %v387, 4294901760
    %v1036 = vsub.f32 %v387, %v1035
    %v1037 = vand.u32 %v1036, 4294901760
    %v1038 = vsub.f32 %v1036, %v1037
    %v1039 = vand.u32 %v1038, 4294901760
    %1040 = vmatmul.mubr.f32.gmra.mxu0 %v1039
    %v1041 = vpop.f32.mrf.mxu0
    %v1042 = vadd.f32 %v602, %v1041
    %v1043 = vpop.f32.mrf.mxu0
    %1044 = vdwg.mxu0
    %1045 = vmatprep.subr.mxu0 0.0
    %v1046 = vand.u32 %v351, 4294901760
    %v1047 = vsub.f32 %v351, %v1046
    %v1048 = vand.u32 %v1047, 4294901760
    %v1049 = vsub.f32 %v1047, %v1048
    %v1050 = vand.u32 %v1049, 4294901760
    %1051 = vmatpush1.msra.mxu0 %v1050
    %1052 = vmatprep.subr.mxu0 0.0
    %v1053 = vand.u32 %v350, 4294901760
    %v1054 = vsub.f32 %v350, %v1053
    %v1055 = vand.u32 %v1054, 4294901760
    %v1056 = vsub.f32 %v1054, %v1055
    %v1057 = vand.u32 %v1056, 4294901760
    %1058 = vmatpush1.msra.mxu0 %v1057
    %1059 = vmatprep.subr.mxu0 0.0
    %v1060 = vand.u32 %v349, 4294901760
    %v1061 = vsub.f32 %v349, %v1060
    %v1062 = vand.u32 %v1061, 4294901760
    %v1063 = vsub.f32 %v1061, %v1062
    %v1064 = vand.u32 %v1063, 4294901760
    %1065 = vmatpush1.msra.mxu0 %v1064
    %1066 = vmatprep.subr.mxu0 0.0
    %v1067 = vand.u32 %v348, 4294901760
    %v1068 = vsub.f32 %v348, %v1067
    %v1069 = vand.u32 %v1068, 4294901760
    %v1070 = vsub.f32 %v1068, %v1069
    %v1071 = vand.u32 %v1070, 4294901760
    %1072 = vmatpush1.msra.mxu0 %v1071
    %1073 = vmatprep.subr.mxu0 0.0
    %v1074 = vand.u32 %v347, 4294901760
    %v1075 = vsub.f32 %v347, %v1074
    %v1076 = vand.u32 %v1075, 4294901760
    %v1077 = vsub.f32 %v1075, %v1076
    %v1078 = vand.u32 %v1077, 4294901760
    %1079 = vmatpush1.msra.mxu0 %v1078
    %1080 = vmatprep.subr.mxu0 0.0
    %v1081 = vand.u32 %v346, 4294901760
    %v1082 = vsub.f32 %v346, %v1081
    %v1083 = vand.u32 %v1082, 4294901760
    %v1084 = vsub.f32 %v1082, %v1083
    %v1085 = vand.u32 %v1084, 4294901760
    %1086 = vmatpush1.msra.mxu0 %v1085
    %1087 = vmatprep.subr.mxu0 0.0
    %v1088 = vand.u32 %v345, 4294901760
    %v1089 = vsub.f32 %v345, %v1088
    %v1090 = vand.u32 %v1089, 4294901760
    %v1091 = vsub.f32 %v1089, %v1090
    %v1092 = vand.u32 %v1091, 4294901760
    %1093 = vmatpush1.msra.mxu0 %v1092
    %1094 = vmatprep.subr.mxu0 0.0
    %v1095 = vand.u32 %v344, 4294901760
    %v1096 = vsub.f32 %v344, %v1095
    %v1097 = vand.u32 %v1096, 4294901760
    %v1098 = vsub.f32 %v1096, %v1097
    %v1099 = vand.u32 %v1098, 4294901760
    %1100 = vmatpush1.msra.mxu0 %v1099
    %1101 = vmatprep.subr.mxu0 0.0
    %v1102 = vand.u32 %v343, 4294901760
    %v1103 = vsub.f32 %v343, %v1102
    %v1104 = vand.u32 %v1103, 4294901760
    %v1105 = vsub.f32 %v1103, %v1104
    %v1106 = vand.u32 %v1105, 4294901760
    %1107 = vmatpush1.msra.mxu0 %v1106
    %1108 = vmatprep.subr.mxu0 0.0
    %v1109 = vand.u32 %v342, 4294901760
    %v1110 = vsub.f32 %v342, %v1109
    %v1111 = vand.u32 %v1110, 4294901760
    %v1112 = vsub.f32 %v1110, %v1111
    %v1113 = vand.u32 %v1112, 4294901760
    %1114 = vmatpush1.msra.mxu0 %v1113
    %1115 = vmatprep.subr.mxu0 0.0
    %v1116 = vand.u32 %v341, 4294901760
    %v1117 = vsub.f32 %v341, %v1116
    %v1118 = vand.u32 %v1117, 4294901760
    %v1119 = vsub.f32 %v1117, %v1118
    %v1120 = vand.u32 %v1119, 4294901760
    %1121 = vmatpush1.msra.mxu0 %v1120
    %1122 = vmatprep.subr.mxu0 0.0
    %v1123 = vand.u32 %v340, 4294901760
    %v1124 = vsub.f32 %v340, %v1123
    %v1125 = vand.u32 %v1124, 4294901760
    %v1126 = vsub.f32 %v1124, %v1125
    %v1127 = vand.u32 %v1126, 4294901760
    %1128 = vmatpush1.msra.mxu0 %v1127
    %1129 = vmatprep.subr.mxu0 0.0
    %v1130 = vand.u32 %v339, 4294901760
    %v1131 = vsub.f32 %v339, %v1130
    %v1132 = vand.u32 %v1131, 4294901760
    %v1133 = vsub.f32 %v1131, %v1132
    %v1134 = vand.u32 %v1133, 4294901760
    %1135 = vmatpush1.msra.mxu0 %v1134
    %1136 = vmatprep.subr.mxu0 0.0
    %v1137 = vand.u32 %v338, 4294901760
    %v1138 = vsub.f32 %v338, %v1137
    %v1139 = vand.u32 %v1138, 4294901760
    %v1140 = vsub.f32 %v1138, %v1139
    %v1141 = vand.u32 %v1140, 4294901760
    %1142 = vmatpush1.msra.mxu0 %v1141
    %1143 = vmatprep.subr.mxu0 0.0
    %v1144 = vand.u32 %v337, 4294901760
    %v1145 = vsub.f32 %v337, %v1144
    %v1146 = vand.u32 %v1145, 4294901760
    %v1147 = vsub.f32 %v1145, %v1146
    %v1148 = vand.u32 %v1147, 4294901760
    %1149 = vmatpush1.msra.mxu0 %v1148
    %1150 = vmatprep.subr.mxu0 0.0
    %v1151 = vand.u32 %v336, 4294901760
    %v1152 = vsub.f32 %v336, %v1151
    %v1153 = vand.u32 %v1152, 4294901760
    %v1154 = vsub.f32 %v1152, %v1153
    %v1155 = vand.u32 %v1154, 4294901760
    %1156 = vmatpush1.msra.mxu0 %v1155
    %1157 = vmatprep.subr.mxu0 0.0
    %1158 = vmatpush2.msra.mxu0 0.0
    %1159 = vmatprep.subr.mxu0 0.0
    %1160 = vmatpush2.msra.mxu0 0.0
    %1161 = vmatprep.subr.mxu0 0.0
    %1162 = vmatpush2.msra.mxu0 0.0
    %1163 = vmatprep.subr.mxu0 0.0
    %1164 = vmatpush2.msra.mxu0 0.0
    %1165 = vmatprep.subr.mxu0 0.0
    %1166 = vmatpush2.msra.mxu0 0.0
    %1167 = vmatprep.subr.mxu0 0.0
    %1168 = vmatpush2.msra.mxu0 0.0
    %1169 = vmatprep.subr.mxu0 0.0
    %1170 = vmatpush2.msra.mxu0 0.0
    %1171 = vmatprep.subr.mxu0 0.0
    %1172 = vmatpush2.msra.mxu0 0.0
    %1173 = vmatprep.subr.mxu0 0.0
    %1174 = vmatpush2.msra.mxu0 0.0
    %1175 = vmatprep.subr.mxu0 0.0
    %1176 = vmatpush2.msra.mxu0 0.0
    %1177 = vmatprep.subr.mxu0 0.0
    %1178 = vmatpush2.msra.mxu0 0.0
    %1179 = vmatprep.subr.mxu0 0.0
    %1180 = vmatpush2.msra.mxu0 0.0
    %1181 = vmatprep.subr.mxu0 0.0
    %1182 = vmatpush2.msra.mxu0 0.0
    %1183 = vmatprep.subr.mxu0 0.0
    %1184 = vmatpush2.msra.mxu0 0.0
    %1185 = vmatprep.subr.mxu0 0.0
    %1186 = vmatpush2.msra.mxu0 0.0
    %1187 = vmatprep.subr.mxu0 0.0
    %1188 = vmatpush2.msra.mxu0 0.0
    %1189 = vmatprep.mubr.f32.mxu0 0.0
    %v1190 = vand.u32 %v352, 4294901760
    %1191 = vmatmul.mubr.f32.gmra.mxu0 %v1190
    %v1192 = vpop.f32.mrf.mxu0
    %v1193 = vadd.f32 %v692, %v1192
    %v1194 = vpop.f32.mrf.mxu0
    %1195 = vmatprep.mubr.f32.mxu0 0.0
    %v1196 = vand.u32 %v353, 4294901760
    %1197 = vmatmul.mubr.f32.gmra.mxu0 %v1196
    %v1198 = vpop.f32.mrf.mxu0
    %v1199 = vadd.f32 %v702, %v1198
    %v1200 = vpop.f32.mrf.mxu0
    %1201 = vmatprep.mubr.f32.mxu0 0.0
    %v1202 = vand.u32 %v354, 4294901760
    %1203 = vmatmul.mubr.f32.gmra.mxu0 %v1202
    %v1204 = vpop.f32.mrf.mxu0
    %v1205 = vadd.f32 %v712, %v1204
    %v1206 = vpop.f32.mrf.mxu0
    %1207 = vmatprep.mubr.f32.mxu0 0.0
    %v1208 = vand.u32 %v355, 4294901760
    %1209 = vmatmul.mubr.f32.gmra.mxu0 %v1208
    %v1210 = vpop.f32.mrf.mxu0
    %v1211 = vadd.f32 %v722, %v1210
    %v1212 = vpop.f32.mrf.mxu0
    %1213 = vmatprep.mubr.f32.mxu0 0.0
    %v1214 = vand.u32 %v356, 4294901760
    %1215 = vmatmul.mubr.f32.gmra.mxu0 %v1214
    %v1216 = vpop.f32.mrf.mxu0
    %v1217 = vadd.f32 %v732, %v1216
    %v1218 = vpop.f32.mrf.mxu0
    %1219 = vmatprep.mubr.f32.mxu0 0.0
    %v1220 = vand.u32 %v357, 4294901760
    %1221 = vmatmul.mubr.f32.gmra.mxu0 %v1220
    %v1222 = vpop.f32.mrf.mxu0
    %v1223 = vadd.f32 %v742, %v1222
    %v1224 = vpop.f32.mrf.mxu0
    %1225 = vmatprep.mubr.f32.mxu0 0.0
    %v1226 = vand.u32 %v358, 4294901760
    %1227 = vmatmul.mubr.f32.gmra.mxu0 %v1226
    %v1228 = vpop.f32.mrf.mxu0
    %v1229 = vadd.f32 %v752, %v1228
    %v1230 = vpop.f32.mrf.mxu0
    %1231 = vmatprep.mubr.f32.mxu0 0.0
    %v1232 = vand.u32 %v359, 4294901760
    %1233 = vmatmul.mubr.f32.gmra.mxu0 %v1232
    %v1234 = vpop.f32.mrf.mxu0
    %v1235 = vadd.f32 %v762, %v1234
    %v1236 = vpop.f32.mrf.mxu0
    %1237 = vmatprep.mubr.f32.mxu0 0.0
    %v1238 = vand.u32 %v360, 4294901760
    %1239 = vmatmul.mubr.f32.gmra.mxu0 %v1238
    %v1240 = vpop.f32.mrf.mxu0
    %v1241 = vadd.f32 %v772, %v1240
    %v1242 = vpop.f32.mrf.mxu0
    %1243 = vmatprep.mubr.f32.mxu0 0.0
    %v1244 = vand.u32 %v361, 4294901760
    %1245 = vmatmul.mubr.f32.gmra.mxu0 %v1244
    %v1246 = vpop.f32.mrf.mxu0
    %v1247 = vadd.f32 %v782, %v1246
    %v1248 = vpop.f32.mrf.mxu0
    %1249 = vmatprep.mubr.f32.mxu0 0.0
    %v1250 = vand.u32 %v362, 4294901760
    %1251 = vmatmul.mubr.f32.gmra.mxu0 %v1250
    %v1252 = vpop.f32.mrf.mxu0
    %v1253 = vadd.f32 %v792, %v1252
    %v1254 = vpop.f32.mrf.mxu0
    %1255 = vmatprep.mubr.f32.mxu0 0.0
    %v1256 = vand.u32 %v363, 4294901760
    %1257 = vmatmul.mubr.f32.gmra.mxu0 %v1256
    %v1258 = vpop.f32.mrf.mxu0
    %v1259 = vadd.f32 %v802, %v1258
    %v1260 = vpop.f32.mrf.mxu0
    %1261 = vmatprep.mubr.f32.mxu0 0.0
    %v1262 = vand.u32 %v364, 4294901760
    %1263 = vmatmul.mubr.f32.gmra.mxu0 %v1262
    %v1264 = vpop.f32.mrf.mxu0
    %v1265 = vadd.f32 %v812, %v1264
    %v1266 = vpop.f32.mrf.mxu0
    %1267 = vmatprep.mubr.f32.mxu0 0.0
    %v1268 = vand.u32 %v365, 4294901760
    %1269 = vmatmul.mubr.f32.gmra.mxu0 %v1268
    %v1270 = vpop.f32.mrf.mxu0
    %v1271 = vadd.f32 %v822, %v1270
    %v1272 = vpop.f32.mrf.mxu0
    %1273 = vmatprep.mubr.f32.mxu0 0.0
    %v1274 = vand.u32 %v366, 4294901760
    %1275 = vmatmul.mubr.f32.gmra.mxu0 %v1274
    %v1276 = vpop.f32.mrf.mxu0
    %v1277 = vadd.f32 %v832, %v1276
    %v1278 = vpop.f32.mrf.mxu0
    %1279 = vmatprep.mubr.f32.mxu0 0.0
    %v1280 = vand.u32 %v367, 4294901760
    %1281 = vmatmul.mubr.f32.gmra.mxu0 %v1280
    %v1282 = vpop.f32.mrf.mxu0
    %v1283 = vadd.f32 %v842, %v1282
    %v1284 = vpop.f32.mrf.mxu0
    %1285 = vmatprep.mubr.f32.mxu0 0.0
    %v1286 = vand.u32 %v368, 4294901760
    %1287 = vmatmul.mubr.f32.gmra.mxu0 %v1286
    %v1288 = vpop.f32.mrf.mxu0
    %v1289 = vadd.f32 %v852, %v1288
    %v1290 = vpop.f32.mrf.mxu0
    %1291 = vmatprep.mubr.f32.mxu0 0.0
    %v1292 = vand.u32 %v369, 4294901760
    %1293 = vmatmul.mubr.f32.gmra.mxu0 %v1292
    %v1294 = vpop.f32.mrf.mxu0
    %v1295 = vadd.f32 %v862, %v1294
    %v1296 = vpop.f32.mrf.mxu0
    %1297 = vmatprep.mubr.f32.mxu0 0.0
    %v1298 = vand.u32 %v370, 4294901760
    %1299 = vmatmul.mubr.f32.gmra.mxu0 %v1298
    %v1300 = vpop.f32.mrf.mxu0
    %v1301 = vadd.f32 %v872, %v1300
    %v1302 = vpop.f32.mrf.mxu0
    %1303 = vmatprep.mubr.f32.mxu0 0.0
    %v1304 = vand.u32 %v371, 4294901760
    %1305 = vmatmul.mubr.f32.gmra.mxu0 %v1304
    %v1306 = vpop.f32.mrf.mxu0
    %v1307 = vadd.f32 %v882, %v1306
    %v1308 = vpop.f32.mrf.mxu0
    %1309 = vmatprep.mubr.f32.mxu0 0.0
    %v1310 = vand.u32 %v372, 4294901760
    %1311 = vmatmul.mubr.f32.gmra.mxu0 %v1310
    %v1312 = vpop.f32.mrf.mxu0
    %v1313 = vadd.f32 %v892, %v1312
    %v1314 = vpop.f32.mrf.mxu0
    %1315 = vmatprep.mubr.f32.mxu0 0.0
    %v1316 = vand.u32 %v373, 4294901760
    %1317 = vmatmul.mubr.f32.gmra.mxu0 %v1316
    %v1318 = vpop.f32.mrf.mxu0
    %v1319 = vadd.f32 %v902, %v1318
    %v1320 = vpop.f32.mrf.mxu0
    %1321 = vmatprep.mubr.f32.mxu0 0.0
    %v1322 = vand.u32 %v374, 4294901760
    %1323 = vmatmul.mubr.f32.gmra.mxu0 %v1322
    %v1324 = vpop.f32.mrf.mxu0
    %v1325 = vadd.f32 %v912, %v1324
    %v1326 = vpop.f32.mrf.mxu0
    %1327 = vmatprep.mubr.f32.mxu0 0.0
    %v1328 = vand.u32 %v375, 4294901760
    %1329 = vmatmul.mubr.f32.gmra.mxu0 %v1328
    %v1330 = vpop.f32.mrf.mxu0
    %v1331 = vadd.f32 %v922, %v1330
    %v1332 = vpop.f32.mrf.mxu0
    %1333 = vmatprep.mubr.f32.mxu0 0.0
    %v1334 = vand.u32 %v376, 4294901760
    %1335 = vmatmul.mubr.f32.gmra.mxu0 %v1334
    %v1336 = vpop.f32.mrf.mxu0
    %v1337 = vadd.f32 %v932, %v1336
    %v1338 = vpop.f32.mrf.mxu0
    %1339 = vmatprep.mubr.f32.mxu0 0.0
    %v1340 = vand.u32 %v377, 4294901760
    %1341 = vmatmul.mubr.f32.gmra.mxu0 %v1340
    %v1342 = vpop.f32.mrf.mxu0
    %v1343 = vadd.f32 %v942, %v1342
    %v1344 = vpop.f32.mrf.mxu0
    %1345 = vmatprep.mubr.f32.mxu0 0.0
    %v1346 = vand.u32 %v378, 4294901760
    %1347 = vmatmul.mubr.f32.gmra.mxu0 %v1346
    %v1348 = vpop.f32.mrf.mxu0
    %v1349 = vadd.f32 %v952, %v1348
    %v1350 = vpop.f32.mrf.mxu0
    %1351 = vmatprep.mubr.f32.mxu0 0.0
    %v1352 = vand.u32 %v379, 4294901760
    %1353 = vmatmul.mubr.f32.gmra.mxu0 %v1352
    %v1354 = vpop.f32.mrf.mxu0
    %v1355 = vadd.f32 %v962, %v1354
    %v1356 = vpop.f32.mrf.mxu0
    %1357 = vmatprep.mubr.f32.mxu0 0.0
    %v1358 = vand.u32 %v380, 4294901760
    %1359 = vmatmul.mubr.f32.gmra.mxu0 %v1358
    %v1360 = vpop.f32.mrf.mxu0
    %v1361 = vadd.f32 %v972, %v1360
    %v1362 = vpop.f32.mrf.mxu0
    %1363 = vmatprep.mubr.f32.mxu0 0.0
    %v1364 = vand.u32 %v381, 4294901760
    %1365 = vmatmul.mubr.f32.gmra.mxu0 %v1364
    %v1366 = vpop.f32.mrf.mxu0
    %v1367 = vadd.f32 %v982, %v1366
    %v1368 = vpop.f32.mrf.mxu0
    %1369 = vmatprep.mubr.f32.mxu0 0.0
    %v1370 = vand.u32 %v382, 4294901760
    %1371 = vmatmul.mubr.f32.gmra.mxu0 %v1370
    %v1372 = vpop.f32.mrf.mxu0
    %v1373 = vadd.f32 %v992, %v1372
    %v1374 = vpop.f32.mrf.mxu0
    %1375 = vmatprep.mubr.f32.mxu0 0.0
    %v1376 = vand.u32 %v383, 4294901760
    %1377 = vmatmul.mubr.f32.gmra.mxu0 %v1376
    %v1378 = vpop.f32.mrf.mxu0
    %v1379 = vadd.f32 %v1002, %v1378
    %v1380 = vpop.f32.mrf.mxu0
    %1381 = vmatprep.mubr.f32.mxu0 0.0
    %v1382 = vand.u32 %v384, 4294901760
    %1383 = vmatmul.mubr.f32.gmra.mxu0 %v1382
    %v1384 = vpop.f32.mrf.mxu0
    %v1385 = vadd.f32 %v1012, %v1384
    %v1386 = vpop.f32.mrf.mxu0
    %1387 = vmatprep.mubr.f32.mxu0 0.0
    %v1388 = vand.u32 %v385, 4294901760
    %1389 = vmatmul.mubr.f32.gmra.mxu0 %v1388
    %v1390 = vpop.f32.mrf.mxu0
    %v1391 = vadd.f32 %v1022, %v1390
    %v1392 = vpop.f32.mrf.mxu0
    %1393 = vmatprep.mubr.f32.mxu0 0.0
    %v1394 = vand.u32 %v386, 4294901760
    %1395 = vmatmul.mubr.f32.gmra.mxu0 %v1394
    %v1396 = vpop.f32.mrf.mxu0
    %v1397 = vadd.f32 %v1032, %v1396
    %v1398 = vpop.f32.mrf.mxu0
    %1399 = vmatprep.mubr.f32.mxu0 0.0
    %v1400 = vand.u32 %v387, 4294901760
    %1401 = vmatmul.mubr.f32.gmra.mxu0 %v1400
    %v1402 = vpop.f32.mrf.mxu0
    %v1403 = vadd.f32 %v1042, %v1402
    %v1404 = vpop.f32.mrf.mxu0
    %1405 = vdwg.mxu0
    %1406 = vmatprep.subr.mxu0 0.0
    %v1407 = vand.u32 %v351, 4294901760
    %v1408 = vsub.f32 %v351, %v1407
    %1409 = vmatpush1.msra.mxu0 %v1408
    %1410 = vmatprep.subr.mxu0 0.0
    %v1411 = vand.u32 %v350, 4294901760
    %v1412 = vsub.f32 %v350, %v1411
    %1413 = vmatpush1.msra.mxu0 %v1412
    %1414 = vmatprep.subr.mxu0 0.0
    %v1415 = vand.u32 %v349, 4294901760
    %v1416 = vsub.f32 %v349, %v1415
    %1417 = vmatpush1.msra.mxu0 %v1416
    %1418 = vmatprep.subr.mxu0 0.0
    %v1419 = vand.u32 %v348, 4294901760
    %v1420 = vsub.f32 %v348, %v1419
    %1421 = vmatpush1.msra.mxu0 %v1420
    %1422 = vmatprep.subr.mxu0 0.0
    %v1423 = vand.u32 %v347, 4294901760
    %v1424 = vsub.f32 %v347, %v1423
    %1425 = vmatpush1.msra.mxu0 %v1424
    %1426 = vmatprep.subr.mxu0 0.0
    %v1427 = vand.u32 %v346, 4294901760
    %v1428 = vsub.f32 %v346, %v1427
    %1429 = vmatpush1.msra.mxu0 %v1428
    %1430 = vmatprep.subr.mxu0 0.0
    %v1431 = vand.u32 %v345, 4294901760
    %v1432 = vsub.f32 %v345, %v1431
    %1433 = vmatpush1.msra.mxu0 %v1432
    %1434 = vmatprep.subr.mxu0 0.0
    %v1435 = vand.u32 %v344, 4294901760
    %v1436 = vsub.f32 %v344, %v1435
    %1437 = vmatpush1.msra.mxu0 %v1436
    %1438 = vmatprep.subr.mxu0 0.0
    %v1439 = vand.u32 %v343, 4294901760
    %v1440 = vsub.f32 %v343, %v1439
    %1441 = vmatpush1.msra.mxu0 %v1440
    %1442 = vmatprep.subr.mxu0 0.0
    %v1443 = vand.u32 %v342, 4294901760
    %v1444 = vsub.f32 %v342, %v1443
    %1445 = vmatpush1.msra.mxu0 %v1444
    %1446 = vmatprep.subr.mxu0 0.0
    %v1447 = vand.u32 %v341, 4294901760
    %v1448 = vsub.f32 %v341, %v1447
    %1449 = vmatpush1.msra.mxu0 %v1448
    %1450 = vmatprep.subr.mxu0 0.0
    %v1451 = vand.u32 %v340, 4294901760
    %v1452 = vsub.f32 %v340, %v1451
    %1453 = vmatpush1.msra.mxu0 %v1452
    %1454 = vmatprep.subr.mxu0 0.0
    %v1455 = vand.u32 %v339, 4294901760
    %v1456 = vsub.f32 %v339, %v1455
    %1457 = vmatpush1.msra.mxu0 %v1456
    %1458 = vmatprep.subr.mxu0 0.0
    %v1459 = vand.u32 %v338, 4294901760
    %v1460 = vsub.f32 %v338, %v1459
    %1461 = vmatpush1.msra.mxu0 %v1460
    %1462 = vmatprep.subr.mxu0 0.0
    %v1463 = vand.u32 %v337, 4294901760
    %v1464 = vsub.f32 %v337, %v1463
    %1465 = vmatpush1.msra.mxu0 %v1464
    %1466 = vmatprep.subr.mxu0 0.0
    %v1467 = vand.u32 %v336, 4294901760
    %v1468 = vsub.f32 %v336, %v1467
    %1469 = vmatpush1.msra.mxu0 %v1468
    %1470 = vmatprep.subr.mxu0 0.0
    %1471 = vmatpush2.msra.mxu0 0.0
    %1472 = vmatprep.subr.mxu0 0.0
    %1473 = vmatpush2.msra.mxu0 0.0
    %1474 = vmatprep.subr.mxu0 0.0
    %1475 = vmatpush2.msra.mxu0 0.0
    %1476 = vmatprep.subr.mxu0 0.0
    %1477 = vmatpush2.msra.mxu0 0.0
    %1478 = vmatprep.subr.mxu0 0.0
    %1479 = vmatpush2.msra.mxu0 0.0
    %1480 = vmatprep.subr.mxu0 0.0
    %1481 = vmatpush2.msra.mxu0 0.0
    %1482 = vmatprep.subr.mxu0 0.0
    %1483 = vmatpush2.msra.mxu0 0.0
    %1484 = vmatprep.subr.mxu0 0.0
    %1485 = vmatpush2.msra.mxu0 0.0
    %1486 = vmatprep.subr.mxu0 0.0
    %1487 = vmatpush2.msra.mxu0 0.0
    %1488 = vmatprep.subr.mxu0 0.0
    %1489 = vmatpush2.msra.mxu0 0.0
    %1490 = vmatprep.subr.mxu0 0.0
    %1491 = vmatpush2.msra.mxu0 0.0
    %1492 = vmatprep.subr.mxu0 0.0
    %1493 = vmatpush2.msra.mxu0 0.0
    %1494 = vmatprep.subr.mxu0 0.0
    %1495 = vmatpush2.msra.mxu0 0.0
    %1496 = vmatprep.subr.mxu0 0.0
    %1497 = vmatpush2.msra.mxu0 0.0
    %1498 = vmatprep.subr.mxu0 0.0
    %1499 = vmatpush2.msra.mxu0 0.0
    %1500 = vmatprep.subr.mxu0 0.0
    %1501 = vmatpush2.msra.mxu0 0.0
    %1502 = vmatprep.mubr.f32.mxu0 0.0
    %v1503 = vand.u32 %v352, 4294901760
    %v1504 = vsub.f32 %v352, %v1503
    %1505 = vmatmul.mubr.f32.gmra.mxu0 %v1504
    %v1506 = vpop.f32.mrf.mxu0
    %v1507 = vadd.f32 %v1193, %v1506
    %v1508 = vpop.f32.mrf.mxu0
    %1509 = vmatprep.mubr.f32.mxu0 0.0
    %v1510 = vand.u32 %v353, 4294901760
    %v1511 = vsub.f32 %v353, %v1510
    %1512 = vmatmul.mubr.f32.gmra.mxu0 %v1511
    %v1513 = vpop.f32.mrf.mxu0
    %v1514 = vadd.f32 %v1199, %v1513
    %v1515 = vpop.f32.mrf.mxu0
    %1516 = vmatprep.mubr.f32.mxu0 0.0
    %v1517 = vand.u32 %v354, 4294901760
    %v1518 = vsub.f32 %v354, %v1517
    %1519 = vmatmul.mubr.f32.gmra.mxu0 %v1518
    %v1520 = vpop.f32.mrf.mxu0
    %v1521 = vadd.f32 %v1205, %v1520
    %v1522 = vpop.f32.mrf.mxu0
    %1523 = vmatprep.mubr.f32.mxu0 0.0
    %v1524 = vand.u32 %v355, 4294901760
    %v1525 = vsub.f32 %v355, %v1524
    %1526 = vmatmul.mubr.f32.gmra.mxu0 %v1525
    %v1527 = vpop.f32.mrf.mxu0
    %v1528 = vadd.f32 %v1211, %v1527
    %v1529 = vpop.f32.mrf.mxu0
    %1530 = vmatprep.mubr.f32.mxu0 0.0
    %v1531 = vand.u32 %v356, 4294901760
    %v1532 = vsub.f32 %v356, %v1531
    %1533 = vmatmul.mubr.f32.gmra.mxu0 %v1532
    %v1534 = vpop.f32.mrf.mxu0
    %v1535 = vadd.f32 %v1217, %v1534
    %v1536 = vpop.f32.mrf.mxu0
    %1537 = vmatprep.mubr.f32.mxu0 0.0
    %v1538 = vand.u32 %v357, 4294901760
    %v1539 = vsub.f32 %v357, %v1538
    %1540 = vmatmul.mubr.f32.gmra.mxu0 %v1539
    %v1541 = vpop.f32.mrf.mxu0
    %v1542 = vadd.f32 %v1223, %v1541
    %v1543 = vpop.f32.mrf.mxu0
    %1544 = vmatprep.mubr.f32.mxu0 0.0
    %v1545 = vand.u32 %v358, 4294901760
    %v1546 = vsub.f32 %v358, %v1545
    %1547 = vmatmul.mubr.f32.gmra.mxu0 %v1546
    %v1548 = vpop.f32.mrf.mxu0
    %v1549 = vadd.f32 %v1229, %v1548
    %v1550 = vpop.f32.mrf.mxu0
    %1551 = vmatprep.mubr.f32.mxu0 0.0
    %v1552 = vand.u32 %v359, 4294901760
    %v1553 = vsub.f32 %v359, %v1552
    %1554 = vmatmul.mubr.f32.gmra.mxu0 %v1553
    %v1555 = vpop.f32.mrf.mxu0
    %v1556 = vadd.f32 %v1235, %v1555
    %v1557 = vpop.f32.mrf.mxu0
    %1558 = vmatprep.mubr.f32.mxu0 0.0
    %v1559 = vand.u32 %v360, 4294901760
    %v1560 = vsub.f32 %v360, %v1559
    %1561 = vmatmul.mubr.f32.gmra.mxu0 %v1560
    %v1562 = vpop.f32.mrf.mxu0
    %v1563 = vadd.f32 %v1241, %v1562
    %v1564 = vpop.f32.mrf.mxu0
    %1565 = vmatprep.mubr.f32.mxu0 0.0
    %v1566 = vand.u32 %v361, 4294901760
    %v1567 = vsub.f32 %v361, %v1566
    %1568 = vmatmul.mubr.f32.gmra.mxu0 %v1567
    %v1569 = vpop.f32.mrf.mxu0
    %v1570 = vadd.f32 %v1247, %v1569
    %v1571 = vpop.f32.mrf.mxu0
    %1572 = vmatprep.mubr.f32.mxu0 0.0
    %v1573 = vand.u32 %v362, 4294901760
    %v1574 = vsub.f32 %v362, %v1573
    %1575 = vmatmul.mubr.f32.gmra.mxu0 %v1574
    %v1576 = vpop.f32.mrf.mxu0
    %v1577 = vadd.f32 %v1253, %v1576
    %v1578 = vpop.f32.mrf.mxu0
    %1579 = vmatprep.mubr.f32.mxu0 0.0
    %v1580 = vand.u32 %v363, 4294901760
    %v1581 = vsub.f32 %v363, %v1580
    %1582 = vmatmul.mubr.f32.gmra.mxu0 %v1581
    %v1583 = vpop.f32.mrf.mxu0
    %v1584 = vadd.f32 %v1259, %v1583
    %v1585 = vpop.f32.mrf.mxu0
    %1586 = vmatprep.mubr.f32.mxu0 0.0
    %v1587 = vand.u32 %v364, 4294901760
    %v1588 = vsub.f32 %v364, %v1587
    %1589 = vmatmul.mubr.f32.gmra.mxu0 %v1588
    %v1590 = vpop.f32.mrf.mxu0
    %v1591 = vadd.f32 %v1265, %v1590
    %v1592 = vpop.f32.mrf.mxu0
    %1593 = vmatprep.mubr.f32.mxu0 0.0
    %v1594 = vand.u32 %v365, 4294901760
    %v1595 = vsub.f32 %v365, %v1594
    %1596 = vmatmul.mubr.f32.gmra.mxu0 %v1595
    %v1597 = vpop.f32.mrf.mxu0
    %v1598 = vadd.f32 %v1271, %v1597
    %v1599 = vpop.f32.mrf.mxu0
    %1600 = vmatprep.mubr.f32.mxu0 0.0
    %v1601 = vand.u32 %v366, 4294901760
    %v1602 = vsub.f32 %v366, %v1601
    %1603 = vmatmul.mubr.f32.gmra.mxu0 %v1602
    %v1604 = vpop.f32.mrf.mxu0
    %v1605 = vadd.f32 %v1277, %v1604
    %v1606 = vpop.f32.mrf.mxu0
    %1607 = vmatprep.mubr.f32.mxu0 0.0
    %v1608 = vand.u32 %v367, 4294901760
    %v1609 = vsub.f32 %v367, %v1608
    %1610 = vmatmul.mubr.f32.gmra.mxu0 %v1609
    %v1611 = vpop.f32.mrf.mxu0
    %v1612 = vadd.f32 %v1283, %v1611
    %v1613 = vpop.f32.mrf.mxu0
    %1614 = vmatprep.mubr.f32.mxu0 0.0
    %v1615 = vand.u32 %v368, 4294901760
    %v1616 = vsub.f32 %v368, %v1615
    %1617 = vmatmul.mubr.f32.gmra.mxu0 %v1616
    %v1618 = vpop.f32.mrf.mxu0
    %v1619 = vadd.f32 %v1289, %v1618
    %v1620 = vpop.f32.mrf.mxu0
    %1621 = vmatprep.mubr.f32.mxu0 0.0
    %v1622 = vand.u32 %v369, 4294901760
    %v1623 = vsub.f32 %v369, %v1622
    %1624 = vmatmul.mubr.f32.gmra.mxu0 %v1623
    %v1625 = vpop.f32.mrf.mxu0
    %v1626 = vadd.f32 %v1295, %v1625
    %v1627 = vpop.f32.mrf.mxu0
    %1628 = vmatprep.mubr.f32.mxu0 0.0
    %v1629 = vand.u32 %v370, 4294901760
    %v1630 = vsub.f32 %v370, %v1629
    %1631 = vmatmul.mubr.f32.gmra.mxu0 %v1630
    %v1632 = vpop.f32.mrf.mxu0
    %v1633 = vadd.f32 %v1301, %v1632
    %v1634 = vpop.f32.mrf.mxu0
    %1635 = vmatprep.mubr.f32.mxu0 0.0
    %v1636 = vand.u32 %v371, 4294901760
    %v1637 = vsub.f32 %v371, %v1636
    %1638 = vmatmul.mubr.f32.gmra.mxu0 %v1637
    %v1639 = vpop.f32.mrf.mxu0
    %v1640 = vadd.f32 %v1307, %v1639
    %v1641 = vpop.f32.mrf.mxu0
    %1642 = vmatprep.mubr.f32.mxu0 0.0
    %v1643 = vand.u32 %v372, 4294901760
    %v1644 = vsub.f32 %v372, %v1643
    %1645 = vmatmul.mubr.f32.gmra.mxu0 %v1644
    %v1646 = vpop.f32.mrf.mxu0
    %v1647 = vadd.f32 %v1313, %v1646
    %v1648 = vpop.f32.mrf.mxu0
    %1649 = vmatprep.mubr.f32.mxu0 0.0
    %v1650 = vand.u32 %v373, 4294901760
    %v1651 = vsub.f32 %v373, %v1650
    %1652 = vmatmul.mubr.f32.gmra.mxu0 %v1651
    %v1653 = vpop.f32.mrf.mxu0
    %v1654 = vadd.f32 %v1319, %v1653
    %v1655 = vpop.f32.mrf.mxu0
    %1656 = vmatprep.mubr.f32.mxu0 0.0
    %v1657 = vand.u32 %v374, 4294901760
    %v1658 = vsub.f32 %v374, %v1657
    %1659 = vmatmul.mubr.f32.gmra.mxu0 %v1658
    %v1660 = vpop.f32.mrf.mxu0
    %v1661 = vadd.f32 %v1325, %v1660
    %v1662 = vpop.f32.mrf.mxu0
    %1663 = vmatprep.mubr.f32.mxu0 0.0
    %v1664 = vand.u32 %v375, 4294901760
    %v1665 = vsub.f32 %v375, %v1664
    %1666 = vmatmul.mubr.f32.gmra.mxu0 %v1665
    %v1667 = vpop.f32.mrf.mxu0
    %v1668 = vadd.f32 %v1331, %v1667
    %v1669 = vpop.f32.mrf.mxu0
    %1670 = vmatprep.mubr.f32.mxu0 0.0
    %v1671 = vand.u32 %v376, 4294901760
    %v1672 = vsub.f32 %v376, %v1671
    %1673 = vmatmul.mubr.f32.gmra.mxu0 %v1672
    %v1674 = vpop.f32.mrf.mxu0
    %v1675 = vadd.f32 %v1337, %v1674
    %v1676 = vpop.f32.mrf.mxu0
    %1677 = vmatprep.mubr.f32.mxu0 0.0
    %v1678 = vand.u32 %v377, 4294901760
    %v1679 = vsub.f32 %v377, %v1678
    %1680 = vmatmul.mubr.f32.gmra.mxu0 %v1679
    %v1681 = vpop.f32.mrf.mxu0
    %v1682 = vadd.f32 %v1343, %v1681
    %v1683 = vpop.f32.mrf.mxu0
    %1684 = vmatprep.mubr.f32.mxu0 0.0
    %v1685 = vand.u32 %v378, 4294901760
    %v1686 = vsub.f32 %v378, %v1685
    %1687 = vmatmul.mubr.f32.gmra.mxu0 %v1686
    %v1688 = vpop.f32.mrf.mxu0
    %v1689 = vadd.f32 %v1349, %v1688
    %v1690 = vpop.f32.mrf.mxu0
    %1691 = vmatprep.mubr.f32.mxu0 0.0
    %v1692 = vand.u32 %v379, 4294901760
    %v1693 = vsub.f32 %v379, %v1692
    %1694 = vmatmul.mubr.f32.gmra.mxu0 %v1693
    %v1695 = vpop.f32.mrf.mxu0
    %v1696 = vadd.f32 %v1355, %v1695
    %v1697 = vpop.f32.mrf.mxu0
    %1698 = vmatprep.mubr.f32.mxu0 0.0
    %v1699 = vand.u32 %v380, 4294901760
    %v1700 = vsub.f32 %v380, %v1699
    %1701 = vmatmul.mubr.f32.gmra.mxu0 %v1700
    %v1702 = vpop.f32.mrf.mxu0
    %v1703 = vadd.f32 %v1361, %v1702
    %v1704 = vpop.f32.mrf.mxu0
    %1705 = vmatprep.mubr.f32.mxu0 0.0
    %v1706 = vand.u32 %v381, 4294901760
    %v1707 = vsub.f32 %v381, %v1706
    %1708 = vmatmul.mubr.f32.gmra.mxu0 %v1707
    %v1709 = vpop.f32.mrf.mxu0
    %v1710 = vadd.f32 %v1367, %v1709
    %v1711 = vpop.f32.mrf.mxu0
    %1712 = vmatprep.mubr.f32.mxu0 0.0
    %v1713 = vand.u32 %v382, 4294901760
    %v1714 = vsub.f32 %v382, %v1713
    %1715 = vmatmul.mubr.f32.gmra.mxu0 %v1714
    %v1716 = vpop.f32.mrf.mxu0
    %v1717 = vadd.f32 %v1373, %v1716
    %v1718 = vpop.f32.mrf.mxu0
    %1719 = vmatprep.mubr.f32.mxu0 0.0
    %v1720 = vand.u32 %v383, 4294901760
    %v1721 = vsub.f32 %v383, %v1720
    %1722 = vmatmul.mubr.f32.gmra.mxu0 %v1721
    %v1723 = vpop.f32.mrf.mxu0
    %v1724 = vadd.f32 %v1379, %v1723
    %v1725 = vpop.f32.mrf.mxu0
    %1726 = vmatprep.mubr.f32.mxu0 0.0
    %v1727 = vand.u32 %v384, 4294901760
    %v1728 = vsub.f32 %v384, %v1727
    %1729 = vmatmul.mubr.f32.gmra.mxu0 %v1728
    %v1730 = vpop.f32.mrf.mxu0
    %v1731 = vadd.f32 %v1385, %v1730
    %v1732 = vpop.f32.mrf.mxu0
    %1733 = vmatprep.mubr.f32.mxu0 0.0
    %v1734 = vand.u32 %v385, 4294901760
    %v1735 = vsub.f32 %v385, %v1734
    %1736 = vmatmul.mubr.f32.gmra.mxu0 %v1735
    %v1737 = vpop.f32.mrf.mxu0
    %v1738 = vadd.f32 %v1391, %v1737
    %v1739 = vpop.f32.mrf.mxu0
    %1740 = vmatprep.mubr.f32.mxu0 0.0
    %v1741 = vand.u32 %v386, 4294901760
    %v1742 = vsub.f32 %v386, %v1741
    %1743 = vmatmul.mubr.f32.gmra.mxu0 %v1742
    %v1744 = vpop.f32.mrf.mxu0
    %v1745 = vadd.f32 %v1397, %v1744
    %v1746 = vpop.f32.mrf.mxu0
    %1747 = vmatprep.mubr.f32.mxu0 0.0
    %v1748 = vand.u32 %v387, 4294901760
    %v1749 = vsub.f32 %v387, %v1748
    %1750 = vmatmul.mubr.f32.gmra.mxu0 %v1749
    %v1751 = vpop.f32.mrf.mxu0
    %v1752 = vadd.f32 %v1403, %v1751
    %v1753 = vpop.f32.mrf.mxu0
    %1754 = vdwg.mxu0
    %1755 = vmatprep.subr.mxu0 0.0
    %v1756 = vand.u32 %v351, 4294901760
    %1757 = vmatpush1.msra.mxu0 %v1756
    %1758 = vmatprep.subr.mxu0 0.0
    %v1759 = vand.u32 %v350, 4294901760
    %1760 = vmatpush1.msra.mxu0 %v1759
    %1761 = vmatprep.subr.mxu0 0.0
    %v1762 = vand.u32 %v349, 4294901760
    %1763 = vmatpush1.msra.mxu0 %v1762
    %1764 = vmatprep.subr.mxu0 0.0
    %v1765 = vand.u32 %v348, 4294901760
    %1766 = vmatpush1.msra.mxu0 %v1765
    %1767 = vmatprep.subr.mxu0 0.0
    %v1768 = vand.u32 %v347, 4294901760
    %1769 = vmatpush1.msra.mxu0 %v1768
    %1770 = vmatprep.subr.mxu0 0.0
    %v1771 = vand.u32 %v346, 4294901760
    %1772 = vmatpush1.msra.mxu0 %v1771
    %1773 = vmatprep.subr.mxu0 0.0
    %v1774 = vand.u32 %v345, 4294901760
    %1775 = vmatpush1.msra.mxu0 %v1774
    %1776 = vmatprep.subr.mxu0 0.0
    %v1777 = vand.u32 %v344, 4294901760
    %1778 = vmatpush1.msra.mxu0 %v1777
    %1779 = vmatprep.subr.mxu0 0.0
    %v1780 = vand.u32 %v343, 4294901760
    %1781 = vmatpush1.msra.mxu0 %v1780
    %1782 = vmatprep.subr.mxu0 0.0
    %v1783 = vand.u32 %v342, 4294901760
    %1784 = vmatpush1.msra.mxu0 %v1783
    %1785 = vmatprep.subr.mxu0 0.0
    %v1786 = vand.u32 %v341, 4294901760
    %1787 = vmatpush1.msra.mxu0 %v1786
    %1788 = vmatprep.subr.mxu0 0.0
    %v1789 = vand.u32 %v340, 4294901760
    %1790 = vmatpush1.msra.mxu0 %v1789
    %1791 = vmatprep.subr.mxu0 0.0
    %v1792 = vand.u32 %v339, 4294901760
    %1793 = vmatpush1.msra.mxu0 %v1792
    %1794 = vmatprep.subr.mxu0 0.0
    %v1795 = vand.u32 %v338, 4294901760
    %1796 = vmatpush1.msra.mxu0 %v1795
    %1797 = vmatprep.subr.mxu0 0.0
    %v1798 = vand.u32 %v337, 4294901760
    %1799 = vmatpush1.msra.mxu0 %v1798
    %1800 = vmatprep.subr.mxu0 0.0
    %v1801 = vand.u32 %v336, 4294901760
    %1802 = vmatpush1.msra.mxu0 %v1801
    %1803 = vmatprep.subr.mxu0 0.0
    %1804 = vmatpush2.msra.mxu0 0.0
    %1805 = vmatprep.subr.mxu0 0.0
    %1806 = vmatpush2.msra.mxu0 0.0
    %1807 = vmatprep.subr.mxu0 0.0
    %1808 = vmatpush2.msra.mxu0 0.0
    %1809 = vmatprep.subr.mxu0 0.0
    %1810 = vmatpush2.msra.mxu0 0.0
    %1811 = vmatprep.subr.mxu0 0.0
    %1812 = vmatpush2.msra.mxu0 0.0
    %1813 = vmatprep.subr.mxu0 0.0
    %1814 = vmatpush2.msra.mxu0 0.0
    %1815 = vmatprep.subr.mxu0 0.0
    %1816 = vmatpush2.msra.mxu0 0.0
    %1817 = vmatprep.subr.mxu0 0.0
    %1818 = vmatpush2.msra.mxu0 0.0
    %1819 = vmatprep.subr.mxu0 0.0
    %1820 = vmatpush2.msra.mxu0 0.0
    %1821 = vmatprep.subr.mxu0 0.0
    %1822 = vmatpush2.msra.mxu0 0.0
    %1823 = vmatprep.subr.mxu0 0.0
    %1824 = vmatpush2.msra.mxu0 0.0
    %1825 = vmatprep.subr.mxu0 0.0
    %1826 = vmatpush2.msra.mxu0 0.0
    %1827 = vmatprep.subr.mxu0 0.0
    %1828 = vmatpush2.msra.mxu0 0.0
    %1829 = vmatprep.subr.mxu0 0.0
    %1830 = vmatpush2.msra.mxu0 0.0
    %1831 = vmatprep.subr.mxu0 0.0
    %1832 = vmatpush2.msra.mxu0 0.0
    %1833 = vmatprep.subr.mxu0 0.0
    %1834 = vmatpush2.msra.mxu0 0.0
    %1835 = vmatprep.mubr.f32.mxu0 0.0
    %v1836 = vand.u32 %v352, 4294901760
    %v1837 = vsub.f32 %v352, %v1836
    %v1838 = vand.u32 %v1837, 4294901760
    %1839 = vmatmul.mubr.f32.gmra.mxu0 %v1838
    %v1840 = vpop.f32.mrf.mxu0
    %v1841 = vadd.f32 %v1507, %v1840
    %v1842 = vpop.f32.mrf.mxu0
    %1843 = vmatprep.mubr.f32.mxu0 0.0
    %v1844 = vand.u32 %v353, 4294901760
    %v1845 = vsub.f32 %v353, %v1844
    %v1846 = vand.u32 %v1845, 4294901760
    %1847 = vmatmul.mubr.f32.gmra.mxu0 %v1846
    %v1848 = vpop.f32.mrf.mxu0
    %v1849 = vadd.f32 %v1514, %v1848
    %v1850 = vpop.f32.mrf.mxu0
    %1851 = vmatprep.mubr.f32.mxu0 0.0
    %v1852 = vand.u32 %v354, 4294901760
    %v1853 = vsub.f32 %v354, %v1852
    %v1854 = vand.u32 %v1853, 4294901760
    %1855 = vmatmul.mubr.f32.gmra.mxu0 %v1854
    %v1856 = vpop.f32.mrf.mxu0
    %v1857 = vadd.f32 %v1521, %v1856
    %v1858 = vpop.f32.mrf.mxu0
    %1859 = vmatprep.mubr.f32.mxu0 0.0
    %v1860 = vand.u32 %v355, 4294901760
    %v1861 = vsub.f32 %v355, %v1860
    %v1862 = vand.u32 %v1861, 4294901760
    %1863 = vmatmul.mubr.f32.gmra.mxu0 %v1862
    %v1864 = vpop.f32.mrf.mxu0
    %v1865 = vadd.f32 %v1528, %v1864
    %v1866 = vpop.f32.mrf.mxu0
    %1867 = vmatprep.mubr.f32.mxu0 0.0
    %v1868 = vand.u32 %v356, 4294901760
    %v1869 = vsub.f32 %v356, %v1868
    %v1870 = vand.u32 %v1869, 4294901760
    %1871 = vmatmul.mubr.f32.gmra.mxu0 %v1870
    %v1872 = vpop.f32.mrf.mxu0
    %v1873 = vadd.f32 %v1535, %v1872
    %v1874 = vpop.f32.mrf.mxu0
    %1875 = vmatprep.mubr.f32.mxu0 0.0
    %v1876 = vand.u32 %v357, 4294901760
    %v1877 = vsub.f32 %v357, %v1876
    %v1878 = vand.u32 %v1877, 4294901760
    %1879 = vmatmul.mubr.f32.gmra.mxu0 %v1878
    %v1880 = vpop.f32.mrf.mxu0
    %v1881 = vadd.f32 %v1542, %v1880
    %v1882 = vpop.f32.mrf.mxu0
    %1883 = vmatprep.mubr.f32.mxu0 0.0
    %v1884 = vand.u32 %v358, 4294901760
    %v1885 = vsub.f32 %v358, %v1884
    %v1886 = vand.u32 %v1885, 4294901760
    %1887 = vmatmul.mubr.f32.gmra.mxu0 %v1886
    %v1888 = vpop.f32.mrf.mxu0
    %v1889 = vadd.f32 %v1549, %v1888
    %v1890 = vpop.f32.mrf.mxu0
    %1891 = vmatprep.mubr.f32.mxu0 0.0
    %v1892 = vand.u32 %v359, 4294901760
    %v1893 = vsub.f32 %v359, %v1892
    %v1894 = vand.u32 %v1893, 4294901760
    %1895 = vmatmul.mubr.f32.gmra.mxu0 %v1894
    %v1896 = vpop.f32.mrf.mxu0
    %v1897 = vadd.f32 %v1556, %v1896
    %v1898 = vpop.f32.mrf.mxu0
    %1899 = vmatprep.mubr.f32.mxu0 0.0
    %v1900 = vand.u32 %v360, 4294901760
    %v1901 = vsub.f32 %v360, %v1900
    %v1902 = vand.u32 %v1901, 4294901760
    %1903 = vmatmul.mubr.f32.gmra.mxu0 %v1902
    %v1904 = vpop.f32.mrf.mxu0
    %v1905 = vadd.f32 %v1563, %v1904
    %v1906 = vpop.f32.mrf.mxu0
    %1907 = vmatprep.mubr.f32.mxu0 0.0
    %v1908 = vand.u32 %v361, 4294901760
    %v1909 = vsub.f32 %v361, %v1908
    %v1910 = vand.u32 %v1909, 4294901760
    %1911 = vmatmul.mubr.f32.gmra.mxu0 %v1910
    %v1912 = vpop.f32.mrf.mxu0
    %v1913 = vadd.f32 %v1570, %v1912
    %v1914 = vpop.f32.mrf.mxu0
    %1915 = vmatprep.mubr.f32.mxu0 0.0
    %v1916 = vand.u32 %v362, 4294901760
    %v1917 = vsub.f32 %v362, %v1916
    %v1918 = vand.u32 %v1917, 4294901760
    %1919 = vmatmul.mubr.f32.gmra.mxu0 %v1918
    %v1920 = vpop.f32.mrf.mxu0
    %v1921 = vadd.f32 %v1577, %v1920
    %v1922 = vpop.f32.mrf.mxu0
    %1923 = vmatprep.mubr.f32.mxu0 0.0
    %v1924 = vand.u32 %v363, 4294901760
    %v1925 = vsub.f32 %v363, %v1924
    %v1926 = vand.u32 %v1925, 4294901760
    %1927 = vmatmul.mubr.f32.gmra.mxu0 %v1926
    %v1928 = vpop.f32.mrf.mxu0
    %v1929 = vadd.f32 %v1584, %v1928
    %v1930 = vpop.f32.mrf.mxu0
    %1931 = vmatprep.mubr.f32.mxu0 0.0
    %v1932 = vand.u32 %v364, 4294901760
    %v1933 = vsub.f32 %v364, %v1932
    %v1934 = vand.u32 %v1933, 4294901760
    %1935 = vmatmul.mubr.f32.gmra.mxu0 %v1934
    %v1936 = vpop.f32.mrf.mxu0
    %v1937 = vadd.f32 %v1591, %v1936
    %v1938 = vpop.f32.mrf.mxu0
    %1939 = vmatprep.mubr.f32.mxu0 0.0
    %v1940 = vand.u32 %v365, 4294901760
    %v1941 = vsub.f32 %v365, %v1940
    %v1942 = vand.u32 %v1941, 4294901760
    %1943 = vmatmul.mubr.f32.gmra.mxu0 %v1942
    %v1944 = vpop.f32.mrf.mxu0
    %v1945 = vadd.f32 %v1598, %v1944
    %v1946 = vpop.f32.mrf.mxu0
    %1947 = vmatprep.mubr.f32.mxu0 0.0
    %v1948 = vand.u32 %v366, 4294901760
    %v1949 = vsub.f32 %v366, %v1948
    %v1950 = vand.u32 %v1949, 4294901760
    %1951 = vmatmul.mubr.f32.gmra.mxu0 %v1950
    %v1952 = vpop.f32.mrf.mxu0
    %v1953 = vadd.f32 %v1605, %v1952
    %v1954 = vpop.f32.mrf.mxu0
    %1955 = vmatprep.mubr.f32.mxu0 0.0
    %v1956 = vand.u32 %v367, 4294901760
    %v1957 = vsub.f32 %v367, %v1956
    %v1958 = vand.u32 %v1957, 4294901760
    %1959 = vmatmul.mubr.f32.gmra.mxu0 %v1958
    %v1960 = vpop.f32.mrf.mxu0
    %v1961 = vadd.f32 %v1612, %v1960
    %v1962 = vpop.f32.mrf.mxu0
    %1963 = vmatprep.mubr.f32.mxu0 0.0
    %v1964 = vand.u32 %v368, 4294901760
    %v1965 = vsub.f32 %v368, %v1964
    %v1966 = vand.u32 %v1965, 4294901760
    %1967 = vmatmul.mubr.f32.gmra.mxu0 %v1966
    %v1968 = vpop.f32.mrf.mxu0
    %v1969 = vadd.f32 %v1619, %v1968
    %v1970 = vpop.f32.mrf.mxu0
    %1971 = vmatprep.mubr.f32.mxu0 0.0
    %v1972 = vand.u32 %v369, 4294901760
    %v1973 = vsub.f32 %v369, %v1972
    %v1974 = vand.u32 %v1973, 4294901760
    %1975 = vmatmul.mubr.f32.gmra.mxu0 %v1974
    %v1976 = vpop.f32.mrf.mxu0
    %v1977 = vadd.f32 %v1626, %v1976
    %v1978 = vpop.f32.mrf.mxu0
    %1979 = vmatprep.mubr.f32.mxu0 0.0
    %v1980 = vand.u32 %v370, 4294901760
    %v1981 = vsub.f32 %v370, %v1980
    %v1982 = vand.u32 %v1981, 4294901760
    %1983 = vmatmul.mubr.f32.gmra.mxu0 %v1982
    %v1984 = vpop.f32.mrf.mxu0
    %v1985 = vadd.f32 %v1633, %v1984
    %v1986 = vpop.f32.mrf.mxu0
    %1987 = vmatprep.mubr.f32.mxu0 0.0
    %v1988 = vand.u32 %v371, 4294901760
    %v1989 = vsub.f32 %v371, %v1988
    %v1990 = vand.u32 %v1989, 4294901760
    %1991 = vmatmul.mubr.f32.gmra.mxu0 %v1990
    %v1992 = vpop.f32.mrf.mxu0
    %v1993 = vadd.f32 %v1640, %v1992
    %v1994 = vpop.f32.mrf.mxu0
    %1995 = vmatprep.mubr.f32.mxu0 0.0
    %v1996 = vand.u32 %v372, 4294901760
    %v1997 = vsub.f32 %v372, %v1996
    %v1998 = vand.u32 %v1997, 4294901760
    %1999 = vmatmul.mubr.f32.gmra.mxu0 %v1998
    %v2000 = vpop.f32.mrf.mxu0
    %v2001 = vadd.f32 %v1647, %v2000
    %v2002 = vpop.f32.mrf.mxu0
    %2003 = vmatprep.mubr.f32.mxu0 0.0
    %v2004 = vand.u32 %v373, 4294901760
    %v2005 = vsub.f32 %v373, %v2004
    %v2006 = vand.u32 %v2005, 4294901760
    %2007 = vmatmul.mubr.f32.gmra.mxu0 %v2006
    %v2008 = vpop.f32.mrf.mxu0
    %v2009 = vadd.f32 %v1654, %v2008
    %v2010 = vpop.f32.mrf.mxu0
    %2011 = vmatprep.mubr.f32.mxu0 0.0
    %v2012 = vand.u32 %v374, 4294901760
    %v2013 = vsub.f32 %v374, %v2012
    %v2014 = vand.u32 %v2013, 4294901760
    %2015 = vmatmul.mubr.f32.gmra.mxu0 %v2014
    %v2016 = vpop.f32.mrf.mxu0
    %v2017 = vadd.f32 %v1661, %v2016
    %v2018 = vpop.f32.mrf.mxu0
    %2019 = vmatprep.mubr.f32.mxu0 0.0
    %v2020 = vand.u32 %v375, 4294901760
    %v2021 = vsub.f32 %v375, %v2020
    %v2022 = vand.u32 %v2021, 4294901760
    %2023 = vmatmul.mubr.f32.gmra.mxu0 %v2022
    %v2024 = vpop.f32.mrf.mxu0
    %v2025 = vadd.f32 %v1668, %v2024
    %v2026 = vpop.f32.mrf.mxu0
    %2027 = vmatprep.mubr.f32.mxu0 0.0
    %v2028 = vand.u32 %v376, 4294901760
    %v2029 = vsub.f32 %v376, %v2028
    %v2030 = vand.u32 %v2029, 4294901760
    %2031 = vmatmul.mubr.f32.gmra.mxu0 %v2030
    %v2032 = vpop.f32.mrf.mxu0
    %v2033 = vadd.f32 %v1675, %v2032
    %v2034 = vpop.f32.mrf.mxu0
    %2035 = vmatprep.mubr.f32.mxu0 0.0
    %v2036 = vand.u32 %v377, 4294901760
    %v2037 = vsub.f32 %v377, %v2036
    %v2038 = vand.u32 %v2037, 4294901760
    %2039 = vmatmul.mubr.f32.gmra.mxu0 %v2038
    %v2040 = vpop.f32.mrf.mxu0
    %v2041 = vadd.f32 %v1682, %v2040
    %v2042 = vpop.f32.mrf.mxu0
    %2043 = vmatprep.mubr.f32.mxu0 0.0
    %v2044 = vand.u32 %v378, 4294901760
    %v2045 = vsub.f32 %v378, %v2044
    %v2046 = vand.u32 %v2045, 4294901760
    %2047 = vmatmul.mubr.f32.gmra.mxu0 %v2046
    %v2048 = vpop.f32.mrf.mxu0
    %v2049 = vadd.f32 %v1689, %v2048
    %v2050 = vpop.f32.mrf.mxu0
    %2051 = vmatprep.mubr.f32.mxu0 0.0
    %v2052 = vand.u32 %v379, 4294901760
    %v2053 = vsub.f32 %v379, %v2052
    %v2054 = vand.u32 %v2053, 4294901760
    %2055 = vmatmul.mubr.f32.gmra.mxu0 %v2054
    %v2056 = vpop.f32.mrf.mxu0
    %v2057 = vadd.f32 %v1696, %v2056
    %v2058 = vpop.f32.mrf.mxu0
    %2059 = vmatprep.mubr.f32.mxu0 0.0
    %v2060 = vand.u32 %v380, 4294901760
    %v2061 = vsub.f32 %v380, %v2060
    %v2062 = vand.u32 %v2061, 4294901760
    %2063 = vmatmul.mubr.f32.gmra.mxu0 %v2062
    %v2064 = vpop.f32.mrf.mxu0
    %v2065 = vadd.f32 %v1703, %v2064
    %v2066 = vpop.f32.mrf.mxu0
    %2067 = vmatprep.mubr.f32.mxu0 0.0
    %v2068 = vand.u32 %v381, 4294901760
    %v2069 = vsub.f32 %v381, %v2068
    %v2070 = vand.u32 %v2069, 4294901760
    %2071 = vmatmul.mubr.f32.gmra.mxu0 %v2070
    %v2072 = vpop.f32.mrf.mxu0
    %v2073 = vadd.f32 %v1710, %v2072
    %v2074 = vpop.f32.mrf.mxu0
    %2075 = vmatprep.mubr.f32.mxu0 0.0
    %v2076 = vand.u32 %v382, 4294901760
    %v2077 = vsub.f32 %v382, %v2076
    %v2078 = vand.u32 %v2077, 4294901760
    %2079 = vmatmul.mubr.f32.gmra.mxu0 %v2078
    %v2080 = vpop.f32.mrf.mxu0
    %v2081 = vadd.f32 %v1717, %v2080
    %v2082 = vpop.f32.mrf.mxu0
    %2083 = vmatprep.mubr.f32.mxu0 0.0
    %v2084 = vand.u32 %v383, 4294901760
    %v2085 = vsub.f32 %v383, %v2084
    %v2086 = vand.u32 %v2085, 4294901760
    %2087 = vmatmul.mubr.f32.gmra.mxu0 %v2086
    %v2088 = vpop.f32.mrf.mxu0
    %v2089 = vadd.f32 %v1724, %v2088
    %v2090 = vpop.f32.mrf.mxu0
    %2091 = vmatprep.mubr.f32.mxu0 0.0
    %v2092 = vand.u32 %v384, 4294901760
    %v2093 = vsub.f32 %v384, %v2092
    %v2094 = vand.u32 %v2093, 4294901760
    %2095 = vmatmul.mubr.f32.gmra.mxu0 %v2094
    %v2096 = vpop.f32.mrf.mxu0
    %v2097 = vadd.f32 %v1731, %v2096
    %v2098 = vpop.f32.mrf.mxu0
    %2099 = vmatprep.mubr.f32.mxu0 0.0
    %v2100 = vand.u32 %v385, 4294901760
    %v2101 = vsub.f32 %v385, %v2100
    %v2102 = vand.u32 %v2101, 4294901760
    %2103 = vmatmul.mubr.f32.gmra.mxu0 %v2102
    %v2104 = vpop.f32.mrf.mxu0
    %v2105 = vadd.f32 %v1738, %v2104
    %v2106 = vpop.f32.mrf.mxu0
    %2107 = vmatprep.mubr.f32.mxu0 0.0
    %v2108 = vand.u32 %v386, 4294901760
    %v2109 = vsub.f32 %v386, %v2108
    %v2110 = vand.u32 %v2109, 4294901760
    %2111 = vmatmul.mubr.f32.gmra.mxu0 %v2110
    %v2112 = vpop.f32.mrf.mxu0
    %v2113 = vadd.f32 %v1745, %v2112
    %v2114 = vpop.f32.mrf.mxu0
    %2115 = vmatprep.mubr.f32.mxu0 0.0
    %v2116 = vand.u32 %v387, 4294901760
    %v2117 = vsub.f32 %v387, %v2116
    %v2118 = vand.u32 %v2117, 4294901760
    %2119 = vmatmul.mubr.f32.gmra.mxu0 %v2118
    %v2120 = vpop.f32.mrf.mxu0
    %v2121 = vadd.f32 %v1752, %v2120
    %v2122 = vpop.f32.mrf.mxu0
    %2123 = vdwg.mxu0
    %2124 = vmatprep.subr.mxu0 0.0
    %v2125 = vand.u32 %v351, 4294901760
    %v2126 = vsub.f32 %v351, %v2125
    %v2127 = vand.u32 %v2126, 4294901760
    %2128 = vmatpush1.msra.mxu0 %v2127
    %2129 = vmatprep.subr.mxu0 0.0
    %v2130 = vand.u32 %v350, 4294901760
    %v2131 = vsub.f32 %v350, %v2130
    %v2132 = vand.u32 %v2131, 4294901760
    %2133 = vmatpush1.msra.mxu0 %v2132
    %2134 = vmatprep.subr.mxu0 0.0
    %v2135 = vand.u32 %v349, 4294901760
    %v2136 = vsub.f32 %v349, %v2135
    %v2137 = vand.u32 %v2136, 4294901760
    %2138 = vmatpush1.msra.mxu0 %v2137
    %2139 = vmatprep.subr.mxu0 0.0
    %v2140 = vand.u32 %v348, 4294901760
    %v2141 = vsub.f32 %v348, %v2140
    %v2142 = vand.u32 %v2141, 4294901760
    %2143 = vmatpush1.msra.mxu0 %v2142
    %2144 = vmatprep.subr.mxu0 0.0
    %v2145 = vand.u32 %v347, 4294901760
    %v2146 = vsub.f32 %v347, %v2145
    %v2147 = vand.u32 %v2146, 4294901760
    %2148 = vmatpush1.msra.mxu0 %v2147
    %2149 = vmatprep.subr.mxu0 0.0
    %v2150 = vand.u32 %v346, 4294901760
    %v2151 = vsub.f32 %v346, %v2150
    %v2152 = vand.u32 %v2151, 4294901760
    %2153 = vmatpush1.msra.mxu0 %v2152
    %2154 = vmatprep.subr.mxu0 0.0
    %v2155 = vand.u32 %v345, 4294901760
    %v2156 = vsub.f32 %v345, %v2155
    %v2157 = vand.u32 %v2156, 4294901760
    %2158 = vmatpush1.msra.mxu0 %v2157
    %2159 = vmatprep.subr.mxu0 0.0
    %v2160 = vand.u32 %v344, 4294901760
    %v2161 = vsub.f32 %v344, %v2160
    %v2162 = vand.u32 %v2161, 4294901760
    %2163 = vmatpush1.msra.mxu0 %v2162
    %2164 = vmatprep.subr.mxu0 0.0
    %v2165 = vand.u32 %v343, 4294901760
    %v2166 = vsub.f32 %v343, %v2165
    %v2167 = vand.u32 %v2166, 4294901760
    %2168 = vmatpush1.msra.mxu0 %v2167
    %2169 = vmatprep.subr.mxu0 0.0
    %v2170 = vand.u32 %v342, 4294901760
    %v2171 = vsub.f32 %v342, %v2170
    %v2172 = vand.u32 %v2171, 4294901760
    %2173 = vmatpush1.msra.mxu0 %v2172
    %2174 = vmatprep.subr.mxu0 0.0
    %v2175 = vand.u32 %v341, 4294901760
    %v2176 = vsub.f32 %v341, %v2175
    %v2177 = vand.u32 %v2176, 4294901760
    %2178 = vmatpush1.msra.mxu0 %v2177
    %2179 = vmatprep.subr.mxu0 0.0
    %v2180 = vand.u32 %v340, 4294901760
    %v2181 = vsub.f32 %v340, %v2180
    %v2182 = vand.u32 %v2181, 4294901760
    %2183 = vmatpush1.msra.mxu0 %v2182
    %2184 = vmatprep.subr.mxu0 0.0
    %v2185 = vand.u32 %v339, 4294901760
    %v2186 = vsub.f32 %v339, %v2185
    %v2187 = vand.u32 %v2186, 4294901760
    %2188 = vmatpush1.msra.mxu0 %v2187
    %2189 = vmatprep.subr.mxu0 0.0
    %v2190 = vand.u32 %v338, 4294901760
    %v2191 = vsub.f32 %v338, %v2190
    %v2192 = vand.u32 %v2191, 4294901760
    %2193 = vmatpush1.msra.mxu0 %v2192
    %2194 = vmatprep.subr.mxu0 0.0
    %v2195 = vand.u32 %v337, 4294901760
    %v2196 = vsub.f32 %v337, %v2195
    %v2197 = vand.u32 %v2196, 4294901760
    %2198 = vmatpush1.msra.mxu0 %v2197
    %2199 = vmatprep.subr.mxu0 0.0
    %v2200 = vand.u32 %v336, 4294901760
    %v2201 = vsub.f32 %v336, %v2200
    %v2202 = vand.u32 %v2201, 4294901760
    %2203 = vmatpush1.msra.mxu0 %v2202
    %2204 = vmatprep.subr.mxu0 0.0
    %2205 = vmatpush2.msra.mxu0 0.0
    %2206 = vmatprep.subr.mxu0 0.0
    %2207 = vmatpush2.msra.mxu0 0.0
    %2208 = vmatprep.subr.mxu0 0.0
    %2209 = vmatpush2.msra.mxu0 0.0
    %2210 = vmatprep.subr.mxu0 0.0
    %2211 = vmatpush2.msra.mxu0 0.0
    %2212 = vmatprep.subr.mxu0 0.0
    %2213 = vmatpush2.msra.mxu0 0.0
    %2214 = vmatprep.subr.mxu0 0.0
    %2215 = vmatpush2.msra.mxu0 0.0
    %2216 = vmatprep.subr.mxu0 0.0
    %2217 = vmatpush2.msra.mxu0 0.0
    %2218 = vmatprep.subr.mxu0 0.0
    %2219 = vmatpush2.msra.mxu0 0.0
    %2220 = vmatprep.subr.mxu0 0.0
    %2221 = vmatpush2.msra.mxu0 0.0
    %2222 = vmatprep.subr.mxu0 0.0
    %2223 = vmatpush2.msra.mxu0 0.0
    %2224 = vmatprep.subr.mxu0 0.0
    %2225 = vmatpush2.msra.mxu0 0.0
    %2226 = vmatprep.subr.mxu0 0.0
    %2227 = vmatpush2.msra.mxu0 0.0
    %2228 = vmatprep.subr.mxu0 0.0
    %2229 = vmatpush2.msra.mxu0 0.0
    %2230 = vmatprep.subr.mxu0 0.0
    %2231 = vmatpush2.msra.mxu0 0.0
    %2232 = vmatprep.subr.mxu0 0.0
    %2233 = vmatpush2.msra.mxu0 0.0
    %2234 = vmatprep.subr.mxu0 0.0
    %2235 = vmatpush2.msra.mxu0 0.0
    %2236 = vmatprep.mubr.f32.mxu0 0.0
    %v2237 = vand.u32 %v352, 4294901760
    %2238 = vmatmul.mubr.f32.gmra.mxu0 %v2237
    %v2239 = vpop.f32.mrf.mxu0
    %v2240 = vadd.f32 %v1841, %v2239
    %v2241 = vpop.f32.mrf.mxu0
    %2242 = vmatprep.mubr.f32.mxu0 0.0
    %v2243 = vand.u32 %v353, 4294901760
    %2244 = vmatmul.mubr.f32.gmra.mxu0 %v2243
    %v2245 = vpop.f32.mrf.mxu0
    %v2246 = vadd.f32 %v1849, %v2245
    %v2247 = vpop.f32.mrf.mxu0
    %2248 = vmatprep.mubr.f32.mxu0 0.0
    %v2249 = vand.u32 %v354, 4294901760
    %2250 = vmatmul.mubr.f32.gmra.mxu0 %v2249
    %v2251 = vpop.f32.mrf.mxu0
    %v2252 = vadd.f32 %v1857, %v2251
    %v2253 = vpop.f32.mrf.mxu0
    %2254 = vmatprep.mubr.f32.mxu0 0.0
    %v2255 = vand.u32 %v355, 4294901760
    %2256 = vmatmul.mubr.f32.gmra.mxu0 %v2255
    %v2257 = vpop.f32.mrf.mxu0
    %v2258 = vadd.f32 %v1865, %v2257
    %v2259 = vpop.f32.mrf.mxu0
    %2260 = vmatprep.mubr.f32.mxu0 0.0
    %v2261 = vand.u32 %v356, 4294901760
    %2262 = vmatmul.mubr.f32.gmra.mxu0 %v2261
    %v2263 = vpop.f32.mrf.mxu0
    %v2264 = vadd.f32 %v1873, %v2263
    %v2265 = vpop.f32.mrf.mxu0
    %2266 = vmatprep.mubr.f32.mxu0 0.0
    %v2267 = vand.u32 %v357, 4294901760
    %2268 = vmatmul.mubr.f32.gmra.mxu0 %v2267
    %v2269 = vpop.f32.mrf.mxu0
    %v2270 = vadd.f32 %v1881, %v2269
    %v2271 = vpop.f32.mrf.mxu0
    %2272 = vmatprep.mubr.f32.mxu0 0.0
    %v2273 = vand.u32 %v358, 4294901760
    %2274 = vmatmul.mubr.f32.gmra.mxu0 %v2273
    %v2275 = vpop.f32.mrf.mxu0
    %v2276 = vadd.f32 %v1889, %v2275
    %v2277 = vpop.f32.mrf.mxu0
    %2278 = vmatprep.mubr.f32.mxu0 0.0
    %v2279 = vand.u32 %v359, 4294901760
    %2280 = vmatmul.mubr.f32.gmra.mxu0 %v2279
    %v2281 = vpop.f32.mrf.mxu0
    %v2282 = vadd.f32 %v1897, %v2281
    %v2283 = vpop.f32.mrf.mxu0
    %2284 = vmatprep.mubr.f32.mxu0 0.0
    %v2285 = vand.u32 %v360, 4294901760
    %2286 = vmatmul.mubr.f32.gmra.mxu0 %v2285
    %v2287 = vpop.f32.mrf.mxu0
    %v2288 = vadd.f32 %v1905, %v2287
    %v2289 = vpop.f32.mrf.mxu0
    %2290 = vmatprep.mubr.f32.mxu0 0.0
    %v2291 = vand.u32 %v361, 4294901760
    %2292 = vmatmul.mubr.f32.gmra.mxu0 %v2291
    %v2293 = vpop.f32.mrf.mxu0
    %v2294 = vadd.f32 %v1913, %v2293
    %v2295 = vpop.f32.mrf.mxu0
    %2296 = vmatprep.mubr.f32.mxu0 0.0
    %v2297 = vand.u32 %v362, 4294901760
    %2298 = vmatmul.mubr.f32.gmra.mxu0 %v2297
    %v2299 = vpop.f32.mrf.mxu0
    %v2300 = vadd.f32 %v1921, %v2299
    %v2301 = vpop.f32.mrf.mxu0
    %2302 = vmatprep.mubr.f32.mxu0 0.0
    %v2303 = vand.u32 %v363, 4294901760
    %2304 = vmatmul.mubr.f32.gmra.mxu0 %v2303
    %v2305 = vpop.f32.mrf.mxu0
    %v2306 = vadd.f32 %v1929, %v2305
    %v2307 = vpop.f32.mrf.mxu0
    %2308 = vmatprep.mubr.f32.mxu0 0.0
    %v2309 = vand.u32 %v364, 4294901760
    %2310 = vmatmul.mubr.f32.gmra.mxu0 %v2309
    %v2311 = vpop.f32.mrf.mxu0
    %v2312 = vadd.f32 %v1937, %v2311
    %v2313 = vpop.f32.mrf.mxu0
    %2314 = vmatprep.mubr.f32.mxu0 0.0
    %v2315 = vand.u32 %v365, 4294901760
    %2316 = vmatmul.mubr.f32.gmra.mxu0 %v2315
    %v2317 = vpop.f32.mrf.mxu0
    %v2318 = vadd.f32 %v1945, %v2317
    %v2319 = vpop.f32.mrf.mxu0
    %2320 = vmatprep.mubr.f32.mxu0 0.0
    %v2321 = vand.u32 %v366, 4294901760
    %2322 = vmatmul.mubr.f32.gmra.mxu0 %v2321
    %v2323 = vpop.f32.mrf.mxu0
    %v2324 = vadd.f32 %v1953, %v2323
    %v2325 = vpop.f32.mrf.mxu0
    %2326 = vmatprep.mubr.f32.mxu0 0.0
    %v2327 = vand.u32 %v367, 4294901760
    %2328 = vmatmul.mubr.f32.gmra.mxu0 %v2327
    %v2329 = vpop.f32.mrf.mxu0
    %v2330 = vadd.f32 %v1961, %v2329
    %v2331 = vpop.f32.mrf.mxu0
    %2332 = vmatprep.mubr.f32.mxu0 0.0
    %v2333 = vand.u32 %v368, 4294901760
    %2334 = vmatmul.mubr.f32.gmra.mxu0 %v2333
    %v2335 = vpop.f32.mrf.mxu0
    %v2336 = vadd.f32 %v1969, %v2335
    %v2337 = vpop.f32.mrf.mxu0
    %2338 = vmatprep.mubr.f32.mxu0 0.0
    %v2339 = vand.u32 %v369, 4294901760
    %2340 = vmatmul.mubr.f32.gmra.mxu0 %v2339
    %v2341 = vpop.f32.mrf.mxu0
    %v2342 = vadd.f32 %v1977, %v2341
    %v2343 = vpop.f32.mrf.mxu0
    %2344 = vmatprep.mubr.f32.mxu0 0.0
    %v2345 = vand.u32 %v370, 4294901760
    %2346 = vmatmul.mubr.f32.gmra.mxu0 %v2345
    %v2347 = vpop.f32.mrf.mxu0
    %v2348 = vadd.f32 %v1985, %v2347
    %v2349 = vpop.f32.mrf.mxu0
    %2350 = vmatprep.mubr.f32.mxu0 0.0
    %v2351 = vand.u32 %v371, 4294901760
    %2352 = vmatmul.mubr.f32.gmra.mxu0 %v2351
    %v2353 = vpop.f32.mrf.mxu0
    %v2354 = vadd.f32 %v1993, %v2353
    %v2355 = vpop.f32.mrf.mxu0
    %2356 = vmatprep.mubr.f32.mxu0 0.0
    %v2357 = vand.u32 %v372, 4294901760
    %2358 = vmatmul.mubr.f32.gmra.mxu0 %v2357
    %v2359 = vpop.f32.mrf.mxu0
    %v2360 = vadd.f32 %v2001, %v2359
    %v2361 = vpop.f32.mrf.mxu0
    %2362 = vmatprep.mubr.f32.mxu0 0.0
    %v2363 = vand.u32 %v373, 4294901760
    %2364 = vmatmul.mubr.f32.gmra.mxu0 %v2363
    %v2365 = vpop.f32.mrf.mxu0
    %v2366 = vadd.f32 %v2009, %v2365
    %v2367 = vpop.f32.mrf.mxu0
    %2368 = vmatprep.mubr.f32.mxu0 0.0
    %v2369 = vand.u32 %v374, 4294901760
    %2370 = vmatmul.mubr.f32.gmra.mxu0 %v2369
    %v2371 = vpop.f32.mrf.mxu0
    %v2372 = vadd.f32 %v2017, %v2371
    %v2373 = vpop.f32.mrf.mxu0
    %2374 = vmatprep.mubr.f32.mxu0 0.0
    %v2375 = vand.u32 %v375, 4294901760
    %2376 = vmatmul.mubr.f32.gmra.mxu0 %v2375
    %v2377 = vpop.f32.mrf.mxu0
    %v2378 = vadd.f32 %v2025, %v2377
    %v2379 = vpop.f32.mrf.mxu0
    %2380 = vmatprep.mubr.f32.mxu0 0.0
    %v2381 = vand.u32 %v376, 4294901760
    %2382 = vmatmul.mubr.f32.gmra.mxu0 %v2381
    %v2383 = vpop.f32.mrf.mxu0
    %v2384 = vadd.f32 %v2033, %v2383
    %v2385 = vpop.f32.mrf.mxu0
    %2386 = vmatprep.mubr.f32.mxu0 0.0
    %v2387 = vand.u32 %v377, 4294901760
    %2388 = vmatmul.mubr.f32.gmra.mxu0 %v2387
    %v2389 = vpop.f32.mrf.mxu0
    %v2390 = vadd.f32 %v2041, %v2389
    %v2391 = vpop.f32.mrf.mxu0
    %2392 = vmatprep.mubr.f32.mxu0 0.0
    %v2393 = vand.u32 %v378, 4294901760
    %2394 = vmatmul.mubr.f32.gmra.mxu0 %v2393
    %v2395 = vpop.f32.mrf.mxu0
    %v2396 = vadd.f32 %v2049, %v2395
    %v2397 = vpop.f32.mrf.mxu0
    %2398 = vmatprep.mubr.f32.mxu0 0.0
    %v2399 = vand.u32 %v379, 4294901760
    %2400 = vmatmul.mubr.f32.gmra.mxu0 %v2399
    %v2401 = vpop.f32.mrf.mxu0
    %v2402 = vadd.f32 %v2057, %v2401
    %v2403 = vpop.f32.mrf.mxu0
    %2404 = vmatprep.mubr.f32.mxu0 0.0
    %v2405 = vand.u32 %v380, 4294901760
    %2406 = vmatmul.mubr.f32.gmra.mxu0 %v2405
    %v2407 = vpop.f32.mrf.mxu0
    %v2408 = vadd.f32 %v2065, %v2407
    %v2409 = vpop.f32.mrf.mxu0
    %2410 = vmatprep.mubr.f32.mxu0 0.0
    %v2411 = vand.u32 %v381, 4294901760
    %2412 = vmatmul.mubr.f32.gmra.mxu0 %v2411
    %v2413 = vpop.f32.mrf.mxu0
    %v2414 = vadd.f32 %v2073, %v2413
    %v2415 = vpop.f32.mrf.mxu0
    %2416 = vmatprep.mubr.f32.mxu0 0.0
    %v2417 = vand.u32 %v382, 4294901760
    %2418 = vmatmul.mubr.f32.gmra.mxu0 %v2417
    %v2419 = vpop.f32.mrf.mxu0
    %v2420 = vadd.f32 %v2081, %v2419
    %v2421 = vpop.f32.mrf.mxu0
    %2422 = vmatprep.mubr.f32.mxu0 0.0
    %v2423 = vand.u32 %v383, 4294901760
    %2424 = vmatmul.mubr.f32.gmra.mxu0 %v2423
    %v2425 = vpop.f32.mrf.mxu0
    %v2426 = vadd.f32 %v2089, %v2425
    %v2427 = vpop.f32.mrf.mxu0
    %2428 = vmatprep.mubr.f32.mxu0 0.0
    %v2429 = vand.u32 %v384, 4294901760
    %2430 = vmatmul.mubr.f32.gmra.mxu0 %v2429
    %v2431 = vpop.f32.mrf.mxu0
    %v2432 = vadd.f32 %v2097, %v2431
    %v2433 = vpop.f32.mrf.mxu0
    %2434 = vmatprep.mubr.f32.mxu0 0.0
    %v2435 = vand.u32 %v385, 4294901760
    %2436 = vmatmul.mubr.f32.gmra.mxu0 %v2435
    %v2437 = vpop.f32.mrf.mxu0
    %v2438 = vadd.f32 %v2105, %v2437
    %v2439 = vpop.f32.mrf.mxu0
    %2440 = vmatprep.mubr.f32.mxu0 0.0
    %v2441 = vand.u32 %v386, 4294901760
    %2442 = vmatmul.mubr.f32.gmra.mxu0 %v2441
    %v2443 = vpop.f32.mrf.mxu0
    %v2444 = vadd.f32 %v2113, %v2443
    %v2445 = vpop.f32.mrf.mxu0
    %2446 = vmatprep.mubr.f32.mxu0 0.0
    %v2447 = vand.u32 %v387, 4294901760
    %2448 = vmatmul.mubr.f32.gmra.mxu0 %v2447
    %v2449 = vpop.f32.mrf.mxu0
    %v2450 = vadd.f32 %v2121, %v2449
    %v2451 = vpop.f32.mrf.mxu0
    %2452 = vdwg.mxu0
    %2453 = vmatprep.subr.mxu0 0.0
    %v2454 = vand.u32 %v351, 4294901760
    %2455 = vmatpush1.msra.mxu0 %v2454
    %2456 = vmatprep.subr.mxu0 0.0
    %v2457 = vand.u32 %v350, 4294901760
    %2458 = vmatpush1.msra.mxu0 %v2457
    %2459 = vmatprep.subr.mxu0 0.0
    %v2460 = vand.u32 %v349, 4294901760
    %2461 = vmatpush1.msra.mxu0 %v2460
    %2462 = vmatprep.subr.mxu0 0.0
    %v2463 = vand.u32 %v348, 4294901760
    %2464 = vmatpush1.msra.mxu0 %v2463
    %2465 = vmatprep.subr.mxu0 0.0
    %v2466 = vand.u32 %v347, 4294901760
    %2467 = vmatpush1.msra.mxu0 %v2466
    %2468 = vmatprep.subr.mxu0 0.0
    %v2469 = vand.u32 %v346, 4294901760
    %2470 = vmatpush1.msra.mxu0 %v2469
    %2471 = vmatprep.subr.mxu0 0.0
    %v2472 = vand.u32 %v345, 4294901760
    %2473 = vmatpush1.msra.mxu0 %v2472
    %2474 = vmatprep.subr.mxu0 0.0
    %v2475 = vand.u32 %v344, 4294901760
    %2476 = vmatpush1.msra.mxu0 %v2475
    %2477 = vmatprep.subr.mxu0 0.0
    %v2478 = vand.u32 %v343, 4294901760
    %2479 = vmatpush1.msra.mxu0 %v2478
    %2480 = vmatprep.subr.mxu0 0.0
    %v2481 = vand.u32 %v342, 4294901760
    %2482 = vmatpush1.msra.mxu0 %v2481
    %2483 = vmatprep.subr.mxu0 0.0
    %v2484 = vand.u32 %v341, 4294901760
    %2485 = vmatpush1.msra.mxu0 %v2484
    %2486 = vmatprep.subr.mxu0 0.0
    %v2487 = vand.u32 %v340, 4294901760
    %2488 = vmatpush1.msra.mxu0 %v2487
    %2489 = vmatprep.subr.mxu0 0.0
    %v2490 = vand.u32 %v339, 4294901760
    %2491 = vmatpush1.msra.mxu0 %v2490
    %2492 = vmatprep.subr.mxu0 0.0
    %v2493 = vand.u32 %v338, 4294901760
    %2494 = vmatpush1.msra.mxu0 %v2493
    %2495 = vmatprep.subr.mxu0 0.0
    %v2496 = vand.u32 %v337, 4294901760
    %2497 = vmatpush1.msra.mxu0 %v2496
    %2498 = vmatprep.subr.mxu0 0.0
    %v2499 = vand.u32 %v336, 4294901760
    %2500 = vmatpush1.msra.mxu0 %v2499
    %2501 = vmatprep.subr.mxu0 0.0
    %2502 = vmatpush2.msra.mxu0 0.0
    %2503 = vmatprep.subr.mxu0 0.0
    %2504 = vmatpush2.msra.mxu0 0.0
    %2505 = vmatprep.subr.mxu0 0.0
    %2506 = vmatpush2.msra.mxu0 0.0
    %2507 = vmatprep.subr.mxu0 0.0
    %2508 = vmatpush2.msra.mxu0 0.0
    %2509 = vmatprep.subr.mxu0 0.0
    %2510 = vmatpush2.msra.mxu0 0.0
    %2511 = vmatprep.subr.mxu0 0.0
    %2512 = vmatpush2.msra.mxu0 0.0
    %2513 = vmatprep.subr.mxu0 0.0
    %2514 = vmatpush2.msra.mxu0 0.0
    %2515 = vmatprep.subr.mxu0 0.0
    %2516 = vmatpush2.msra.mxu0 0.0
    %2517 = vmatprep.subr.mxu0 0.0
    %2518 = vmatpush2.msra.mxu0 0.0
    %2519 = vmatprep.subr.mxu0 0.0
    %2520 = vmatpush2.msra.mxu0 0.0
    %2521 = vmatprep.subr.mxu0 0.0
    %2522 = vmatpush2.msra.mxu0 0.0
    %2523 = vmatprep.subr.mxu0 0.0
    %2524 = vmatpush2.msra.mxu0 0.0
    %2525 = vmatprep.subr.mxu0 0.0
    %2526 = vmatpush2.msra.mxu0 0.0
    %2527 = vmatprep.subr.mxu0 0.0
    %2528 = vmatpush2.msra.mxu0 0.0
    %2529 = vmatprep.subr.mxu0 0.0
    %2530 = vmatpush2.msra.mxu0 0.0
    %2531 = vmatprep.subr.mxu0 0.0
    %2532 = vmatpush2.msra.mxu0 0.0
    %2533 = vmatprep.mubr.f32.mxu0 0.0
    %v2534 = vand.u32 %v352, 4294901760
    %2535 = vmatmul.mubr.f32.gmra.mxu0 %v2534
    %v2536 = vpop.f32.mrf.mxu0
    %v2537 = vadd.f32 %v2240, %v2536
    %v2538 = vpop.f32.mrf.mxu0
    %2539 = vmatprep.mubr.f32.mxu0 0.0
    %v2540 = vand.u32 %v353, 4294901760
    %2541 = vmatmul.mubr.f32.gmra.mxu0 %v2540
    %v2542 = vpop.f32.mrf.mxu0
    %v2543 = vadd.f32 %v2246, %v2542
    %v2544 = vpop.f32.mrf.mxu0
    %2545 = vmatprep.mubr.f32.mxu0 0.0
    %v2546 = vand.u32 %v354, 4294901760
    %2547 = vmatmul.mubr.f32.gmra.mxu0 %v2546
    %v2548 = vpop.f32.mrf.mxu0
    %v2549 = vadd.f32 %v2252, %v2548
    %v2550 = vpop.f32.mrf.mxu0
    %2551 = vmatprep.mubr.f32.mxu0 0.0
    %v2552 = vand.u32 %v355, 4294901760
    %2553 = vmatmul.mubr.f32.gmra.mxu0 %v2552
    %v2554 = vpop.f32.mrf.mxu0
    %v2555 = vadd.f32 %v2258, %v2554
    %v2556 = vpop.f32.mrf.mxu0
    %2557 = vmatprep.mubr.f32.mxu0 0.0
    %v2558 = vand.u32 %v356, 4294901760
    %2559 = vmatmul.mubr.f32.gmra.mxu0 %v2558
    %v2560 = vpop.f32.mrf.mxu0
    %v2561 = vadd.f32 %v2264, %v2560
    %v2562 = vpop.f32.mrf.mxu0
    %2563 = vmatprep.mubr.f32.mxu0 0.0
    %v2564 = vand.u32 %v357, 4294901760
    %2565 = vmatmul.mubr.f32.gmra.mxu0 %v2564
    %v2566 = vpop.f32.mrf.mxu0
    %v2567 = vadd.f32 %v2270, %v2566
    %v2568 = vpop.f32.mrf.mxu0
    %2569 = vmatprep.mubr.f32.mxu0 0.0
    %v2570 = vand.u32 %v358, 4294901760
    %2571 = vmatmul.mubr.f32.gmra.mxu0 %v2570
    %v2572 = vpop.f32.mrf.mxu0
    %v2573 = vadd.f32 %v2276, %v2572
    %v2574 = vpop.f32.mrf.mxu0
    %2575 = vmatprep.mubr.f32.mxu0 0.0
    %v2576 = vand.u32 %v359, 4294901760
    %2577 = vmatmul.mubr.f32.gmra.mxu0 %v2576
    %v2578 = vpop.f32.mrf.mxu0
    %v2579 = vadd.f32 %v2282, %v2578
    %v2580 = vpop.f32.mrf.mxu0
    %2581 = vmatprep.mubr.f32.mxu0 0.0
    %v2582 = vand.u32 %v360, 4294901760
    %2583 = vmatmul.mubr.f32.gmra.mxu0 %v2582
    %v2584 = vpop.f32.mrf.mxu0
    %v2585 = vadd.f32 %v2288, %v2584
    %v2586 = vpop.f32.mrf.mxu0
    %2587 = vmatprep.mubr.f32.mxu0 0.0
    %v2588 = vand.u32 %v361, 4294901760
    %2589 = vmatmul.mubr.f32.gmra.mxu0 %v2588
    %v2590 = vpop.f32.mrf.mxu0
    %v2591 = vadd.f32 %v2294, %v2590
    %v2592 = vpop.f32.mrf.mxu0
    %2593 = vmatprep.mubr.f32.mxu0 0.0
    %v2594 = vand.u32 %v362, 4294901760
    %2595 = vmatmul.mubr.f32.gmra.mxu0 %v2594
    %v2596 = vpop.f32.mrf.mxu0
    %v2597 = vadd.f32 %v2300, %v2596
    %v2598 = vpop.f32.mrf.mxu0
    %2599 = vmatprep.mubr.f32.mxu0 0.0
    %v2600 = vand.u32 %v363, 4294901760
    %2601 = vmatmul.mubr.f32.gmra.mxu0 %v2600
    %v2602 = vpop.f32.mrf.mxu0
    %v2603 = vadd.f32 %v2306, %v2602
    %v2604 = vpop.f32.mrf.mxu0
    %2605 = vmatprep.mubr.f32.mxu0 0.0
    %v2606 = vand.u32 %v364, 4294901760
    %2607 = vmatmul.mubr.f32.gmra.mxu0 %v2606
    %v2608 = vpop.f32.mrf.mxu0
    %v2609 = vadd.f32 %v2312, %v2608
    %v2610 = vpop.f32.mrf.mxu0
    %2611 = vmatprep.mubr.f32.mxu0 0.0
    %v2612 = vand.u32 %v365, 4294901760
    %2613 = vmatmul.mubr.f32.gmra.mxu0 %v2612
    %v2614 = vpop.f32.mrf.mxu0
    %v2615 = vadd.f32 %v2318, %v2614
    %v2616 = vpop.f32.mrf.mxu0
    %2617 = vmatprep.mubr.f32.mxu0 0.0
    %v2618 = vand.u32 %v366, 4294901760
    %2619 = vmatmul.mubr.f32.gmra.mxu0 %v2618
    %v2620 = vpop.f32.mrf.mxu0
    %v2621 = vadd.f32 %v2324, %v2620
    %v2622 = vpop.f32.mrf.mxu0
    %2623 = vmatprep.mubr.f32.mxu0 0.0
    %v2624 = vand.u32 %v367, 4294901760
    %2625 = vmatmul.mubr.f32.gmra.mxu0 %v2624
    %v2626 = vpop.f32.mrf.mxu0
    %v2627 = vadd.f32 %v2330, %v2626
    %v2628 = vpop.f32.mrf.mxu0
    %2629 = vmatprep.mubr.f32.mxu0 0.0
    %v2630 = vand.u32 %v368, 4294901760
    %2631 = vmatmul.mubr.f32.gmra.mxu0 %v2630
    %v2632 = vpop.f32.mrf.mxu0
    %v2633 = vadd.f32 %v2336, %v2632
    %v2634 = vpop.f32.mrf.mxu0
    %2635 = vmatprep.mubr.f32.mxu0 0.0
    %v2636 = vand.u32 %v369, 4294901760
    %2637 = vmatmul.mubr.f32.gmra.mxu0 %v2636
    %v2638 = vpop.f32.mrf.mxu0
    %v2639 = vadd.f32 %v2342, %v2638
    %v2640 = vpop.f32.mrf.mxu0
    %2641 = vmatprep.mubr.f32.mxu0 0.0
    %v2642 = vand.u32 %v370, 4294901760
    %2643 = vmatmul.mubr.f32.gmra.mxu0 %v2642
    %v2644 = vpop.f32.mrf.mxu0
    %v2645 = vadd.f32 %v2348, %v2644
    %v2646 = vpop.f32.mrf.mxu0
    %2647 = vmatprep.mubr.f32.mxu0 0.0
    %v2648 = vand.u32 %v371, 4294901760
    %2649 = vmatmul.mubr.f32.gmra.mxu0 %v2648
    %v2650 = vpop.f32.mrf.mxu0
    %v2651 = vadd.f32 %v2354, %v2650
    %v2652 = vpop.f32.mrf.mxu0
    %2653 = vmatprep.mubr.f32.mxu0 0.0
    %v2654 = vand.u32 %v372, 4294901760
    %2655 = vmatmul.mubr.f32.gmra.mxu0 %v2654
    %v2656 = vpop.f32.mrf.mxu0
    %v2657 = vadd.f32 %v2360, %v2656
    %v2658 = vpop.f32.mrf.mxu0
    %2659 = vmatprep.mubr.f32.mxu0 0.0
    %v2660 = vand.u32 %v373, 4294901760
    %2661 = vmatmul.mubr.f32.gmra.mxu0 %v2660
    %v2662 = vpop.f32.mrf.mxu0
    %v2663 = vadd.f32 %v2366, %v2662
    %v2664 = vpop.f32.mrf.mxu0
    %2665 = vmatprep.mubr.f32.mxu0 0.0
    %v2666 = vand.u32 %v374, 4294901760
    %2667 = vmatmul.mubr.f32.gmra.mxu0 %v2666
    %v2668 = vpop.f32.mrf.mxu0
    %v2669 = vadd.f32 %v2372, %v2668
    %v2670 = vpop.f32.mrf.mxu0
    %2671 = vmatprep.mubr.f32.mxu0 0.0
    %v2672 = vand.u32 %v375, 4294901760
    %2673 = vmatmul.mubr.f32.gmra.mxu0 %v2672
    %v2674 = vpop.f32.mrf.mxu0
    %v2675 = vadd.f32 %v2378, %v2674
    %v2676 = vpop.f32.mrf.mxu0
    %2677 = vmatprep.mubr.f32.mxu0 0.0
    %v2678 = vand.u32 %v376, 4294901760
    %2679 = vmatmul.mubr.f32.gmra.mxu0 %v2678
    %v2680 = vpop.f32.mrf.mxu0
    %v2681 = vadd.f32 %v2384, %v2680
    %v2682 = vpop.f32.mrf.mxu0
    %2683 = vmatprep.mubr.f32.mxu0 0.0
    %v2684 = vand.u32 %v377, 4294901760
    %2685 = vmatmul.mubr.f32.gmra.mxu0 %v2684
    %v2686 = vpop.f32.mrf.mxu0
    %v2687 = vadd.f32 %v2390, %v2686
    %v2688 = vpop.f32.mrf.mxu0
    %2689 = vmatprep.mubr.f32.mxu0 0.0
    %v2690 = vand.u32 %v378, 4294901760
    %2691 = vmatmul.mubr.f32.gmra.mxu0 %v2690
    %v2692 = vpop.f32.mrf.mxu0
    %v2693 = vadd.f32 %v2396, %v2692
    %v2694 = vpop.f32.mrf.mxu0
    %2695 = vmatprep.mubr.f32.mxu0 0.0
    %v2696 = vand.u32 %v379, 4294901760
    %2697 = vmatmul.mubr.f32.gmra.mxu0 %v2696
    %v2698 = vpop.f32.mrf.mxu0
    %v2699 = vadd.f32 %v2402, %v2698
    %v2700 = vpop.f32.mrf.mxu0
    %2701 = vmatprep.mubr.f32.mxu0 0.0
    %v2702 = vand.u32 %v380, 4294901760
    %2703 = vmatmul.mubr.f32.gmra.mxu0 %v2702
    %v2704 = vpop.f32.mrf.mxu0
    %v2705 = vadd.f32 %v2408, %v2704
    %v2706 = vpop.f32.mrf.mxu0
    %2707 = vmatprep.mubr.f32.mxu0 0.0
    %v2708 = vand.u32 %v381, 4294901760
    %2709 = vmatmul.mubr.f32.gmra.mxu0 %v2708
    %v2710 = vpop.f32.mrf.mxu0
    %v2711 = vadd.f32 %v2414, %v2710
    %v2712 = vpop.f32.mrf.mxu0
    %2713 = vmatprep.mubr.f32.mxu0 0.0
    %v2714 = vand.u32 %v382, 4294901760
    %2715 = vmatmul.mubr.f32.gmra.mxu0 %v2714
    %v2716 = vpop.f32.mrf.mxu0
    %v2717 = vadd.f32 %v2420, %v2716
    %v2718 = vpop.f32.mrf.mxu0
    %2719 = vmatprep.mubr.f32.mxu0 0.0
    %v2720 = vand.u32 %v383, 4294901760
    %2721 = vmatmul.mubr.f32.gmra.mxu0 %v2720
    %v2722 = vpop.f32.mrf.mxu0
    %v2723 = vadd.f32 %v2426, %v2722
    %v2724 = vpop.f32.mrf.mxu0
    %2725 = vmatprep.mubr.f32.mxu0 0.0
    %v2726 = vand.u32 %v384, 4294901760
    %2727 = vmatmul.mubr.f32.gmra.mxu0 %v2726
    %v2728 = vpop.f32.mrf.mxu0
    %v2729 = vadd.f32 %v2432, %v2728
    %v2730 = vpop.f32.mrf.mxu0
    %2731 = vmatprep.mubr.f32.mxu0 0.0
    %v2732 = vand.u32 %v385, 4294901760
    %2733 = vmatmul.mubr.f32.gmra.mxu0 %v2732
    %v2734 = vpop.f32.mrf.mxu0
    %v2735 = vadd.f32 %v2438, %v2734
    %v2736 = vpop.f32.mrf.mxu0
    %2737 = vmatprep.mubr.f32.mxu0 0.0
    %v2738 = vand.u32 %v386, 4294901760
    %2739 = vmatmul.mubr.f32.gmra.mxu0 %v2738
    %v2740 = vpop.f32.mrf.mxu0
    %v2741 = vadd.f32 %v2444, %v2740
    %v2742 = vpop.f32.mrf.mxu0
    %2743 = vmatprep.mubr.f32.mxu0 0.0
    %v2744 = vand.u32 %v387, 4294901760
    %2745 = vmatmul.mubr.f32.gmra.mxu0 %v2744
    %v2746 = vpop.f32.mrf.mxu0
    %v2747 = vadd.f32 %v2450, %v2746
    %v2748 = vpop.f32.mrf.mxu0
    %2749 = vdwg.mxu0
    %v2750 = vmul.f32 %v2537, 0.5
    %v2751 = vmul.f32 %v2543, 0.5
    %v2752 = vmul.f32 %v2549, 0.5
    %v2753 = vmul.f32 %v2555, 0.5
    %v2754 = vmul.f32 %v2561, 0.5
    %v2755 = vmul.f32 %v2567, 0.5
    %v2756 = vmul.f32 %v2573, 0.5
    %v2757 = vmul.f32 %v2579, 0.5
    %v2758 = vmul.f32 %v2585, 0.5
    %v2759 = vmul.f32 %v2591, 0.5
    %v2760 = vmul.f32 %v2597, 0.5
    %v2761 = vmul.f32 %v2603, 0.5
    %v2762 = vmul.f32 %v2609, 0.5
    %v2763 = vmul.f32 %v2615, 0.5
    %v2764 = vmul.f32 %v2621, 0.5
    %v2765 = vmul.f32 %v2627, 0.5
    %v2766 = vmul.f32 %v2633, 0.5
    %v2767 = vmul.f32 %v2639, 0.5
    %v2768 = vmul.f32 %v2645, 0.5
    %v2769 = vmul.f32 %v2651, 0.5
    %v2770 = vmul.f32 %v2657, 0.5
    %v2771 = vmul.f32 %v2663, 0.5
    %v2772 = vmul.f32 %v2669, 0.5
    %v2773 = vmul.f32 %v2675, 0.5
    %v2774 = vmul.f32 %v2681, 0.5
    %v2775 = vmul.f32 %v2687, 0.5
    %v2776 = vmul.f32 %v2693, 0.5
    %v2777 = vmul.f32 %v2699, 0.5
    %v2778 = vmul.f32 %v2705, 0.5
    %v2779 = vmul.f32 %v2711, 0.5
    %v2780 = vmul.f32 %v2717, 0.5
    %v2781 = vmul.f32 %v2723, 0.5
    %v2782 = vmul.f32 %v2729, 0.5
    %v2783 = vmul.f32 %v2735, 0.5
    %v2784 = vmul.f32 %v2741, 0.5
    %v2785 = vmul.f32 %v2747, 0.5
    %v2786 = vmul.f32 %v2537, 0.70710677
    %v2787 = vmul.f32 %v2543, 0.70710677
    %v2788 = vmul.f32 %v2549, 0.70710677
    %v2789 = vmul.f32 %v2555, 0.70710677
    %v2790 = vmul.f32 %v2561, 0.70710677
    %v2791 = vmul.f32 %v2567, 0.70710677
    %v2792 = vmul.f32 %v2573, 0.70710677
    %v2793 = vmul.f32 %v2579, 0.70710677
    %v2794 = vmul.f32 %v2585, 0.70710677
    %v2795 = vmul.f32 %v2591, 0.70710677
    %v2796 = vmul.f32 %v2597, 0.70710677
    %v2797 = vmul.f32 %v2603, 0.70710677
    %v2798 = vmul.f32 %v2609, 0.70710677
    %v2799 = vmul.f32 %v2615, 0.70710677
    %v2800 = vmul.f32 %v2621, 0.70710677
    %v2801 = vmul.f32 %v2627, 0.70710677
    %v2802 = vmul.f32 %v2633, 0.70710677
    %v2803 = vmul.f32 %v2639, 0.70710677
    %v2804 = vmul.f32 %v2645, 0.70710677
    %v2805 = vmul.f32 %v2651, 0.70710677
    %v2806 = vmul.f32 %v2657, 0.70710677
    %v2807 = vmul.f32 %v2663, 0.70710677
    %v2808 = vmul.f32 %v2669, 0.70710677
    %v2809 = vmul.f32 %v2675, 0.70710677
    %v2810 = vmul.f32 %v2681, 0.70710677
    %v2811 = vmul.f32 %v2687, 0.70710677
    %v2812 = vmul.f32 %v2693, 0.70710677
    %v2813 = vmul.f32 %v2699, 0.70710677
    %v2814 = vmul.f32 %v2705, 0.70710677
    %v2815 = vmul.f32 %v2711, 0.70710677
    %v2816 = vmul.f32 %v2717, 0.70710677
    %v2817 = vmul.f32 %v2723, 0.70710677
    %v2818 = vmul.f32 %v2729, 0.70710677
    %v2819 = vmul.f32 %v2735, 0.70710677
    %v2820 = vmul.f32 %v2741, 0.70710677
    %v2821 = vmul.f32 %v2747, 0.70710677
    %v2822 = verf.f32.pop %v2786
    %v2823 = verf.f32.pop %v2787
    %v2824 = verf.f32.pop %v2788
    %v2825 = verf.f32.pop %v2789
    %v2826 = verf.f32.pop %v2790
    %v2827 = verf.f32.pop %v2791
    %v2828 = verf.f32.pop %v2792
    %v2829 = verf.f32.pop %v2793
    %v2830 = verf.f32.pop %v2794
    %v2831 = verf.f32.pop %v2795
    %v2832 = verf.f32.pop %v2796
    %v2833 = verf.f32.pop %v2797
    %v2834 = verf.f32.pop %v2798
    %v2835 = verf.f32.pop %v2799
    %v2836 = verf.f32.pop %v2800
    %v2837 = verf.f32.pop %v2801
    %v2838 = verf.f32.pop %v2802
    %v2839 = verf.f32.pop %v2803
    %v2840 = verf.f32.pop %v2804
    %v2841 = verf.f32.pop %v2805
    %v2842 = verf.f32.pop %v2806
    %v2843 = verf.f32.pop %v2807
    %v2844 = verf.f32.pop %v2808
    %v2845 = verf.f32.pop %v2809
    %v2846 = verf.f32.pop %v2810
    %v2847 = verf.f32.pop %v2811
    %v2848 = verf.f32.pop %v2812
    %v2849 = verf.f32.pop %v2813
    %v2850 = verf.f32.pop %v2814
    %v2851 = verf.f32.pop %v2815
    %v2852 = verf.f32.pop %v2816
    %v2853 = verf.f32.pop %v2817
    %v2854 = verf.f32.pop %v2818
    %v2855 = verf.f32.pop %v2819
    %v2856 = verf.f32.pop %v2820
    %v2857 = verf.f32.pop %v2821
    %v2858 = vadd.f32 %v2822, 1.0
    %v2859 = vadd.f32 %v2823, 1.0
    %v2860 = vadd.f32 %v2824, 1.0
    %v2861 = vadd.f32 %v2825, 1.0
    %v2862 = vadd.f32 %v2826, 1.0
    %v2863 = vadd.f32 %v2827, 1.0
    %v2864 = vadd.f32 %v2828, 1.0
    %v2865 = vadd.f32 %v2829, 1.0
    %v2866 = vadd.f32 %v2830, 1.0
    %v2867 = vadd.f32 %v2831, 1.0
    %v2868 = vadd.f32 %v2832, 1.0
    %v2869 = vadd.f32 %v2833, 1.0
    %v2870 = vadd.f32 %v2834, 1.0
    %v2871 = vadd.f32 %v2835, 1.0
    %v2872 = vadd.f32 %v2836, 1.0
    %v2873 = vadd.f32 %v2837, 1.0
    %v2874 = vadd.f32 %v2838, 1.0
    %v2875 = vadd.f32 %v2839, 1.0
    %v2876 = vadd.f32 %v2840, 1.0
    %v2877 = vadd.f32 %v2841, 1.0
    %v2878 = vadd.f32 %v2842, 1.0
    %v2879 = vadd.f32 %v2843, 1.0
    %v2880 = vadd.f32 %v2844, 1.0
    %v2881 = vadd.f32 %v2845, 1.0
    %v2882 = vadd.f32 %v2846, 1.0
    %v2883 = vadd.f32 %v2847, 1.0
    %v2884 = vadd.f32 %v2848, 1.0
    %v2885 = vadd.f32 %v2849, 1.0
    %v2886 = vadd.f32 %v2850, 1.0
    %v2887 = vadd.f32 %v2851, 1.0
    %v2888 = vadd.f32 %v2852, 1.0
    %v2889 = vadd.f32 %v2853, 1.0
    %v2890 = vadd.f32 %v2854, 1.0
    %v2891 = vadd.f32 %v2855, 1.0
    %v2892 = vadd.f32 %v2856, 1.0
    %v2893 = vadd.f32 %v2857, 1.0
    %v2894 = vmul.f32 %v2750, %v2858
    %v2895 = vmul.f32 %v2751, %v2859
    %v2896 = vmul.f32 %v2752, %v2860
    %v2897 = vmul.f32 %v2753, %v2861
    %v2898 = vmul.f32 %v2754, %v2862
    %v2899 = vmul.f32 %v2755, %v2863
    %v2900 = vmul.f32 %v2756, %v2864
    %v2901 = vmul.f32 %v2757, %v2865
    %v2902 = vmul.f32 %v2758, %v2866
    %v2903 = vmul.f32 %v2759, %v2867
    %v2904 = vmul.f32 %v2760, %v2868
    %v2905 = vmul.f32 %v2761, %v2869
    %v2906 = vmul.f32 %v2762, %v2870
    %v2907 = vmul.f32 %v2763, %v2871
    %v2908 = vmul.f32 %v2764, %v2872
    %v2909 = vmul.f32 %v2765, %v2873
    %v2910 = vmul.f32 %v2766, %v2874
    %v2911 = vmul.f32 %v2767, %v2875
    %v2912 = vmul.f32 %v2768, %v2876
    %v2913 = vmul.f32 %v2769, %v2877
    %v2914 = vmul.f32 %v2770, %v2878
    %v2915 = vmul.f32 %v2771, %v2879
    %v2916 = vmul.f32 %v2772, %v2880
    %v2917 = vmul.f32 %v2773, %v2881
    %v2918 = vmul.f32 %v2774, %v2882
    %v2919 = vmul.f32 %v2775, %v2883
    %v2920 = vmul.f32 %v2776, %v2884
    %v2921 = vmul.f32 %v2777, %v2885
    %v2922 = vmul.f32 %v2778, %v2886
    %v2923 = vmul.f32 %v2779, %v2887
    %v2924 = vmul.f32 %v2780, %v2888
    %v2925 = vmul.f32 %v2781, %v2889
    %v2926 = vmul.f32 %v2782, %v2890
    %v2927 = vmul.f32 %v2783, %v2891
    %v2928 = vmul.f32 %v2784, %v2892
    %v2929 = vmul.f32 %v2785, %v2893
    %v2930 = vld [vmem:[%s4] sm:$0xff]
    %v2931 = vld [vmem:[%s4 + $0x8] sm:$0xff]
    %v2932 = vld [vmem:[%s4 + $0x10] sm:$0xff]
    %v2933 = vld [vmem:[%s4 + $0x18] sm:$0xff]
    %v2934 = vld [vmem:[%s4 + $0x20] sm:$0xff]
    %v2935 = vld [vmem:[%s4 + $0x28] sm:$0xff]
    %v2936 = vld [vmem:[%s4 + $0x30] sm:$0xff]
    %v2937 = vld [vmem:[%s4 + $0x38] sm:$0xff]
    %v2938 = vld [vmem:[%s4 + $0x40] sm:$0xff]
    %v2939 = vld [vmem:[%s4 + $0x48] sm:$0xff]
    %v2940 = vld [vmem:[%s4 + $0x50] sm:$0xff]
    %v2941 = vld [vmem:[%s4 + $0x58] sm:$0xff]
    %v2942 = vmul.f32 %v2894, %v2894
    %v2943 = vmul.f32 %v2895, %v2895
    %v2944 = vmul.f32 %v2896, %v2896
    %v2945 = vmul.f32 %v2897, %v2897
    %v2946 = vmul.f32 %v2898, %v2898
    %v2947 = vmul.f32 %v2899, %v2899
    %v2948 = vmul.f32 %v2900, %v2900
    %v2949 = vmul.f32 %v2901, %v2901
    %v2950 = vmul.f32 %v2902, %v2902
    %v2951 = vmul.f32 %v2903, %v2903
    %v2952 = vmul.f32 %v2904, %v2904
    %v2953 = vmul.f32 %v2905, %v2905
    %v2954 = vmul.f32 %v2906, %v2906
    %v2955 = vmul.f32 %v2907, %v2907
    %v2956 = vmul.f32 %v2908, %v2908
    %v2957 = vmul.f32 %v2909, %v2909
    %v2958 = vmul.f32 %v2910, %v2910
    %v2959 = vmul.f32 %v2911, %v2911
    %v2960 = vmul.f32 %v2912, %v2912
    %v2961 = vmul.f32 %v2913, %v2913
    %v2962 = vmul.f32 %v2914, %v2914
    %v2963 = vmul.f32 %v2915, %v2915
    %v2964 = vmul.f32 %v2916, %v2916
    %v2965 = vmul.f32 %v2917, %v2917
    %v2966 = vmul.f32 %v2918, %v2918
    %v2967 = vmul.f32 %v2919, %v2919
    %v2968 = vmul.f32 %v2920, %v2920
    %v2969 = vmul.f32 %v2921, %v2921
    %v2970 = vmul.f32 %v2922, %v2922
    %v2971 = vmul.f32 %v2923, %v2923
    %v2972 = vmul.f32 %v2924, %v2924
    %v2973 = vmul.f32 %v2925, %v2925
    %v2974 = vmul.f32 %v2926, %v2926
    %v2975 = vmul.f32 %v2927, %v2927
    %v2976 = vmul.f32 %v2928, %v2928
    %v2977 = vmul.f32 %v2929, %v2929
    %vm2978 = vcmask 261120
    %v2980 = vsel %vm2978, %v2932, 0
    %v2983 = vsel %vm2978, %v2935, 0
    %v2986 = vsel %vm2978, %v2938, 0
    %v2989 = vsel %vm2978, %v2941, 0
    %2991 = vmatprep.subr.mxu0 0.0
    %2992 = vmatpush1.msra.mxu0 %v2957
    %2993 = vmatprep.subr.mxu0 0.0
    %2994 = vmatpush1.msra.mxu0 %v2956
    %2995 = vmatprep.subr.mxu0 0.0
    %2996 = vmatpush1.msra.mxu0 %v2955
    %2997 = vmatprep.subr.mxu0 0.0
    %2998 = vmatpush1.msra.mxu0 %v2954
    %2999 = vmatprep.subr.mxu0 0.0
    %3000 = vmatpush1.msra.mxu0 %v2953
    %3001 = vmatprep.subr.mxu0 0.0
    %3002 = vmatpush1.msra.mxu0 %v2952
    %3003 = vmatprep.subr.mxu0 0.0
    %3004 = vmatpush1.msra.mxu0 %v2951
    %3005 = vmatprep.subr.mxu0 0.0
    %3006 = vmatpush1.msra.mxu0 %v2950
    %3007 = vmatprep.subr.mxu0 0.0
    %3008 = vmatpush1.msra.mxu0 %v2949
    %3009 = vmatprep.subr.mxu0 0.0
    %3010 = vmatpush1.msra.mxu0 %v2948
    %3011 = vmatprep.subr.mxu0 0.0
    %3012 = vmatpush1.msra.mxu0 %v2947
    %3013 = vmatprep.subr.mxu0 0.0
    %3014 = vmatpush1.msra.mxu0 %v2946
    %3015 = vmatprep.subr.mxu0 0.0
    %3016 = vmatpush1.msra.mxu0 %v2945
    %3017 = vmatprep.subr.mxu0 0.0
    %3018 = vmatpush1.msra.mxu0 %v2944
    %3019 = vmatprep.subr.mxu0 0.0
    %3020 = vmatpush1.msra.mxu0 %v2943
    %3021 = vmatprep.subr.mxu0 0.0
    %3022 = vmatpush1.msra.mxu0 %v2942
    %3023 = vmatprep.subr.mxu0 0.0
    %3024 = vmatpush2.msra.mxu0 %v2973
    %3025 = vmatprep.subr.mxu0 0.0
    %3026 = vmatpush2.msra.mxu0 %v2972
    %3027 = vmatprep.subr.mxu0 0.0
    %3028 = vmatpush2.msra.mxu0 %v2971
    %3029 = vmatprep.subr.mxu0 0.0
    %3030 = vmatpush2.msra.mxu0 %v2970
    %3031 = vmatprep.subr.mxu0 0.0
    %3032 = vmatpush2.msra.mxu0 %v2969
    %3033 = vmatprep.subr.mxu0 0.0
    %3034 = vmatpush2.msra.mxu0 %v2968
    %3035 = vmatprep.subr.mxu0 0.0
    %3036 = vmatpush2.msra.mxu0 %v2967
    %3037 = vmatprep.subr.mxu0 0.0
    %3038 = vmatpush2.msra.mxu0 %v2966
    %3039 = vmatprep.subr.mxu0 0.0
    %3040 = vmatpush2.msra.mxu0 %v2965
    %3041 = vmatprep.subr.mxu0 0.0
    %3042 = vmatpush2.msra.mxu0 %v2964
    %3043 = vmatprep.subr.mxu0 0.0
    %3044 = vmatpush2.msra.mxu0 %v2963
    %3045 = vmatprep.subr.mxu0 0.0
    %3046 = vmatpush2.msra.mxu0 %v2962
    %3047 = vmatprep.subr.mxu0 0.0
    %3048 = vmatpush2.msra.mxu0 %v2961
    %3049 = vmatprep.subr.mxu0 0.0
    %3050 = vmatpush2.msra.mxu0 %v2960
    %3051 = vmatprep.subr.mxu0 0.0
    %3052 = vmatpush2.msra.mxu0 %v2959
    %3053 = vmatprep.subr.mxu0 0.0
    %3054 = vmatpush2.msra.mxu0 %v2958
    %3055 = vmatprep.mubr.f32.mxu0 %v2931
    %3056 = vmatmul.mubr.f32.gmra.mxu0 %v2930
    %v3057 = vpop.f32.mrf.mxu0
    %v3058 = vadd.f32 0.0, %v3057
    %v3059 = vpop.f32.mrf.mxu0
    %3060 = vmatprep.mubr.f32.mxu0 %v2934
    %3061 = vmatmul.mubr.f32.gmra.mxu0 %v2933
    %v3062 = vpop.f32.mrf.mxu0
    %v3063 = vadd.f32 0.0, %v3062
    %v3064 = vpop.f32.mrf.mxu0
    %3065 = vmatprep.mubr.f32.mxu0 %v2937
    %3066 = vmatmul.mubr.f32.gmra.mxu0 %v2936
    %v3067 = vpop.f32.mrf.mxu0
    %v3068 = vadd.f32 0.0, %v3067
    %v3069 = vpop.f32.mrf.mxu0
    %3070 = vmatprep.mubr.f32.mxu0 %v2940
    %3071 = vmatmul.mubr.f32.gmra.mxu0 %v2939
    %v3072 = vpop.f32.mrf.mxu0
    %v3073 = vadd.f32 0.0, %v3072
    %v3074 = vpop.f32.mrf.mxu0
    %3075 = vdwg.mxu0
    %3076 = vmatprep.subr.mxu0 0.0
    %3077 = vmatpush1.msra.mxu0 0.0
    %3078 = vmatprep.subr.mxu0 0.0
    %3079 = vmatpush1.msra.mxu0 0.0
    %3080 = vmatprep.subr.mxu0 0.0
    %3081 = vmatpush1.msra.mxu0 0.0
    %3082 = vmatprep.subr.mxu0 0.0
    %3083 = vmatpush1.msra.mxu0 0.0
    %3084 = vmatprep.subr.mxu0 0.0
    %3085 = vmatpush1.msra.mxu0 0.0
    %3086 = vmatprep.subr.mxu0 0.0
    %3087 = vmatpush1.msra.mxu0 0.0
    %3088 = vmatprep.subr.mxu0 0.0
    %3089 = vmatpush1.msra.mxu0 0.0
    %3090 = vmatprep.subr.mxu0 0.0
    %3091 = vmatpush1.msra.mxu0 0.0
    %3092 = vmatprep.subr.mxu0 0.0
    %3093 = vmatpush1.msra.mxu0 0.0
    %3094 = vmatprep.subr.mxu0 0.0
    %3095 = vmatpush1.msra.mxu0 0.0
    %3096 = vmatprep.subr.mxu0 0.0
    %3097 = vmatpush1.msra.mxu0 0.0
    %3098 = vmatprep.subr.mxu0 0.0
    %3099 = vmatpush1.msra.mxu0 0.0
    %3100 = vmatprep.subr.mxu0 0.0
    %3101 = vmatpush1.msra.mxu0 %v2977
    %3102 = vmatprep.subr.mxu0 0.0
    %3103 = vmatpush1.msra.mxu0 %v2976
    %3104 = vmatprep.subr.mxu0 0.0
    %3105 = vmatpush1.msra.mxu0 %v2975
    %3106 = vmatprep.subr.mxu0 0.0
    %3107 = vmatpush1.msra.mxu0 %v2974
    %3108 = vmatprep.subr.mxu0 0.0
    %3109 = vmatpush2.msra.mxu0 0.0
    %3110 = vmatprep.subr.mxu0 0.0
    %3111 = vmatpush2.msra.mxu0 0.0
    %3112 = vmatprep.subr.mxu0 0.0
    %3113 = vmatpush2.msra.mxu0 0.0
    %3114 = vmatprep.subr.mxu0 0.0
    %3115 = vmatpush2.msra.mxu0 0.0
    %3116 = vmatprep.subr.mxu0 0.0
    %3117 = vmatpush2.msra.mxu0 0.0
    %3118 = vmatprep.subr.mxu0 0.0
    %3119 = vmatpush2.msra.mxu0 0.0
    %3120 = vmatprep.subr.mxu0 0.0
    %3121 = vmatpush2.msra.mxu0 0.0
    %3122 = vmatprep.subr.mxu0 0.0
    %3123 = vmatpush2.msra.mxu0 0.0
    %3124 = vmatprep.subr.mxu0 0.0
    %3125 = vmatpush2.msra.mxu0 0.0
    %3126 = vmatprep.subr.mxu0 0.0
    %3127 = vmatpush2.msra.mxu0 0.0
    %3128 = vmatprep.subr.mxu0 0.0
    %3129 = vmatpush2.msra.mxu0 0.0
    %3130 = vmatprep.subr.mxu0 0.0
    %3131 = vmatpush2.msra.mxu0 0.0
    %3132 = vmatprep.subr.mxu0 0.0
    %3133 = vmatpush2.msra.mxu0 0.0
    %3134 = vmatprep.subr.mxu0 0.0
    %3135 = vmatpush2.msra.mxu0 0.0
    %3136 = vmatprep.subr.mxu0 0.0
    %3137 = vmatpush2.msra.mxu0 0.0
    %3138 = vmatprep.subr.mxu0 0.0
    %3139 = vmatpush2.msra.mxu0 0.0
    %3140 = vmatprep.mubr.f32.mxu0 0.0
    %3141 = vmatmul.mubr.f32.gmra.mxu0 %v2980
    %v3142 = vpop.f32.mrf.mxu0
    %v3143 = vadd.f32 %v3058, %v3142
    %v3144 = vpop.f32.mrf.mxu0
    %3145 = vmatprep.mubr.f32.mxu0 0.0
    %3146 = vmatmul.mubr.f32.gmra.mxu0 %v2983
    %v3147 = vpop.f32.mrf.mxu0
    %v3148 = vadd.f32 %v3063, %v3147
    %v3149 = vpop.f32.mrf.mxu0
    %3150 = vmatprep.mubr.f32.mxu0 0.0
    %3151 = vmatmul.mubr.f32.gmra.mxu0 %v2986
    %v3152 = vpop.f32.mrf.mxu0
    %v3153 = vadd.f32 %v3068, %v3152
    %v3154 = vpop.f32.mrf.mxu0
    %3155 = vmatprep.mubr.f32.mxu0 0.0
    %3156 = vmatmul.mubr.f32.gmra.mxu0 %v2989
    %v3157 = vpop.f32.mrf.mxu0
    %v3158 = vadd.f32 %v3073, %v3157
    %v3159 = vpop.f32.mrf.mxu0
    %3160 = vdwg.mxu0
    %v3161 = vrsqrt.pop %v3143
    %v3162 = vmul.f32 %v3143, %v3161
    %vm3163 = vcmp.eq.f32.partialorder %v3143, inf
    %v3164 = vsel %vm3163, %v3143, %v3162
    %vm3165 = vcmp.eq.f32.partialorder %v3143, 0.0
    %v3166 = vand.u32 %v3143, 2147483648
    %v3167 = vsel %vm3165, %v3166, %v3164
    %v3168 = vrsqrt.pop %v3148
    %v3169 = vmul.f32 %v3148, %v3168
    %vm3170 = vcmp.eq.f32.partialorder %v3148, inf
    %v3171 = vsel %vm3170, %v3148, %v3169
    %vm3172 = vcmp.eq.f32.partialorder %v3148, 0.0
    %v3173 = vand.u32 %v3148, 2147483648
    %v3174 = vsel %vm3172, %v3173, %v3171
    %v3175 = vrsqrt.pop %v3153
    %v3176 = vmul.f32 %v3153, %v3175
    %vm3177 = vcmp.eq.f32.partialorder %v3153, inf
    %v3178 = vsel %vm3177, %v3153, %v3176
    %vm3179 = vcmp.eq.f32.partialorder %v3153, 0.0
    %v3180 = vand.u32 %v3153, 2147483648
    %v3181 = vsel %vm3179, %v3180, %v3178
    %v3182 = vrsqrt.pop %v3158
    %v3183 = vmul.f32 %v3158, %v3182
    %vm3184 = vcmp.eq.f32.partialorder %v3158, inf
    %v3185 = vsel %vm3184, %v3158, %v3183
    %vm3186 = vcmp.eq.f32.partialorder %v3158, 0.0
    %v3187 = vand.u32 %v3158, 2147483648
    %v3188 = vsel %vm3186, %v3187, %v3185
    %v3189 = vadd.f32 %v3167, 1e-06
    %v3190 = vadd.f32 %v3174, 1e-06
    %v3191 = vadd.f32 %v3181, 1e-06
    %v3192 = vadd.f32 %v3188, 1e-06
    %v3193 = vrcp.pop %v3189
    %v3194 = vrcp.pop %v3190
    %v3195 = vrcp.pop %v3191
    %v3196 = vrcp.pop %v3192
    %v3197 = vmul.f32 %v3167, %v3193
    %v3198 = vmul.f32 %v3174, %v3194
    %v3199 = vmul.f32 %v3181, %v3195
    %v3200 = vmul.f32 %v3188, %v3196
    %v3201 = vld [vmem:[%s5] sm:$0xff]
    %v3202 = vld [vmem:[%s5 + $0x8] sm:$0xff]
    %v3203 = vld [vmem:[%s5 + $0x10] sm:$0xff]
    %v3204 = vld [vmem:[%s5 + $0x18] sm:$0xff]
    %v3205 = vld [vmem:[%s5 + $0x20] sm:$0xff]
    %v3206 = vld [vmem:[%s5 + $0x28] sm:$0xff]
    %v3207 = vld [vmem:[%s5 + $0x30] sm:$0xff]
    %v3208 = vld [vmem:[%s5 + $0x38] sm:$0xff]
    %v3209 = vld [vmem:[%s5 + $0x40] sm:$0xff]
    %v3210 = vld [vmem:[%s5 + $0x48] sm:$0xff]
    %v3211 = vld [vmem:[%s5 + $0x50] sm:$0xff]
    %v3212 = vld [vmem:[%s5 + $0x58] sm:$0xff]
    %v3213 = vld [vmem:[%s5 + $0x60] sm:$0xff]
    %v3214 = vld [vmem:[%s5 + $0x68] sm:$0xff]
    %v3215 = vld [vmem:[%s5 + $0x70] sm:$0xff]
    %v3216 = vld [vmem:[%s5 + $0x78] sm:$0xff]
    %v3217 = vld [vmem:[%s5 + $0x80] sm:$0xff]
    %v3218 = vld [vmem:[%s5 + $0x88] sm:$0xff]
    %v3219 = vld [vmem:[%s5 + $0x90] sm:$0xff]
    %v3220 = vld [vmem:[%s5 + $0x98] sm:$0xff]
    %v3221 = vld [vmem:[%s5 + $0xa0] sm:$0xff]
    %v3222 = vld [vmem:[%s5 + $0xa8] sm:$0xff]
    %v3223 = vld [vmem:[%s5 + $0xb0] sm:$0xff]
    %v3224 = vld [vmem:[%s5 + $0xb8] sm:$0xff]
    %v3225 = vld [vmem:[%s5 + $0xc0] sm:$0xff]
    %v3226 = vld [vmem:[%s5 + $0xc8] sm:$0xff]
    %v3227 = vld [vmem:[%s5 + $0xd0] sm:$0xff]
    %v3228 = vld [vmem:[%s5 + $0xd8] sm:$0xff]
    %v3229 = vld [vmem:[%s5 + $0xe0] sm:$0xff]
    %v3230 = vld [vmem:[%s5 + $0xe8] sm:$0xff]
    %v3231 = vld [vmem:[%s5 + $0xf0] sm:$0xff]
    %v3232 = vld [vmem:[%s5 + $0xf8] sm:$0xff]
    %v3233 = vld [vmem:[%s5 + $0x100] sm:$0xff]
    %v3234 = vld [vmem:[%s5 + $0x108] sm:$0xff]
    %v3235 = vld [vmem:[%s5 + $0x110] sm:$0xff]
    %v3236 = vld [vmem:[%s5 + $0x118] sm:$0xff]
    %v3238 = vsel %vm2978, %v3201, 0
    %v3241 = vsel %vm2978, %v3202, 0
    %v3244 = vsel %vm2978, %v3203, 0
    %v3247 = vsel %vm2978, %v3204, 0
    %v3250 = vsel %vm2978, %v3205, 0
    %v3253 = vsel %vm2978, %v3206, 0
    %v3256 = vsel %vm2978, %v3207, 0
    %v3259 = vsel %vm2978, %v3208, 0
    %v3262 = vsel %vm2978, %v3209, 0
    %v3265 = vsel %vm2978, %v3210, 0
    %v3268 = vsel %vm2978, %v3211, 0
    %v3271 = vsel %vm2978, %v3212, 0
    %v3274 = vsel %vm2978, %v3213, 0
    %v3277 = vsel %vm2978, %v3214, 0
    %v3280 = vsel %vm2978, %v3215, 0
    %v3283 = vsel %vm2978, %v3216, 0
    %v3286 = vsel %vm2978, %v3217, 0
    %v3289 = vsel %vm2978, %v3218, 0
    %v3292 = vsel %vm2978, %v3219, 0
    %v3295 = vsel %vm2978, %v3220, 0
    %v3298 = vsel %vm2978, %v3221, 0
    %v3301 = vsel %vm2978, %v3222, 0
    %v3304 = vsel %vm2978, %v3223, 0
    %v3307 = vsel %vm2978, %v3224, 0
    %v3310 = vsel %vm2978, %v3225, 0
    %v3313 = vsel %vm2978, %v3226, 0
    %v3316 = vsel %vm2978, %v3227, 0
    %v3319 = vsel %vm2978, %v3228, 0
    %v3322 = vsel %vm2978, %v3229, 0
    %v3325 = vsel %vm2978, %v3230, 0
    %v3328 = vsel %vm2978, %v3231, 0
    %v3331 = vsel %vm2978, %v3232, 0
    %v3334 = vsel %vm2978, %v3233, 0
    %v3337 = vsel %vm2978, %v3234, 0
    %v3340 = vsel %vm2978, %v3235, 0
    %v3343 = vsel %vm2978, %v3236, 0
    %3345 = vmatprep.subr.mxu0 0.0
    %3346 = vmatpush1.msra.mxu0 0.0
    %3347 = vmatprep.subr.mxu0 0.0
    %3348 = vmatpush1.msra.mxu0 0.0
    %3349 = vmatprep.subr.mxu0 0.0
    %3350 = vmatpush1.msra.mxu0 0.0
    %3351 = vmatprep.subr.mxu0 0.0
    %3352 = vmatpush1.msra.mxu0 0.0
    %3353 = vmatprep.subr.mxu0 0.0
    %3354 = vmatpush1.msra.mxu0 0.0
    %3355 = vmatprep.subr.mxu0 0.0
    %3356 = vmatpush1.msra.mxu0 0.0
    %3357 = vmatprep.subr.mxu0 0.0
    %3358 = vmatpush1.msra.mxu0 0.0
    %3359 = vmatprep.subr.mxu0 0.0
    %3360 = vmatpush1.msra.mxu0 0.0
    %3361 = vmatprep.subr.mxu0 0.0
    %3362 = vmatpush1.msra.mxu0 0.0
    %3363 = vmatprep.subr.mxu0 0.0
    %3364 = vmatpush1.msra.mxu0 0.0
    %3365 = vmatprep.subr.mxu0 0.0
    %3366 = vmatpush1.msra.mxu0 0.0
    %3367 = vmatprep.subr.mxu0 0.0
    %3368 = vmatpush1.msra.mxu0 0.0
    %3369 = vmatprep.subr.mxu0 0.0
    %3370 = vmatpush1.msra.mxu0 %v3200
    %3371 = vmatprep.subr.mxu0 0.0
    %3372 = vmatpush1.msra.mxu0 %v3199
    %3373 = vmatprep.subr.mxu0 0.0
    %3374 = vmatpush1.msra.mxu0 %v3198
    %3375 = vmatprep.subr.mxu0 0.0
    %3376 = vmatpush1.msra.mxu0 %v3197
    %3377 = vmatprep.subr.mxu0 0.0
    %3378 = vmatpush2.msra.mxu0 0.0
    %3379 = vmatprep.subr.mxu0 0.0
    %3380 = vmatpush2.msra.mxu0 0.0
    %3381 = vmatprep.subr.mxu0 0.0
    %3382 = vmatpush2.msra.mxu0 0.0
    %3383 = vmatprep.subr.mxu0 0.0
    %3384 = vmatpush2.msra.mxu0 0.0
    %3385 = vmatprep.subr.mxu0 0.0
    %3386 = vmatpush2.msra.mxu0 0.0
    %3387 = vmatprep.subr.mxu0 0.0
    %3388 = vmatpush2.msra.mxu0 0.0
    %3389 = vmatprep.subr.mxu0 0.0
    %3390 = vmatpush2.msra.mxu0 0.0
    %3391 = vmatprep.subr.mxu0 0.0
    %3392 = vmatpush2.msra.mxu0 0.0
    %3393 = vmatprep.subr.mxu0 0.0
    %3394 = vmatpush2.msra.mxu0 0.0
    %3395 = vmatprep.subr.mxu0 0.0
    %3396 = vmatpush2.msra.mxu0 0.0
    %3397 = vmatprep.subr.mxu0 0.0
    %3398 = vmatpush2.msra.mxu0 0.0
    %3399 = vmatprep.subr.mxu0 0.0
    %3400 = vmatpush2.msra.mxu0 0.0
    %3401 = vmatprep.subr.mxu0 0.0
    %3402 = vmatpush2.msra.mxu0 0.0
    %3403 = vmatprep.subr.mxu0 0.0
    %3404 = vmatpush2.msra.mxu0 0.0
    %3405 = vmatprep.subr.mxu0 0.0
    %3406 = vmatpush2.msra.mxu0 0.0
    %3407 = vmatprep.subr.mxu0 0.0
    %3408 = vmatpush2.msra.mxu0 0.0
    %3409 = vmatprep.mubr.f32.mxu0 0.0
    %3410 = vmatmul.mubr.f32.gmra.mxu0 %v3238
    %v3411 = vpop.f32.mrf.mxu0
    %v3412 = vadd.f32 1.0, %v3411
    %v3413 = vpop.f32.mrf.mxu0
    %3414 = vmatprep.mubr.f32.mxu0 0.0
    %3415 = vmatmul.mubr.f32.gmra.mxu0 %v3241
    %v3416 = vpop.f32.mrf.mxu0
    %v3417 = vadd.f32 1.0, %v3416
    %v3418 = vpop.f32.mrf.mxu0
    %3419 = vmatprep.mubr.f32.mxu0 0.0
    %3420 = vmatmul.mubr.f32.gmra.mxu0 %v3244
    %v3421 = vpop.f32.mrf.mxu0
    %v3422 = vadd.f32 1.0, %v3421
    %v3423 = vpop.f32.mrf.mxu0
    %3424 = vmatprep.mubr.f32.mxu0 0.0
    %3425 = vmatmul.mubr.f32.gmra.mxu0 %v3247
    %v3426 = vpop.f32.mrf.mxu0
    %v3427 = vadd.f32 1.0, %v3426
    %v3428 = vpop.f32.mrf.mxu0
    %3429 = vmatprep.mubr.f32.mxu0 0.0
    %3430 = vmatmul.mubr.f32.gmra.mxu0 %v3250
    %v3431 = vpop.f32.mrf.mxu0
    %v3432 = vadd.f32 1.0, %v3431
    %v3433 = vpop.f32.mrf.mxu0
    %3434 = vmatprep.mubr.f32.mxu0 0.0
    %3435 = vmatmul.mubr.f32.gmra.mxu0 %v3253
    %v3436 = vpop.f32.mrf.mxu0
    %v3437 = vadd.f32 1.0, %v3436
    %v3438 = vpop.f32.mrf.mxu0
    %3439 = vmatprep.mubr.f32.mxu0 0.0
    %3440 = vmatmul.mubr.f32.gmra.mxu0 %v3256
    %v3441 = vpop.f32.mrf.mxu0
    %v3442 = vadd.f32 1.0, %v3441
    %v3443 = vpop.f32.mrf.mxu0
    %3444 = vmatprep.mubr.f32.mxu0 0.0
    %3445 = vmatmul.mubr.f32.gmra.mxu0 %v3259
    %v3446 = vpop.f32.mrf.mxu0
    %v3447 = vadd.f32 1.0, %v3446
    %v3448 = vpop.f32.mrf.mxu0
    %3449 = vmatprep.mubr.f32.mxu0 0.0
    %3450 = vmatmul.mubr.f32.gmra.mxu0 %v3262
    %v3451 = vpop.f32.mrf.mxu0
    %v3452 = vadd.f32 1.0, %v3451
    %v3453 = vpop.f32.mrf.mxu0
    %3454 = vmatprep.mubr.f32.mxu0 0.0
    %3455 = vmatmul.mubr.f32.gmra.mxu0 %v3265
    %v3456 = vpop.f32.mrf.mxu0
    %v3457 = vadd.f32 1.0, %v3456
    %v3458 = vpop.f32.mrf.mxu0
    %3459 = vmatprep.mubr.f32.mxu0 0.0
    %3460 = vmatmul.mubr.f32.gmra.mxu0 %v3268
    %v3461 = vpop.f32.mrf.mxu0
    %v3462 = vadd.f32 1.0, %v3461
    %v3463 = vpop.f32.mrf.mxu0
    %3464 = vmatprep.mubr.f32.mxu0 0.0
    %3465 = vmatmul.mubr.f32.gmra.mxu0 %v3271
    %v3466 = vpop.f32.mrf.mxu0
    %v3467 = vadd.f32 1.0, %v3466
    %v3468 = vpop.f32.mrf.mxu0
    %3469 = vmatprep.mubr.f32.mxu0 0.0
    %3470 = vmatmul.mubr.f32.gmra.mxu0 %v3274
    %v3471 = vpop.f32.mrf.mxu0
    %v3472 = vadd.f32 1.0, %v3471
    %v3473 = vpop.f32.mrf.mxu0
    %3474 = vmatprep.mubr.f32.mxu0 0.0
    %3475 = vmatmul.mubr.f32.gmra.mxu0 %v3277
    %v3476 = vpop.f32.mrf.mxu0
    %v3477 = vadd.f32 1.0, %v3476
    %v3478 = vpop.f32.mrf.mxu0
    %3479 = vmatprep.mubr.f32.mxu0 0.0
    %3480 = vmatmul.mubr.f32.gmra.mxu0 %v3280
    %v3481 = vpop.f32.mrf.mxu0
    %v3482 = vadd.f32 1.0, %v3481
    %v3483 = vpop.f32.mrf.mxu0
    %3484 = vmatprep.mubr.f32.mxu0 0.0
    %3485 = vmatmul.mubr.f32.gmra.mxu0 %v3283
    %v3486 = vpop.f32.mrf.mxu0
    %v3487 = vadd.f32 1.0, %v3486
    %v3488 = vpop.f32.mrf.mxu0
    %3489 = vmatprep.mubr.f32.mxu0 0.0
    %3490 = vmatmul.mubr.f32.gmra.mxu0 %v3286
    %v3491 = vpop.f32.mrf.mxu0
    %v3492 = vadd.f32 1.0, %v3491
    %v3493 = vpop.f32.mrf.mxu0
    %3494 = vmatprep.mubr.f32.mxu0 0.0
    %3495 = vmatmul.mubr.f32.gmra.mxu0 %v3289
    %v3496 = vpop.f32.mrf.mxu0
    %v3497 = vadd.f32 1.0, %v3496
    %v3498 = vpop.f32.mrf.mxu0
    %3499 = vmatprep.mubr.f32.mxu0 0.0
    %3500 = vmatmul.mubr.f32.gmra.mxu0 %v3292
    %v3501 = vpop.f32.mrf.mxu0
    %v3502 = vadd.f32 1.0, %v3501
    %v3503 = vpop.f32.mrf.mxu0
    %3504 = vmatprep.mubr.f32.mxu0 0.0
    %3505 = vmatmul.mubr.f32.gmra.mxu0 %v3295
    %v3506 = vpop.f32.mrf.mxu0
    %v3507 = vadd.f32 1.0, %v3506
    %v3508 = vpop.f32.mrf.mxu0
    %3509 = vmatprep.mubr.f32.mxu0 0.0
    %3510 = vmatmul.mubr.f32.gmra.mxu0 %v3298
    %v3511 = vpop.f32.mrf.mxu0
    %v3512 = vadd.f32 1.0, %v3511
    %v3513 = vpop.f32.mrf.mxu0
    %3514 = vmatprep.mubr.f32.mxu0 0.0
    %3515 = vmatmul.mubr.f32.gmra.mxu0 %v3301
    %v3516 = vpop.f32.mrf.mxu0
    %v3517 = vadd.f32 1.0, %v3516
    %v3518 = vpop.f32.mrf.mxu0
    %3519 = vmatprep.mubr.f32.mxu0 0.0
    %3520 = vmatmul.mubr.f32.gmra.mxu0 %v3304
    %v3521 = vpop.f32.mrf.mxu0
    %v3522 = vadd.f32 1.0, %v3521
    %v3523 = vpop.f32.mrf.mxu0
    %3524 = vmatprep.mubr.f32.mxu0 0.0
    %3525 = vmatmul.mubr.f32.gmra.mxu0 %v3307
    %v3526 = vpop.f32.mrf.mxu0
    %v3527 = vadd.f32 1.0, %v3526
    %v3528 = vpop.f32.mrf.mxu0
    %3529 = vmatprep.mubr.f32.mxu0 0.0
    %3530 = vmatmul.mubr.f32.gmra.mxu0 %v3310
    %v3531 = vpop.f32.mrf.mxu0
    %v3532 = vadd.f32 1.0, %v3531
    %v3533 = vpop.f32.mrf.mxu0
    %3534 = vmatprep.mubr.f32.mxu0 0.0
    %3535 = vmatmul.mubr.f32.gmra.mxu0 %v3313
    %v3536 = vpop.f32.mrf.mxu0
    %v3537 = vadd.f32 1.0, %v3536
    %v3538 = vpop.f32.mrf.mxu0
    %3539 = vmatprep.mubr.f32.mxu0 0.0
    %3540 = vmatmul.mubr.f32.gmra.mxu0 %v3316
    %v3541 = vpop.f32.mrf.mxu0
    %v3542 = vadd.f32 1.0, %v3541
    %v3543 = vpop.f32.mrf.mxu0
    %3544 = vmatprep.mubr.f32.mxu0 0.0
    %3545 = vmatmul.mubr.f32.gmra.mxu0 %v3319
    %v3546 = vpop.f32.mrf.mxu0
    %v3547 = vadd.f32 1.0, %v3546
    %v3548 = vpop.f32.mrf.mxu0
    %3549 = vmatprep.mubr.f32.mxu0 0.0
    %3550 = vmatmul.mubr.f32.gmra.mxu0 %v3322
    %v3551 = vpop.f32.mrf.mxu0
    %v3552 = vadd.f32 1.0, %v3551
    %v3553 = vpop.f32.mrf.mxu0
    %3554 = vmatprep.mubr.f32.mxu0 0.0
    %3555 = vmatmul.mubr.f32.gmra.mxu0 %v3325
    %v3556 = vpop.f32.mrf.mxu0
    %v3557 = vadd.f32 1.0, %v3556
    %v3558 = vpop.f32.mrf.mxu0
    %3559 = vmatprep.mubr.f32.mxu0 0.0
    %3560 = vmatmul.mubr.f32.gmra.mxu0 %v3328
    %v3561 = vpop.f32.mrf.mxu0
    %v3562 = vadd.f32 1.0, %v3561
    %v3563 = vpop.f32.mrf.mxu0
    %3564 = vmatprep.mubr.f32.mxu0 0.0
    %3565 = vmatmul.mubr.f32.gmra.mxu0 %v3331
    %v3566 = vpop.f32.mrf.mxu0
    %v3567 = vadd.f32 1.0, %v3566
    %v3568 = vpop.f32.mrf.mxu0
    %3569 = vmatprep.mubr.f32.mxu0 0.0
    %3570 = vmatmul.mubr.f32.gmra.mxu0 %v3334
    %v3571 = vpop.f32.mrf.mxu0
    %v3572 = vadd.f32 1.0, %v3571
    %v3573 = vpop.f32.mrf.mxu0
    %3574 = vmatprep.mubr.f32.mxu0 0.0
    %3575 = vmatmul.mubr.f32.gmra.mxu0 %v3337
    %v3576 = vpop.f32.mrf.mxu0
    %v3577 = vadd.f32 1.0, %v3576
    %v3578 = vpop.f32.mrf.mxu0
    %3579 = vmatprep.mubr.f32.mxu0 0.0
    %3580 = vmatmul.mubr.f32.gmra.mxu0 %v3340
    %v3581 = vpop.f32.mrf.mxu0
    %v3582 = vadd.f32 1.0, %v3581
    %v3583 = vpop.f32.mrf.mxu0
    %3584 = vmatprep.mubr.f32.mxu0 0.0
    %3585 = vmatmul.mubr.f32.gmra.mxu0 %v3343
    %v3586 = vpop.f32.mrf.mxu0
    %v3587 = vadd.f32 1.0, %v3586
    %v3588 = vpop.f32.mrf.mxu0
    %3589 = vdwg.mxu0
    %v3590 = vmul.f32 %v2894, %v3412
    %v3591 = vmul.f32 %v2895, %v3417
    %v3592 = vmul.f32 %v2896, %v3422
    %v3593 = vmul.f32 %v2897, %v3427
    %v3594 = vmul.f32 %v2898, %v3432
    %v3595 = vmul.f32 %v2899, %v3437
    %v3596 = vmul.f32 %v2900, %v3442
    %v3597 = vmul.f32 %v2901, %v3447
    %v3598 = vmul.f32 %v2902, %v3452
    %v3599 = vmul.f32 %v2903, %v3457
    %v3600 = vmul.f32 %v2904, %v3462
    %v3601 = vmul.f32 %v2905, %v3467
    %v3602 = vmul.f32 %v2906, %v3472
    %v3603 = vmul.f32 %v2907, %v3477
    %v3604 = vmul.f32 %v2908, %v3482
    %v3605 = vmul.f32 %v2909, %v3487
    %v3606 = vmul.f32 %v2910, %v3492
    %v3607 = vmul.f32 %v2911, %v3497
    %v3608 = vmul.f32 %v2912, %v3502
    %v3609 = vmul.f32 %v2913, %v3507
    %v3610 = vmul.f32 %v2914, %v3512
    %v3611 = vmul.f32 %v2915, %v3517
    %v3612 = vmul.f32 %v2916, %v3522
    %v3613 = vmul.f32 %v2917, %v3527
    %v3614 = vmul.f32 %v2918, %v3532
    %v3615 = vmul.f32 %v2919, %v3537
    %v3616 = vmul.f32 %v2920, %v3542
    %v3617 = vmul.f32 %v2921, %v3547
    %v3618 = vmul.f32 %v2922, %v3552
    %v3619 = vmul.f32 %v2923, %v3557
    %v3620 = vmul.f32 %v2924, %v3562
    %v3621 = vmul.f32 %v2925, %v3567
    %v3622 = vmul.f32 %v2926, %v3572
    %v3623 = vmul.f32 %v2927, %v3577
    %v3624 = vmul.f32 %v2928, %v3582
    %v3625 = vmul.f32 %v2929, %v3587
    %3626 = vset.pattern.permute.xlu0 1
    %3627 = vperm.xlu0 %3626, %v388
    %v3628 = vpop.permute.xlu0 %3627
    %3630 = vset.pattern.permute.xlu0 1
    %3631 = vperm.xlu0 %3630, %v389
    %v3632 = vpop.permute.xlu0 %3631
    %3634 = vset.pattern.permute.xlu0 1
    %3635 = vperm.xlu0 %3634, %v390
    %v3636 = vpop.permute.xlu0 %3635
    %3638 = vset.pattern.permute.xlu0 1
    %3639 = vperm.xlu0 %3638, %v391
    %v3640 = vpop.permute.xlu0 %3639
    %3642 = vset.pattern.permute.xlu0 1
    %3643 = vperm.xlu0 %3642, %v392
    %v3644 = vpop.permute.xlu0 %3643
    %3646 = vset.pattern.permute.xlu0 1
    %3647 = vperm.xlu0 %3646, %v393
    %v3648 = vpop.permute.xlu0 %3647
    %3650 = vset.pattern.permute.xlu0 1
    %3651 = vperm.xlu0 %3650, %v394
    %v3652 = vpop.permute.xlu0 %3651
    %3654 = vset.pattern.permute.xlu0 1
    %3655 = vperm.xlu0 %3654, %v395
    %v3656 = vpop.permute.xlu0 %3655
    %3658 = vset.pattern.permute.xlu0 1
    %3659 = vperm.xlu0 %3658, %v396
    %v3660 = vpop.permute.xlu0 %3659
    %3662 = vset.pattern.permute.xlu0 1
    %3663 = vperm.xlu0 %3662, %v397
    %v3664 = vpop.permute.xlu0 %3663
    %3666 = vset.pattern.permute.xlu0 1
    %3667 = vperm.xlu0 %3666, %v398
    %v3668 = vpop.permute.xlu0 %3667
    %3670 = vset.pattern.permute.xlu0 1
    %3671 = vperm.xlu0 %3670, %v399
    %v3672 = vpop.permute.xlu0 %3671
    %3674 = vset.pattern.permute.xlu0 1
    %3675 = vperm.xlu0 %3674, %v400
    %v3676 = vpop.permute.xlu0 %3675
    %3678 = vset.pattern.permute.xlu0 1
    %3679 = vperm.xlu0 %3678, %v401
    %v3680 = vpop.permute.xlu0 %3679
    %3682 = vset.pattern.permute.xlu0 1
    %3683 = vperm.xlu0 %3682, %v402
    %v3684 = vpop.permute.xlu0 %3683
    %3686 = vset.pattern.permute.xlu0 1
    %3687 = vperm.xlu0 %3686, %v403
    %v3688 = vpop.permute.xlu0 %3687
    %3690 = vset.pattern.permute.xlu0 1
    %3691 = vperm.xlu0 %3690, %v404
    %v3692 = vpop.permute.xlu0 %3691
    %3694 = vset.pattern.permute.xlu0 1
    %3695 = vperm.xlu0 %3694, %v405
    %v3696 = vpop.permute.xlu0 %3695
    %3698 = vset.pattern.permute.xlu0 1
    %3699 = vperm.xlu0 %3698, %v406
    %v3700 = vpop.permute.xlu0 %3699
    %3702 = vset.pattern.permute.xlu0 1
    %3703 = vperm.xlu0 %3702, %v407
    %v3704 = vpop.permute.xlu0 %3703
    %3706 = vset.pattern.permute.xlu0 1
    %3707 = vperm.xlu0 %3706, %v408
    %v3708 = vpop.permute.xlu0 %3707
    %3710 = vset.pattern.permute.xlu0 1
    %3711 = vperm.xlu0 %3710, %v409
    %v3712 = vpop.permute.xlu0 %3711
    %3714 = vset.pattern.permute.xlu0 1
    %3715 = vperm.xlu0 %3714, %v410
    %v3716 = vpop.permute.xlu0 %3715
    %3718 = vset.pattern.permute.xlu0 1
    %3719 = vperm.xlu0 %3718, %v411
    %v3720 = vpop.permute.xlu0 %3719
    %3722 = vset.pattern.permute.xlu0 1
    %3723 = vperm.xlu0 %3722, %v412
    %v3724 = vpop.permute.xlu0 %3723
    %3726 = vset.pattern.permute.xlu0 1
    %3727 = vperm.xlu0 %3726, %v413
    %v3728 = vpop.permute.xlu0 %3727
    %3730 = vset.pattern.permute.xlu0 1
    %3731 = vperm.xlu0 %3730, %v414
    %v3732 = vpop.permute.xlu0 %3731
    %3734 = vset.pattern.permute.xlu0 1
    %3735 = vperm.xlu0 %3734, %v415
    %v3736 = vpop.permute.xlu0 %3735
    %3738 = vset.pattern.permute.xlu0 1
    %3739 = vperm.xlu0 %3738, %v416
    %v3740 = vpop.permute.xlu0 %3739
    %3742 = vset.pattern.permute.xlu0 1
    %3743 = vperm.xlu0 %3742, %v417
    %v3744 = vpop.permute.xlu0 %3743
    %3746 = vset.pattern.permute.xlu0 1
    %3747 = vperm.xlu0 %3746, %v418
    %v3748 = vpop.permute.xlu0 %3747
    %3750 = vset.pattern.permute.xlu0 1
    %3751 = vperm.xlu0 %3750, %v419
    %v3752 = vpop.permute.xlu0 %3751
    %3754 = vset.pattern.permute.xlu0 1
    %3755 = vperm.xlu0 %3754, %v420
    %v3756 = vpop.permute.xlu0 %3755
    %3758 = vset.pattern.permute.xlu0 1
    %3759 = vperm.xlu0 %3758, %v421
    %v3760 = vpop.permute.xlu0 %3759
    %3762 = vset.pattern.permute.xlu0 1
    %3763 = vperm.xlu0 %3762, %v422
    %v3764 = vpop.permute.xlu0 %3763
    %3766 = vset.pattern.permute.xlu0 1
    %3767 = vperm.xlu0 %3766, %v423
    %v3768 = vpop.permute.xlu0 %3767
    %v3770 = vadd.f32 %v3590, %v3628
    %v3771 = vadd.f32 %v3591, %v3632
    %v3772 = vadd.f32 %v3592, %v3636
    %v3773 = vadd.f32 %v3593, %v3640
    %v3774 = vadd.f32 %v3594, %v3644
    %v3775 = vadd.f32 %v3595, %v3648
    %v3776 = vadd.f32 %v3596, %v3652
    %v3777 = vadd.f32 %v3597, %v3656
    %v3778 = vadd.f32 %v3598, %v3660
    %v3779 = vadd.f32 %v3599, %v3664
    %v3780 = vadd.f32 %v3600, %v3668
    %v3781 = vadd.f32 %v3601, %v3672
    %v3782 = vadd.f32 %v3602, %v3676
    %v3783 = vadd.f32 %v3603, %v3680
    %v3784 = vadd.f32 %v3604, %v3684
    %v3785 = vadd.f32 %v3605, %v3688
    %v3786 = vadd.f32 %v3606, %v3692
    %v3787 = vadd.f32 %v3607, %v3696
    %v3788 = vadd.f32 %v3608, %v3700
    %v3789 = vadd.f32 %v3609, %v3704
    %v3790 = vadd.f32 %v3610, %v3708
    %v3791 = vadd.f32 %v3611, %v3712
    %v3792 = vadd.f32 %v3612, %v3716
    %v3793 = vadd.f32 %v3613, %v3720
    %v3794 = vadd.f32 %v3614, %v3724
    %v3795 = vadd.f32 %v3615, %v3728
    %v3796 = vadd.f32 %v3616, %v3732
    %v3797 = vadd.f32 %v3617, %v3736
    %v3798 = vadd.f32 %v3618, %v3740
    %v3799 = vadd.f32 %v3619, %v3744
    %v3800 = vadd.f32 %v3620, %v3748
    %v3801 = vadd.f32 %v3621, %v3752
    %v3802 = vadd.f32 %v3622, %v3756
    %v3803 = vadd.f32 %v3623, %v3760
    %v3804 = vadd.f32 %v3624, %v3764
    %v3805 = vadd.f32 %v3625, %v3768
    %v3806 = vld [vmem:[%s6] sm:$0xff]
    %v3807 = vld [vmem:[%s6 + $0x8] sm:$0xff]
    %v3808 = vld [vmem:[%s6 + $0x10] sm:$0xff]
    %v3809 = vld [vmem:[%s6 + $0x18] sm:$0xff]
    %v3810 = vld [vmem:[%s6 + $0x20] sm:$0xff]
    %v3811 = vld [vmem:[%s6 + $0x28] sm:$0xff]
    %v3812 = vld [vmem:[%s6 + $0x30] sm:$0xff]
    %v3813 = vld [vmem:[%s6 + $0x38] sm:$0xff]
    %v3814 = vld [vmem:[%s6 + $0x40] sm:$0xff]
    %v3815 = vld [vmem:[%s6 + $0x48] sm:$0xff]
    %v3816 = vld [vmem:[%s6 + $0x50] sm:$0xff]
    %v3817 = vld [vmem:[%s6 + $0x58] sm:$0xff]
    %v3818 = vld [vmem:[%s6 + $0x60] sm:$0xff]
    %v3819 = vld [vmem:[%s6 + $0x68] sm:$0xff]
    %v3820 = vld [vmem:[%s6 + $0x70] sm:$0xff]
    %v3821 = vld [vmem:[%s6 + $0x78] sm:$0xff]
    %v3822 = vld [vmem:[%s6 + $0x80] sm:$0xff]
    %v3823 = vld [vmem:[%s6 + $0x88] sm:$0xff]
    %v3824 = vld [vmem:[%s6 + $0x90] sm:$0xff]
    %v3825 = vld [vmem:[%s6 + $0x98] sm:$0xff]
    %v3826 = vld [vmem:[%s6 + $0xa0] sm:$0xff]
    %v3827 = vld [vmem:[%s6 + $0xa8] sm:$0xff]
    %v3828 = vld [vmem:[%s6 + $0xb0] sm:$0xff]
    %v3829 = vld [vmem:[%s6 + $0xb8] sm:$0xff]
    %v3830 = vld [vmem:[%s9] sm:$0xff]
    %v3831 = vld [vmem:[%s9 + $0x8] sm:$0xff]
    %v3832 = vld [vmem:[%s9 + $0x10] sm:$0xff]
    %v3833 = vld [vmem:[%s9 + $0x18] sm:$0xff]
    %v3834 = vld [vmem:[%s9 + $0x20] sm:$0xff]
    %v3835 = vld [vmem:[%s9 + $0x28] sm:$0xff]
    %v3836 = vld [vmem:[%s9 + $0x30] sm:$0xff]
    %v3837 = vld [vmem:[%s9 + $0x38] sm:$0xff]
    %3839 = vset.pattern.permute.xlu0 0
    %3840 = vperm.xlu0 %3839, %v3830
    %v3841 = vpop.permute.xlu0 %3840
    %3844 = vset.pattern.permute.xlu0 0
    %3845 = vperm.xlu0 %3844, %v3831
    %v3846 = vpop.permute.xlu0 %3845
    %3849 = vset.pattern.permute.xlu0 0
    %3850 = vperm.xlu0 %3849, %v3832
    %v3851 = vpop.permute.xlu0 %3850
    %3854 = vset.pattern.permute.xlu0 0
    %3855 = vperm.xlu0 %3854, %v3833
    %v3856 = vpop.permute.xlu0 %3855
    %3859 = vset.pattern.permute.xlu0 0
    %3860 = vperm.xlu0 %3859, %v3834
    %v3861 = vpop.permute.xlu0 %3860
    %3864 = vset.pattern.permute.xlu0 0
    %3865 = vperm.xlu0 %3864, %v3835
    %v3866 = vpop.permute.xlu0 %3865
    %3869 = vset.pattern.permute.xlu0 0
    %3870 = vperm.xlu0 %3869, %v3836
    %v3871 = vpop.permute.xlu0 %3870
    %3874 = vset.pattern.permute.xlu0 0
    %3875 = vperm.xlu0 %3874, %v3837
    %v3876 = vpop.permute.xlu0 %3875
    %v3879 = vsel %vm2978, %v3808, 0
    %v3882 = vsel %vm2978, %v3811, 0
    %v3885 = vsel %vm2978, %v3814, 0
    %v3888 = vsel %vm2978, %v3817, 0
    %v3891 = vsel %vm2978, %v3820, 0
    %v3894 = vsel %vm2978, %v3823, 0
    %v3897 = vsel %vm2978, %v3826, 0
    %v3900 = vsel %vm2978, %v3829, 0
    %3902 = vmatprep.subr.mxu0 0.0
    %v3903 = vand.u32 %v3785, 4294901760
    %3904 = vmatpush1.msra.mxu0 %v3903
    %3905 = vmatprep.subr.mxu0 0.0
    %v3906 = vand.u32 %v3784, 4294901760
    %3907 = vmatpush1.msra.mxu0 %v3906
    %3908 = vmatprep.subr.mxu0 0.0
    %v3909 = vand.u32 %v3783, 4294901760
    %3910 = vmatpush1.msra.mxu0 %v3909
    %3911 = vmatprep.subr.mxu0 0.0
    %v3912 = vand.u32 %v3782, 4294901760
    %3913 = vmatpush1.msra.mxu0 %v3912
    %3914 = vmatprep.subr.mxu0 0.0
    %v3915 = vand.u32 %v3781, 4294901760
    %3916 = vmatpush1.msra.mxu0 %v3915
    %3917 = vmatprep.subr.mxu0 0.0
    %v3918 = vand.u32 %v3780, 4294901760
    %3919 = vmatpush1.msra.mxu0 %v3918
    %3920 = vmatprep.subr.mxu0 0.0
    %v3921 = vand.u32 %v3779, 4294901760
    %3922 = vmatpush1.msra.mxu0 %v3921
    %3923 = vmatprep.subr.mxu0 0.0
    %v3924 = vand.u32 %v3778, 4294901760
    %3925 = vmatpush1.msra.mxu0 %v3924
    %3926 = vmatprep.subr.mxu0 0.0
    %v3927 = vand.u32 %v3777, 4294901760
    %3928 = vmatpush1.msra.mxu0 %v3927
    %3929 = vmatprep.subr.mxu0 0.0
    %v3930 = vand.u32 %v3776, 4294901760
    %3931 = vmatpush1.msra.mxu0 %v3930
    %3932 = vmatprep.subr.mxu0 0.0
    %v3933 = vand.u32 %v3775, 4294901760
    %3934 = vmatpush1.msra.mxu0 %v3933
    %3935 = vmatprep.subr.mxu0 0.0
    %v3936 = vand.u32 %v3774, 4294901760
    %3937 = vmatpush1.msra.mxu0 %v3936
    %3938 = vmatprep.subr.mxu0 0.0
    %v3939 = vand.u32 %v3773, 4294901760
    %3940 = vmatpush1.msra.mxu0 %v3939
    %3941 = vmatprep.subr.mxu0 0.0
    %v3942 = vand.u32 %v3772, 4294901760
    %3943 = vmatpush1.msra.mxu0 %v3942
    %3944 = vmatprep.subr.mxu0 0.0
    %v3945 = vand.u32 %v3771, 4294901760
    %3946 = vmatpush1.msra.mxu0 %v3945
    %3947 = vmatprep.subr.mxu0 0.0
    %v3948 = vand.u32 %v3770, 4294901760
    %3949 = vmatpush1.msra.mxu0 %v3948
    %3950 = vmatprep.subr.mxu0 0.0
    %v3951 = vand.u32 %v3801, 4294901760
    %3952 = vmatpush2.msra.mxu0 %v3951
    %3953 = vmatprep.subr.mxu0 0.0
    %v3954 = vand.u32 %v3800, 4294901760
    %3955 = vmatpush2.msra.mxu0 %v3954
    %3956 = vmatprep.subr.mxu0 0.0
    %v3957 = vand.u32 %v3799, 4294901760
    %3958 = vmatpush2.msra.mxu0 %v3957
    %3959 = vmatprep.subr.mxu0 0.0
    %v3960 = vand.u32 %v3798, 4294901760
    %3961 = vmatpush2.msra.mxu0 %v3960
    %3962 = vmatprep.subr.mxu0 0.0
    %v3963 = vand.u32 %v3797, 4294901760
    %3964 = vmatpush2.msra.mxu0 %v3963
    %3965 = vmatprep.subr.mxu0 0.0
    %v3966 = vand.u32 %v3796, 4294901760
    %3967 = vmatpush2.msra.mxu0 %v3966
    %3968 = vmatprep.subr.mxu0 0.0
    %v3969 = vand.u32 %v3795, 4294901760
    %3970 = vmatpush2.msra.mxu0 %v3969
    %3971 = vmatprep.subr.mxu0 0.0
    %v3972 = vand.u32 %v3794, 4294901760
    %3973 = vmatpush2.msra.mxu0 %v3972
    %3974 = vmatprep.subr.mxu0 0.0
    %v3975 = vand.u32 %v3793, 4294901760
    %3976 = vmatpush2.msra.mxu0 %v3975
    %3977 = vmatprep.subr.mxu0 0.0
    %v3978 = vand.u32 %v3792, 4294901760
    %3979 = vmatpush2.msra.mxu0 %v3978
    %3980 = vmatprep.subr.mxu0 0.0
    %v3981 = vand.u32 %v3791, 4294901760
    %3982 = vmatpush2.msra.mxu0 %v3981
    %3983 = vmatprep.subr.mxu0 0.0
    %v3984 = vand.u32 %v3790, 4294901760
    %3985 = vmatpush2.msra.mxu0 %v3984
    %3986 = vmatprep.subr.mxu0 0.0
    %v3987 = vand.u32 %v3789, 4294901760
    %3988 = vmatpush2.msra.mxu0 %v3987
    %3989 = vmatprep.subr.mxu0 0.0
    %v3990 = vand.u32 %v3788, 4294901760
    %3991 = vmatpush2.msra.mxu0 %v3990
    %3992 = vmatprep.subr.mxu0 0.0
    %v3993 = vand.u32 %v3787, 4294901760
    %3994 = vmatpush2.msra.mxu0 %v3993
    %3995 = vmatprep.subr.mxu0 0.0
    %v3996 = vand.u32 %v3786, 4294901760
    %3997 = vmatpush2.msra.mxu0 %v3996
    %v3998 = vand.u32 %v3807, 4294901760
    %v3999 = vsub.f32 %v3807, %v3998
    %v4000 = vand.u32 %v3999, 4294901760
    %v4001 = vsub.f32 %v3999, %v4000
    %v4002 = vand.u32 %v4001, 4294901760
    %4003 = vmatprep.mubr.f32.mxu0 %v4002
    %v4004 = vand.u32 %v3806, 4294901760
    %v4005 = vsub.f32 %v3806, %v4004
    %v4006 = vand.u32 %v4005, 4294901760
    %v4007 = vsub.f32 %v4005, %v4006
    %v4008 = vand.u32 %v4007, 4294901760
    %4009 = vmatmul.mubr.f32.gmra.mxu0 %v4008
    %v4010 = vpop.f32.mrf.mxu0
    %v4011 = vadd.f32 %v3841, %v4010
    %v4012 = vpop.f32.mrf.mxu0
    %v4013 = vand.u32 %v3810, 4294901760
    %v4014 = vsub.f32 %v3810, %v4013
    %v4015 = vand.u32 %v4014, 4294901760
    %v4016 = vsub.f32 %v4014, %v4015
    %v4017 = vand.u32 %v4016, 4294901760
    %4018 = vmatprep.mubr.f32.mxu0 %v4017
    %v4019 = vand.u32 %v3809, 4294901760
    %v4020 = vsub.f32 %v3809, %v4019
    %v4021 = vand.u32 %v4020, 4294901760
    %v4022 = vsub.f32 %v4020, %v4021
    %v4023 = vand.u32 %v4022, 4294901760
    %4024 = vmatmul.mubr.f32.gmra.mxu0 %v4023
    %v4025 = vpop.f32.mrf.mxu0
    %v4026 = vadd.f32 %v3846, %v4025
    %v4027 = vpop.f32.mrf.mxu0
    %v4028 = vand.u32 %v3813, 4294901760
    %v4029 = vsub.f32 %v3813, %v4028
    %v4030 = vand.u32 %v4029, 4294901760
    %v4031 = vsub.f32 %v4029, %v4030
    %v4032 = vand.u32 %v4031, 4294901760
    %4033 = vmatprep.mubr.f32.mxu0 %v4032
    %v4034 = vand.u32 %v3812, 4294901760
    %v4035 = vsub.f32 %v3812, %v4034
    %v4036 = vand.u32 %v4035, 4294901760
    %v4037 = vsub.f32 %v4035, %v4036
    %v4038 = vand.u32 %v4037, 4294901760
    %4039 = vmatmul.mubr.f32.gmra.mxu0 %v4038
    %v4040 = vpop.f32.mrf.mxu0
    %v4041 = vadd.f32 %v3851, %v4040
    %v4042 = vpop.f32.mrf.mxu0
    %v4043 = vand.u32 %v3816, 4294901760
    %v4044 = vsub.f32 %v3816, %v4043
    %v4045 = vand.u32 %v4044, 4294901760
    %v4046 = vsub.f32 %v4044, %v4045
    %v4047 = vand.u32 %v4046, 4294901760
    %4048 = vmatprep.mubr.f32.mxu0 %v4047
    %v4049 = vand.u32 %v3815, 4294901760
    %v4050 = vsub.f32 %v3815, %v4049
    %v4051 = vand.u32 %v4050, 4294901760
    %v4052 = vsub.f32 %v4050, %v4051
    %v4053 = vand.u32 %v4052, 4294901760
    %4054 = vmatmul.mubr.f32.gmra.mxu0 %v4053
    %v4055 = vpop.f32.mrf.mxu0
    %v4056 = vadd.f32 %v3856, %v4055
    %v4057 = vpop.f32.mrf.mxu0
    %v4058 = vand.u32 %v3819, 4294901760
    %v4059 = vsub.f32 %v3819, %v4058
    %v4060 = vand.u32 %v4059, 4294901760
    %v4061 = vsub.f32 %v4059, %v4060
    %v4062 = vand.u32 %v4061, 4294901760
    %4063 = vmatprep.mubr.f32.mxu0 %v4062
    %v4064 = vand.u32 %v3818, 4294901760
    %v4065 = vsub.f32 %v3818, %v4064
    %v4066 = vand.u32 %v4065, 4294901760
    %v4067 = vsub.f32 %v4065, %v4066
    %v4068 = vand.u32 %v4067, 4294901760
    %4069 = vmatmul.mubr.f32.gmra.mxu0 %v4068
    %v4070 = vpop.f32.mrf.mxu0
    %v4071 = vadd.f32 %v3861, %v4070
    %v4072 = vpop.f32.mrf.mxu0
    %v4073 = vand.u32 %v3822, 4294901760
    %v4074 = vsub.f32 %v3822, %v4073
    %v4075 = vand.u32 %v4074, 4294901760
    %v4076 = vsub.f32 %v4074, %v4075
    %v4077 = vand.u32 %v4076, 4294901760
    %4078 = vmatprep.mubr.f32.mxu0 %v4077
    %v4079 = vand.u32 %v3821, 4294901760
    %v4080 = vsub.f32 %v3821, %v4079
    %v4081 = vand.u32 %v4080, 4294901760
    %v4082 = vsub.f32 %v4080, %v4081
    %v4083 = vand.u32 %v4082, 4294901760
    %4084 = vmatmul.mubr.f32.gmra.mxu0 %v4083
    %v4085 = vpop.f32.mrf.mxu0
    %v4086 = vadd.f32 %v3866, %v4085
    %v4087 = vpop.f32.mrf.mxu0
    %v4088 = vand.u32 %v3825, 4294901760
    %v4089 = vsub.f32 %v3825, %v4088
    %v4090 = vand.u32 %v4089, 4294901760
    %v4091 = vsub.f32 %v4089, %v4090
    %v4092 = vand.u32 %v4091, 4294901760
    %4093 = vmatprep.mubr.f32.mxu0 %v4092
    %v4094 = vand.u32 %v3824, 4294901760
    %v4095 = vsub.f32 %v3824, %v4094
    %v4096 = vand.u32 %v4095, 4294901760
    %v4097 = vsub.f32 %v4095, %v4096
    %v4098 = vand.u32 %v4097, 4294901760
    %4099 = vmatmul.mubr.f32.gmra.mxu0 %v4098
    %v4100 = vpop.f32.mrf.mxu0
    %v4101 = vadd.f32 %v3871, %v4100
    %v4102 = vpop.f32.mrf.mxu0
    %v4103 = vand.u32 %v3828, 4294901760
    %v4104 = vsub.f32 %v3828, %v4103
    %v4105 = vand.u32 %v4104, 4294901760
    %v4106 = vsub.f32 %v4104, %v4105
    %v4107 = vand.u32 %v4106, 4294901760
    %4108 = vmatprep.mubr.f32.mxu0 %v4107
    %v4109 = vand.u32 %v3827, 4294901760
    %v4110 = vsub.f32 %v3827, %v4109
    %v4111 = vand.u32 %v4110, 4294901760
    %v4112 = vsub.f32 %v4110, %v4111
    %v4113 = vand.u32 %v4112, 4294901760
    %4114 = vmatmul.mubr.f32.gmra.mxu0 %v4113
    %v4115 = vpop.f32.mrf.mxu0
    %v4116 = vadd.f32 %v3876, %v4115
    %v4117 = vpop.f32.mrf.mxu0
    %4118 = vdwg.mxu0
    %4119 = vmatprep.subr.mxu0 0.0
    %v4120 = vand.u32 %v3785, 4294901760
    %v4121 = vsub.f32 %v3785, %v4120
    %v4122 = vand.u32 %v4121, 4294901760
    %v4123 = vsub.f32 %v4121, %v4122
    %v4124 = vand.u32 %v4123, 4294901760
    %4125 = vmatpush1.msra.mxu0 %v4124
    %4126 = vmatprep.subr.mxu0 0.0
    %v4127 = vand.u32 %v3784, 4294901760
    %v4128 = vsub.f32 %v3784, %v4127
    %v4129 = vand.u32 %v4128, 4294901760
    %v4130 = vsub.f32 %v4128, %v4129
    %v4131 = vand.u32 %v4130, 4294901760
    %4132 = vmatpush1.msra.mxu0 %v4131
    %4133 = vmatprep.subr.mxu0 0.0
    %v4134 = vand.u32 %v3783, 4294901760
    %v4135 = vsub.f32 %v3783, %v4134
    %v4136 = vand.u32 %v4135, 4294901760
    %v4137 = vsub.f32 %v4135, %v4136
    %v4138 = vand.u32 %v4137, 4294901760
    %4139 = vmatpush1.msra.mxu0 %v4138
    %4140 = vmatprep.subr.mxu0 0.0
    %v4141 = vand.u32 %v3782, 4294901760
    %v4142 = vsub.f32 %v3782, %v4141
    %v4143 = vand.u32 %v4142, 4294901760
    %v4144 = vsub.f32 %v4142, %v4143
    %v4145 = vand.u32 %v4144, 4294901760
    %4146 = vmatpush1.msra.mxu0 %v4145
    %4147 = vmatprep.subr.mxu0 0.0
    %v4148 = vand.u32 %v3781, 4294901760
    %v4149 = vsub.f32 %v3781, %v4148
    %v4150 = vand.u32 %v4149, 4294901760
    %v4151 = vsub.f32 %v4149, %v4150
    %v4152 = vand.u32 %v4151, 4294901760
    %4153 = vmatpush1.msra.mxu0 %v4152
    %4154 = vmatprep.subr.mxu0 0.0
    %v4155 = vand.u32 %v3780, 4294901760
    %v4156 = vsub.f32 %v3780, %v4155
    %v4157 = vand.u32 %v4156, 4294901760
    %v4158 = vsub.f32 %v4156, %v4157
    %v4159 = vand.u32 %v4158, 4294901760
    %4160 = vmatpush1.msra.mxu0 %v4159
    %4161 = vmatprep.subr.mxu0 0.0
    %v4162 = vand.u32 %v3779, 4294901760
    %v4163 = vsub.f32 %v3779, %v4162
    %v4164 = vand.u32 %v4163, 4294901760
    %v4165 = vsub.f32 %v4163, %v4164
    %v4166 = vand.u32 %v4165, 4294901760
    %4167 = vmatpush1.msra.mxu0 %v4166
    %4168 = vmatprep.subr.mxu0 0.0
    %v4169 = vand.u32 %v3778, 4294901760
    %v4170 = vsub.f32 %v3778, %v4169
    %v4171 = vand.u32 %v4170, 4294901760
    %v4172 = vsub.f32 %v4170, %v4171
    %v4173 = vand.u32 %v4172, 4294901760
    %4174 = vmatpush1.msra.mxu0 %v4173
    %4175 = vmatprep.subr.mxu0 0.0
    %v4176 = vand.u32 %v3777, 4294901760
    %v4177 = vsub.f32 %v3777, %v4176
    %v4178 = vand.u32 %v4177, 4294901760
    %v4179 = vsub.f32 %v4177, %v4178
    %v4180 = vand.u32 %v4179, 4294901760
    %4181 = vmatpush1.msra.mxu0 %v4180
    %4182 = vmatprep.subr.mxu0 0.0
    %v4183 = vand.u32 %v3776, 4294901760
    %v4184 = vsub.f32 %v3776, %v4183
    %v4185 = vand.u32 %v4184, 4294901760
    %v4186 = vsub.f32 %v4184, %v4185
    %v4187 = vand.u32 %v4186, 4294901760
    %4188 = vmatpush1.msra.mxu0 %v4187
    %4189 = vmatprep.subr.mxu0 0.0
    %v4190 = vand.u32 %v3775, 4294901760
    %v4191 = vsub.f32 %v3775, %v4190
    %v4192 = vand.u32 %v4191, 4294901760
    %v4193 = vsub.f32 %v4191, %v4192
    %v4194 = vand.u32 %v4193, 4294901760
    %4195 = vmatpush1.msra.mxu0 %v4194
    %4196 = vmatprep.subr.mxu0 0.0
    %v4197 = vand.u32 %v3774, 4294901760
    %v4198 = vsub.f32 %v3774, %v4197
    %v4199 = vand.u32 %v4198, 4294901760
    %v4200 = vsub.f32 %v4198, %v4199
    %v4201 = vand.u32 %v4200, 4294901760
    %4202 = vmatpush1.msra.mxu0 %v4201
    %4203 = vmatprep.subr.mxu0 0.0
    %v4204 = vand.u32 %v3773, 4294901760
    %v4205 = vsub.f32 %v3773, %v4204
    %v4206 = vand.u32 %v4205, 4294901760
    %v4207 = vsub.f32 %v4205, %v4206
    %v4208 = vand.u32 %v4207, 4294901760
    %4209 = vmatpush1.msra.mxu0 %v4208
    %4210 = vmatprep.subr.mxu0 0.0
    %v4211 = vand.u32 %v3772, 4294901760
    %v4212 = vsub.f32 %v3772, %v4211
    %v4213 = vand.u32 %v4212, 4294901760
    %v4214 = vsub.f32 %v4212, %v4213
    %v4215 = vand.u32 %v4214, 4294901760
    %4216 = vmatpush1.msra.mxu0 %v4215
    %4217 = vmatprep.subr.mxu0 0.0
    %v4218 = vand.u32 %v3771, 4294901760
    %v4219 = vsub.f32 %v3771, %v4218
    %v4220 = vand.u32 %v4219, 4294901760
    %v4221 = vsub.f32 %v4219, %v4220
    %v4222 = vand.u32 %v4221, 4294901760
    %4223 = vmatpush1.msra.mxu0 %v4222
    %4224 = vmatprep.subr.mxu0 0.0
    %v4225 = vand.u32 %v3770, 4294901760
    %v4226 = vsub.f32 %v3770, %v4225
    %v4227 = vand.u32 %v4226, 4294901760
    %v4228 = vsub.f32 %v4226, %v4227
    %v4229 = vand.u32 %v4228, 4294901760
    %4230 = vmatpush1.msra.mxu0 %v4229
    %4231 = vmatprep.subr.mxu0 0.0
    %v4232 = vand.u32 %v3801, 4294901760
    %v4233 = vsub.f32 %v3801, %v4232
    %v4234 = vand.u32 %v4233, 4294901760
    %v4235 = vsub.f32 %v4233, %v4234
    %v4236 = vand.u32 %v4235, 4294901760
    %4237 = vmatpush2.msra.mxu0 %v4236
    %4238 = vmatprep.subr.mxu0 0.0
    %v4239 = vand.u32 %v3800, 4294901760
    %v4240 = vsub.f32 %v3800, %v4239
    %v4241 = vand.u32 %v4240, 4294901760
    %v4242 = vsub.f32 %v4240, %v4241
    %v4243 = vand.u32 %v4242, 4294901760
    %4244 = vmatpush2.msra.mxu0 %v4243
    %4245 = vmatprep.subr.mxu0 0.0
    %v4246 = vand.u32 %v3799, 4294901760
    %v4247 = vsub.f32 %v3799, %v4246
    %v4248 = vand.u32 %v4247, 4294901760
    %v4249 = vsub.f32 %v4247, %v4248
    %v4250 = vand.u32 %v4249, 4294901760
    %4251 = vmatpush2.msra.mxu0 %v4250
    %4252 = vmatprep.subr.mxu0 0.0
    %v4253 = vand.u32 %v3798, 4294901760
    %v4254 = vsub.f32 %v3798, %v4253
    %v4255 = vand.u32 %v4254, 4294901760
    %v4256 = vsub.f32 %v4254, %v4255
    %v4257 = vand.u32 %v4256, 4294901760
    %4258 = vmatpush2.msra.mxu0 %v4257
    %4259 = vmatprep.subr.mxu0 0.0
    %v4260 = vand.u32 %v3797, 4294901760
    %v4261 = vsub.f32 %v3797, %v4260
    %v4262 = vand.u32 %v4261, 4294901760
    %v4263 = vsub.f32 %v4261, %v4262
    %v4264 = vand.u32 %v4263, 4294901760
    %4265 = vmatpush2.msra.mxu0 %v4264
    %4266 = vmatprep.subr.mxu0 0.0
    %v4267 = vand.u32 %v3796, 4294901760
    %v4268 = vsub.f32 %v3796, %v4267
    %v4269 = vand.u32 %v4268, 4294901760
    %v4270 = vsub.f32 %v4268, %v4269
    %v4271 = vand.u32 %v4270, 4294901760
    %4272 = vmatpush2.msra.mxu0 %v4271
    %4273 = vmatprep.subr.mxu0 0.0
    %v4274 = vand.u32 %v3795, 4294901760
    %v4275 = vsub.f32 %v3795, %v4274
    %v4276 = vand.u32 %v4275, 4294901760
    %v4277 = vsub.f32 %v4275, %v4276
    %v4278 = vand.u32 %v4277, 4294901760
    %4279 = vmatpush2.msra.mxu0 %v4278
    %4280 = vmatprep.subr.mxu0 0.0
    %v4281 = vand.u32 %v3794, 4294901760
    %v4282 = vsub.f32 %v3794, %v4281
    %v4283 = vand.u32 %v4282, 4294901760
    %v4284 = vsub.f32 %v4282, %v4283
    %v4285 = vand.u32 %v4284, 4294901760
    %4286 = vmatpush2.msra.mxu0 %v4285
    %4287 = vmatprep.subr.mxu0 0.0
    %v4288 = vand.u32 %v3793, 4294901760
    %v4289 = vsub.f32 %v3793, %v4288
    %v4290 = vand.u32 %v4289, 4294901760
    %v4291 = vsub.f32 %v4289, %v4290
    %v4292 = vand.u32 %v4291, 4294901760
    %4293 = vmatpush2.msra.mxu0 %v4292
    %4294 = vmatprep.subr.mxu0 0.0
    %v4295 = vand.u32 %v3792, 4294901760
    %v4296 = vsub.f32 %v3792, %v4295
    %v4297 = vand.u32 %v4296, 4294901760
    %v4298 = vsub.f32 %v4296, %v4297
    %v4299 = vand.u32 %v4298, 4294901760
    %4300 = vmatpush2.msra.mxu0 %v4299
    %4301 = vmatprep.subr.mxu0 0.0
    %v4302 = vand.u32 %v3791, 4294901760
    %v4303 = vsub.f32 %v3791, %v4302
    %v4304 = vand.u32 %v4303, 4294901760
    %v4305 = vsub.f32 %v4303, %v4304
    %v4306 = vand.u32 %v4305, 4294901760
    %4307 = vmatpush2.msra.mxu0 %v4306
    %4308 = vmatprep.subr.mxu0 0.0
    %v4309 = vand.u32 %v3790, 4294901760
    %v4310 = vsub.f32 %v3790, %v4309
    %v4311 = vand.u32 %v4310, 4294901760
    %v4312 = vsub.f32 %v4310, %v4311
    %v4313 = vand.u32 %v4312, 4294901760
    %4314 = vmatpush2.msra.mxu0 %v4313
    %4315 = vmatprep.subr.mxu0 0.0
    %v4316 = vand.u32 %v3789, 4294901760
    %v4317 = vsub.f32 %v3789, %v4316
    %v4318 = vand.u32 %v4317, 4294901760
    %v4319 = vsub.f32 %v4317, %v4318
    %v4320 = vand.u32 %v4319, 4294901760
    %4321 = vmatpush2.msra.mxu0 %v4320
    %4322 = vmatprep.subr.mxu0 0.0
    %v4323 = vand.u32 %v3788, 4294901760
    %v4324 = vsub.f32 %v3788, %v4323
    %v4325 = vand.u32 %v4324, 4294901760
    %v4326 = vsub.f32 %v4324, %v4325
    %v4327 = vand.u32 %v4326, 4294901760
    %4328 = vmatpush2.msra.mxu0 %v4327
    %4329 = vmatprep.subr.mxu0 0.0
    %v4330 = vand.u32 %v3787, 4294901760
    %v4331 = vsub.f32 %v3787, %v4330
    %v4332 = vand.u32 %v4331, 4294901760
    %v4333 = vsub.f32 %v4331, %v4332
    %v4334 = vand.u32 %v4333, 4294901760
    %4335 = vmatpush2.msra.mxu0 %v4334
    %4336 = vmatprep.subr.mxu0 0.0
    %v4337 = vand.u32 %v3786, 4294901760
    %v4338 = vsub.f32 %v3786, %v4337
    %v4339 = vand.u32 %v4338, 4294901760
    %v4340 = vsub.f32 %v4338, %v4339
    %v4341 = vand.u32 %v4340, 4294901760
    %4342 = vmatpush2.msra.mxu0 %v4341
    %v4343 = vand.u32 %v3807, 4294901760
    %4344 = vmatprep.mubr.f32.mxu0 %v4343
    %v4345 = vand.u32 %v3806, 4294901760
    %4346 = vmatmul.mubr.f32.gmra.mxu0 %v4345
    %v4347 = vpop.f32.mrf.mxu0
    %v4348 = vadd.f32 %v4011, %v4347
    %v4349 = vpop.f32.mrf.mxu0
    %v4350 = vand.u32 %v3810, 4294901760
    %4351 = vmatprep.mubr.f32.mxu0 %v4350
    %v4352 = vand.u32 %v3809, 4294901760
    %4353 = vmatmul.mubr.f32.gmra.mxu0 %v4352
    %v4354 = vpop.f32.mrf.mxu0
    %v4355 = vadd.f32 %v4026, %v4354
    %v4356 = vpop.f32.mrf.mxu0
    %v4357 = vand.u32 %v3813, 4294901760
    %4358 = vmatprep.mubr.f32.mxu0 %v4357
    %v4359 = vand.u32 %v3812, 4294901760
    %4360 = vmatmul.mubr.f32.gmra.mxu0 %v4359
    %v4361 = vpop.f32.mrf.mxu0
    %v4362 = vadd.f32 %v4041, %v4361
    %v4363 = vpop.f32.mrf.mxu0
    %v4364 = vand.u32 %v3816, 4294901760
    %4365 = vmatprep.mubr.f32.mxu0 %v4364
    %v4366 = vand.u32 %v3815, 4294901760
    %4367 = vmatmul.mubr.f32.gmra.mxu0 %v4366
    %v4368 = vpop.f32.mrf.mxu0
    %v4369 = vadd.f32 %v4056, %v4368
    %v4370 = vpop.f32.mrf.mxu0
    %v4371 = vand.u32 %v3819, 4294901760
    %4372 = vmatprep.mubr.f32.mxu0 %v4371
    %v4373 = vand.u32 %v3818, 4294901760
    %4374 = vmatmul.mubr.f32.gmra.mxu0 %v4373
    %v4375 = vpop.f32.mrf.mxu0
    %v4376 = vadd.f32 %v4071, %v4375
    %v4377 = vpop.f32.mrf.mxu0
    %v4378 = vand.u32 %v3822, 4294901760
    %4379 = vmatprep.mubr.f32.mxu0 %v4378
    %v4380 = vand.u32 %v3821, 4294901760
    %4381 = vmatmul.mubr.f32.gmra.mxu0 %v4380
    %v4382 = vpop.f32.mrf.mxu0
    %v4383 = vadd.f32 %v4086, %v4382
    %v4384 = vpop.f32.mrf.mxu0
    %v4385 = vand.u32 %v3825, 4294901760
    %4386 = vmatprep.mubr.f32.mxu0 %v4385
    %v4387 = vand.u32 %v3824, 4294901760
    %4388 = vmatmul.mubr.f32.gmra.mxu0 %v4387
    %v4389 = vpop.f32.mrf.mxu0
    %v4390 = vadd.f32 %v4101, %v4389
    %v4391 = vpop.f32.mrf.mxu0
    %v4392 = vand.u32 %v3828, 4294901760
    %4393 = vmatprep.mubr.f32.mxu0 %v4392
    %v4394 = vand.u32 %v3827, 4294901760
    %4395 = vmatmul.mubr.f32.gmra.mxu0 %v4394
    %v4396 = vpop.f32.mrf.mxu0
    %v4397 = vadd.f32 %v4116, %v4396
    %v4398 = vpop.f32.mrf.mxu0
    %4399 = vdwg.mxu0
    %4400 = vmatprep.subr.mxu0 0.0
    %v4401 = vand.u32 %v3785, 4294901760
    %v4402 = vsub.f32 %v3785, %v4401
    %4403 = vmatpush1.msra.mxu0 %v4402
    %4404 = vmatprep.subr.mxu0 0.0
    %v4405 = vand.u32 %v3784, 4294901760
    %v4406 = vsub.f32 %v3784, %v4405
    %4407 = vmatpush1.msra.mxu0 %v4406
    %4408 = vmatprep.subr.mxu0 0.0
    %v4409 = vand.u32 %v3783, 4294901760
    %v4410 = vsub.f32 %v3783, %v4409
    %4411 = vmatpush1.msra.mxu0 %v4410
    %4412 = vmatprep.subr.mxu0 0.0
    %v4413 = vand.u32 %v3782, 4294901760
    %v4414 = vsub.f32 %v3782, %v4413
    %4415 = vmatpush1.msra.mxu0 %v4414
    %4416 = vmatprep.subr.mxu0 0.0
    %v4417 = vand.u32 %v3781, 4294901760
    %v4418 = vsub.f32 %v3781, %v4417
    %4419 = vmatpush1.msra.mxu0 %v4418
    %4420 = vmatprep.subr.mxu0 0.0
    %v4421 = vand.u32 %v3780, 4294901760
    %v4422 = vsub.f32 %v3780, %v4421
    %4423 = vmatpush1.msra.mxu0 %v4422
    %4424 = vmatprep.subr.mxu0 0.0
    %v4425 = vand.u32 %v3779, 4294901760
    %v4426 = vsub.f32 %v3779, %v4425
    %4427 = vmatpush1.msra.mxu0 %v4426
    %4428 = vmatprep.subr.mxu0 0.0
    %v4429 = vand.u32 %v3778, 4294901760
    %v4430 = vsub.f32 %v3778, %v4429
    %4431 = vmatpush1.msra.mxu0 %v4430
    %4432 = vmatprep.subr.mxu0 0.0
    %v4433 = vand.u32 %v3777, 4294901760
    %v4434 = vsub.f32 %v3777, %v4433
    %4435 = vmatpush1.msra.mxu0 %v4434
    %4436 = vmatprep.subr.mxu0 0.0
    %v4437 = vand.u32 %v3776, 4294901760
    %v4438 = vsub.f32 %v3776, %v4437
    %4439 = vmatpush1.msra.mxu0 %v4438
    %4440 = vmatprep.subr.mxu0 0.0
    %v4441 = vand.u32 %v3775, 4294901760
    %v4442 = vsub.f32 %v3775, %v4441
    %4443 = vmatpush1.msra.mxu0 %v4442
    %4444 = vmatprep.subr.mxu0 0.0
    %v4445 = vand.u32 %v3774, 4294901760
    %v4446 = vsub.f32 %v3774, %v4445
    %4447 = vmatpush1.msra.mxu0 %v4446
    %4448 = vmatprep.subr.mxu0 0.0
    %v4449 = vand.u32 %v3773, 4294901760
    %v4450 = vsub.f32 %v3773, %v4449
    %4451 = vmatpush1.msra.mxu0 %v4450
    %4452 = vmatprep.subr.mxu0 0.0
    %v4453 = vand.u32 %v3772, 4294901760
    %v4454 = vsub.f32 %v3772, %v4453
    %4455 = vmatpush1.msra.mxu0 %v4454
    %4456 = vmatprep.subr.mxu0 0.0
    %v4457 = vand.u32 %v3771, 4294901760
    %v4458 = vsub.f32 %v3771, %v4457
    %4459 = vmatpush1.msra.mxu0 %v4458
    %4460 = vmatprep.subr.mxu0 0.0
    %v4461 = vand.u32 %v3770, 4294901760
    %v4462 = vsub.f32 %v3770, %v4461
    %4463 = vmatpush1.msra.mxu0 %v4462
    %4464 = vmatprep.subr.mxu0 0.0
    %v4465 = vand.u32 %v3801, 4294901760
    %v4466 = vsub.f32 %v3801, %v4465
    %4467 = vmatpush2.msra.mxu0 %v4466
    %4468 = vmatprep.subr.mxu0 0.0
    %v4469 = vand.u32 %v3800, 4294901760
    %v4470 = vsub.f32 %v3800, %v4469
    %4471 = vmatpush2.msra.mxu0 %v4470
    %4472 = vmatprep.subr.mxu0 0.0
    %v4473 = vand.u32 %v3799, 4294901760
    %v4474 = vsub.f32 %v3799, %v4473
    %4475 = vmatpush2.msra.mxu0 %v4474
    %4476 = vmatprep.subr.mxu0 0.0
    %v4477 = vand.u32 %v3798, 4294901760
    %v4478 = vsub.f32 %v3798, %v4477
    %4479 = vmatpush2.msra.mxu0 %v4478
    %4480 = vmatprep.subr.mxu0 0.0
    %v4481 = vand.u32 %v3797, 4294901760
    %v4482 = vsub.f32 %v3797, %v4481
    %4483 = vmatpush2.msra.mxu0 %v4482
    %4484 = vmatprep.subr.mxu0 0.0
    %v4485 = vand.u32 %v3796, 4294901760
    %v4486 = vsub.f32 %v3796, %v4485
    %4487 = vmatpush2.msra.mxu0 %v4486
    %4488 = vmatprep.subr.mxu0 0.0
    %v4489 = vand.u32 %v3795, 4294901760
    %v4490 = vsub.f32 %v3795, %v4489
    %4491 = vmatpush2.msra.mxu0 %v4490
    %4492 = vmatprep.subr.mxu0 0.0
    %v4493 = vand.u32 %v3794, 4294901760
    %v4494 = vsub.f32 %v3794, %v4493
    %4495 = vmatpush2.msra.mxu0 %v4494
    %4496 = vmatprep.subr.mxu0 0.0
    %v4497 = vand.u32 %v3793, 4294901760
    %v4498 = vsub.f32 %v3793, %v4497
    %4499 = vmatpush2.msra.mxu0 %v4498
    %4500 = vmatprep.subr.mxu0 0.0
    %v4501 = vand.u32 %v3792, 4294901760
    %v4502 = vsub.f32 %v3792, %v4501
    %4503 = vmatpush2.msra.mxu0 %v4502
    %4504 = vmatprep.subr.mxu0 0.0
    %v4505 = vand.u32 %v3791, 4294901760
    %v4506 = vsub.f32 %v3791, %v4505
    %4507 = vmatpush2.msra.mxu0 %v4506
    %4508 = vmatprep.subr.mxu0 0.0
    %v4509 = vand.u32 %v3790, 4294901760
    %v4510 = vsub.f32 %v3790, %v4509
    %4511 = vmatpush2.msra.mxu0 %v4510
    %4512 = vmatprep.subr.mxu0 0.0
    %v4513 = vand.u32 %v3789, 4294901760
    %v4514 = vsub.f32 %v3789, %v4513
    %4515 = vmatpush2.msra.mxu0 %v4514
    %4516 = vmatprep.subr.mxu0 0.0
    %v4517 = vand.u32 %v3788, 4294901760
    %v4518 = vsub.f32 %v3788, %v4517
    %4519 = vmatpush2.msra.mxu0 %v4518
    %4520 = vmatprep.subr.mxu0 0.0
    %v4521 = vand.u32 %v3787, 4294901760
    %v4522 = vsub.f32 %v3787, %v4521
    %4523 = vmatpush2.msra.mxu0 %v4522
    %4524 = vmatprep.subr.mxu0 0.0
    %v4525 = vand.u32 %v3786, 4294901760
    %v4526 = vsub.f32 %v3786, %v4525
    %4527 = vmatpush2.msra.mxu0 %v4526
    %v4528 = vand.u32 %v3807, 4294901760
    %v4529 = vsub.f32 %v3807, %v4528
    %4530 = vmatprep.mubr.f32.mxu0 %v4529
    %v4531 = vand.u32 %v3806, 4294901760
    %v4532 = vsub.f32 %v3806, %v4531
    %4533 = vmatmul.mubr.f32.gmra.mxu0 %v4532
    %v4534 = vpop.f32.mrf.mxu0
    %v4535 = vadd.f32 %v4348, %v4534
    %v4536 = vpop.f32.mrf.mxu0
    %v4537 = vand.u32 %v3810, 4294901760
    %v4538 = vsub.f32 %v3810, %v4537
    %4539 = vmatprep.mubr.f32.mxu0 %v4538
    %v4540 = vand.u32 %v3809, 4294901760
    %v4541 = vsub.f32 %v3809, %v4540
    %4542 = vmatmul.mubr.f32.gmra.mxu0 %v4541
    %v4543 = vpop.f32.mrf.mxu0
    %v4544 = vadd.f32 %v4355, %v4543
    %v4545 = vpop.f32.mrf.mxu0
    %v4546 = vand.u32 %v3813, 4294901760
    %v4547 = vsub.f32 %v3813, %v4546
    %4548 = vmatprep.mubr.f32.mxu0 %v4547
    %v4549 = vand.u32 %v3812, 4294901760
    %v4550 = vsub.f32 %v3812, %v4549
    %4551 = vmatmul.mubr.f32.gmra.mxu0 %v4550
    %v4552 = vpop.f32.mrf.mxu0
    %v4553 = vadd.f32 %v4362, %v4552
    %v4554 = vpop.f32.mrf.mxu0
    %v4555 = vand.u32 %v3816, 4294901760
    %v4556 = vsub.f32 %v3816, %v4555
    %4557 = vmatprep.mubr.f32.mxu0 %v4556
    %v4558 = vand.u32 %v3815, 4294901760
    %v4559 = vsub.f32 %v3815, %v4558
    %4560 = vmatmul.mubr.f32.gmra.mxu0 %v4559
    %v4561 = vpop.f32.mrf.mxu0
    %v4562 = vadd.f32 %v4369, %v4561
    %v4563 = vpop.f32.mrf.mxu0
    %v4564 = vand.u32 %v3819, 4294901760
    %v4565 = vsub.f32 %v3819, %v4564
    %4566 = vmatprep.mubr.f32.mxu0 %v4565
    %v4567 = vand.u32 %v3818, 4294901760
    %v4568 = vsub.f32 %v3818, %v4567
    %4569 = vmatmul.mubr.f32.gmra.mxu0 %v4568
    %v4570 = vpop.f32.mrf.mxu0
    %v4571 = vadd.f32 %v4376, %v4570
    %v4572 = vpop.f32.mrf.mxu0
    %v4573 = vand.u32 %v3822, 4294901760
    %v4574 = vsub.f32 %v3822, %v4573
    %4575 = vmatprep.mubr.f32.mxu0 %v4574
    %v4576 = vand.u32 %v3821, 4294901760
    %v4577 = vsub.f32 %v3821, %v4576
    %4578 = vmatmul.mubr.f32.gmra.mxu0 %v4577
    %v4579 = vpop.f32.mrf.mxu0
    %v4580 = vadd.f32 %v4383, %v4579
    %v4581 = vpop.f32.mrf.mxu0
    %v4582 = vand.u32 %v3825, 4294901760
    %v4583 = vsub.f32 %v3825, %v4582
    %4584 = vmatprep.mubr.f32.mxu0 %v4583
    %v4585 = vand.u32 %v3824, 4294901760
    %v4586 = vsub.f32 %v3824, %v4585
    %4587 = vmatmul.mubr.f32.gmra.mxu0 %v4586
    %v4588 = vpop.f32.mrf.mxu0
    %v4589 = vadd.f32 %v4390, %v4588
    %v4590 = vpop.f32.mrf.mxu0
    %v4591 = vand.u32 %v3828, 4294901760
    %v4592 = vsub.f32 %v3828, %v4591
    %4593 = vmatprep.mubr.f32.mxu0 %v4592
    %v4594 = vand.u32 %v3827, 4294901760
    %v4595 = vsub.f32 %v3827, %v4594
    %4596 = vmatmul.mubr.f32.gmra.mxu0 %v4595
    %v4597 = vpop.f32.mrf.mxu0
    %v4598 = vadd.f32 %v4397, %v4597
    %v4599 = vpop.f32.mrf.mxu0
    %4600 = vdwg.mxu0
    %4601 = vmatprep.subr.mxu0 0.0
    %v4602 = vand.u32 %v3785, 4294901760
    %4603 = vmatpush1.msra.mxu0 %v4602
    %4604 = vmatprep.subr.mxu0 0.0
    %v4605 = vand.u32 %v3784, 4294901760
    %4606 = vmatpush1.msra.mxu0 %v4605
    %4607 = vmatprep.subr.mxu0 0.0
    %v4608 = vand.u32 %v3783, 4294901760
    %4609 = vmatpush1.msra.mxu0 %v4608
    %4610 = vmatprep.subr.mxu0 0.0
    %v4611 = vand.u32 %v3782, 4294901760
    %4612 = vmatpush1.msra.mxu0 %v4611
    %4613 = vmatprep.subr.mxu0 0.0
    %v4614 = vand.u32 %v3781, 4294901760
    %4615 = vmatpush1.msra.mxu0 %v4614
    %4616 = vmatprep.subr.mxu0 0.0
    %v4617 = vand.u32 %v3780, 4294901760
    %4618 = vmatpush1.msra.mxu0 %v4617
    %4619 = vmatprep.subr.mxu0 0.0
    %v4620 = vand.u32 %v3779, 4294901760
    %4621 = vmatpush1.msra.mxu0 %v4620
    %4622 = vmatprep.subr.mxu0 0.0
    %v4623 = vand.u32 %v3778, 4294901760
    %4624 = vmatpush1.msra.mxu0 %v4623
    %4625 = vmatprep.subr.mxu0 0.0
    %v4626 = vand.u32 %v3777, 4294901760
    %4627 = vmatpush1.msra.mxu0 %v4626
    %4628 = vmatprep.subr.mxu0 0.0
    %v4629 = vand.u32 %v3776, 4294901760
    %4630 = vmatpush1.msra.mxu0 %v4629
    %4631 = vmatprep.subr.mxu0 0.0
    %v4632 = vand.u32 %v3775, 4294901760
    %4633 = vmatpush1.msra.mxu0 %v4632
    %4634 = vmatprep.subr.mxu0 0.0
    %v4635 = vand.u32 %v3774, 4294901760
    %4636 = vmatpush1.msra.mxu0 %v4635
    %4637 = vmatprep.subr.mxu0 0.0
    %v4638 = vand.u32 %v3773, 4294901760
    %4639 = vmatpush1.msra.mxu0 %v4638
    %4640 = vmatprep.subr.mxu0 0.0
    %v4641 = vand.u32 %v3772, 4294901760
    %4642 = vmatpush1.msra.mxu0 %v4641
    %4643 = vmatprep.subr.mxu0 0.0
    %v4644 = vand.u32 %v3771, 4294901760
    %4645 = vmatpush1.msra.mxu0 %v4644
    %4646 = vmatprep.subr.mxu0 0.0
    %v4647 = vand.u32 %v3770, 4294901760
    %4648 = vmatpush1.msra.mxu0 %v4647
    %4649 = vmatprep.subr.mxu0 0.0
    %v4650 = vand.u32 %v3801, 4294901760
    %4651 = vmatpush2.msra.mxu0 %v4650
    %4652 = vmatprep.subr.mxu0 0.0
    %v4653 = vand.u32 %v3800, 4294901760
    %4654 = vmatpush2.msra.mxu0 %v4653
    %4655 = vmatprep.subr.mxu0 0.0
    %v4656 = vand.u32 %v3799, 4294901760
    %4657 = vmatpush2.msra.mxu0 %v4656
    %4658 = vmatprep.subr.mxu0 0.0
    %v4659 = vand.u32 %v3798, 4294901760
    %4660 = vmatpush2.msra.mxu0 %v4659
    %4661 = vmatprep.subr.mxu0 0.0
    %v4662 = vand.u32 %v3797, 4294901760
    %4663 = vmatpush2.msra.mxu0 %v4662
    %4664 = vmatprep.subr.mxu0 0.0
    %v4665 = vand.u32 %v3796, 4294901760
    %4666 = vmatpush2.msra.mxu0 %v4665
    %4667 = vmatprep.subr.mxu0 0.0
    %v4668 = vand.u32 %v3795, 4294901760
    %4669 = vmatpush2.msra.mxu0 %v4668
    %4670 = vmatprep.subr.mxu0 0.0
    %v4671 = vand.u32 %v3794, 4294901760
    %4672 = vmatpush2.msra.mxu0 %v4671
    %4673 = vmatprep.subr.mxu0 0.0
    %v4674 = vand.u32 %v3793, 4294901760
    %4675 = vmatpush2.msra.mxu0 %v4674
    %4676 = vmatprep.subr.mxu0 0.0
    %v4677 = vand.u32 %v3792, 4294901760
    %4678 = vmatpush2.msra.mxu0 %v4677
    %4679 = vmatprep.subr.mxu0 0.0
    %v4680 = vand.u32 %v3791, 4294901760
    %4681 = vmatpush2.msra.mxu0 %v4680
    %4682 = vmatprep.subr.mxu0 0.0
    %v4683 = vand.u32 %v3790, 4294901760
    %4684 = vmatpush2.msra.mxu0 %v4683
    %4685 = vmatprep.subr.mxu0 0.0
    %v4686 = vand.u32 %v3789, 4294901760
    %4687 = vmatpush2.msra.mxu0 %v4686
    %4688 = vmatprep.subr.mxu0 0.0
    %v4689 = vand.u32 %v3788, 4294901760
    %4690 = vmatpush2.msra.mxu0 %v4689
    %4691 = vmatprep.subr.mxu0 0.0
    %v4692 = vand.u32 %v3787, 4294901760
    %4693 = vmatpush2.msra.mxu0 %v4692
    %4694 = vmatprep.subr.mxu0 0.0
    %v4695 = vand.u32 %v3786, 4294901760
    %4696 = vmatpush2.msra.mxu0 %v4695
    %v4697 = vand.u32 %v3807, 4294901760
    %v4698 = vsub.f32 %v3807, %v4697
    %v4699 = vand.u32 %v4698, 4294901760
    %4700 = vmatprep.mubr.f32.mxu0 %v4699
    %v4701 = vand.u32 %v3806, 4294901760
    %v4702 = vsub.f32 %v3806, %v4701
    %v4703 = vand.u32 %v4702, 4294901760
    %4704 = vmatmul.mubr.f32.gmra.mxu0 %v4703
    %v4705 = vpop.f32.mrf.mxu0
    %v4706 = vadd.f32 %v4535, %v4705
    %v4707 = vpop.f32.mrf.mxu0
    %v4708 = vand.u32 %v3810, 4294901760
    %v4709 = vsub.f32 %v3810, %v4708
    %v4710 = vand.u32 %v4709, 4294901760
    %4711 = vmatprep.mubr.f32.mxu0 %v4710
    %v4712 = vand.u32 %v3809, 4294901760
    %v4713 = vsub.f32 %v3809, %v4712
    %v4714 = vand.u32 %v4713, 4294901760
    %4715 = vmatmul.mubr.f32.gmra.mxu0 %v4714
    %v4716 = vpop.f32.mrf.mxu0
    %v4717 = vadd.f32 %v4544, %v4716
    %v4718 = vpop.f32.mrf.mxu0
    %v4719 = vand.u32 %v3813, 4294901760
    %v4720 = vsub.f32 %v3813, %v4719
    %v4721 = vand.u32 %v4720, 4294901760
    %4722 = vmatprep.mubr.f32.mxu0 %v4721
    %v4723 = vand.u32 %v3812, 4294901760
    %v4724 = vsub.f32 %v3812, %v4723
    %v4725 = vand.u32 %v4724, 4294901760
    %4726 = vmatmul.mubr.f32.gmra.mxu0 %v4725
    %v4727 = vpop.f32.mrf.mxu0
    %v4728 = vadd.f32 %v4553, %v4727
    %v4729 = vpop.f32.mrf.mxu0
    %v4730 = vand.u32 %v3816, 4294901760
    %v4731 = vsub.f32 %v3816, %v4730
    %v4732 = vand.u32 %v4731, 4294901760
    %4733 = vmatprep.mubr.f32.mxu0 %v4732
    %v4734 = vand.u32 %v3815, 4294901760
    %v4735 = vsub.f32 %v3815, %v4734
    %v4736 = vand.u32 %v4735, 4294901760
    %4737 = vmatmul.mubr.f32.gmra.mxu0 %v4736
    %v4738 = vpop.f32.mrf.mxu0
    %v4739 = vadd.f32 %v4562, %v4738
    %v4740 = vpop.f32.mrf.mxu0
    %v4741 = vand.u32 %v3819, 4294901760
    %v4742 = vsub.f32 %v3819, %v4741
    %v4743 = vand.u32 %v4742, 4294901760
    %4744 = vmatprep.mubr.f32.mxu0 %v4743
    %v4745 = vand.u32 %v3818, 4294901760
    %v4746 = vsub.f32 %v3818, %v4745
    %v4747 = vand.u32 %v4746, 4294901760
    %4748 = vmatmul.mubr.f32.gmra.mxu0 %v4747
    %v4749 = vpop.f32.mrf.mxu0
    %v4750 = vadd.f32 %v4571, %v4749
    %v4751 = vpop.f32.mrf.mxu0
    %v4752 = vand.u32 %v3822, 4294901760
    %v4753 = vsub.f32 %v3822, %v4752
    %v4754 = vand.u32 %v4753, 4294901760
    %4755 = vmatprep.mubr.f32.mxu0 %v4754
    %v4756 = vand.u32 %v3821, 4294901760
    %v4757 = vsub.f32 %v3821, %v4756
    %v4758 = vand.u32 %v4757, 4294901760
    %4759 = vmatmul.mubr.f32.gmra.mxu0 %v4758
    %v4760 = vpop.f32.mrf.mxu0
    %v4761 = vadd.f32 %v4580, %v4760
    %v4762 = vpop.f32.mrf.mxu0
    %v4763 = vand.u32 %v3825, 4294901760
    %v4764 = vsub.f32 %v3825, %v4763
    %v4765 = vand.u32 %v4764, 4294901760
    %4766 = vmatprep.mubr.f32.mxu0 %v4765
    %v4767 = vand.u32 %v3824, 4294901760
    %v4768 = vsub.f32 %v3824, %v4767
    %v4769 = vand.u32 %v4768, 4294901760
    %4770 = vmatmul.mubr.f32.gmra.mxu0 %v4769
    %v4771 = vpop.f32.mrf.mxu0
    %v4772 = vadd.f32 %v4589, %v4771
    %v4773 = vpop.f32.mrf.mxu0
    %v4774 = vand.u32 %v3828, 4294901760
    %v4775 = vsub.f32 %v3828, %v4774
    %v4776 = vand.u32 %v4775, 4294901760
    %4777 = vmatprep.mubr.f32.mxu0 %v4776
    %v4778 = vand.u32 %v3827, 4294901760
    %v4779 = vsub.f32 %v3827, %v4778
    %v4780 = vand.u32 %v4779, 4294901760
    %4781 = vmatmul.mubr.f32.gmra.mxu0 %v4780
    %v4782 = vpop.f32.mrf.mxu0
    %v4783 = vadd.f32 %v4598, %v4782
    %v4784 = vpop.f32.mrf.mxu0
    %4785 = vdwg.mxu0
    %4786 = vmatprep.subr.mxu0 0.0
    %v4787 = vand.u32 %v3785, 4294901760
    %v4788 = vsub.f32 %v3785, %v4787
    %v4789 = vand.u32 %v4788, 4294901760
    %4790 = vmatpush1.msra.mxu0 %v4789
    %4791 = vmatprep.subr.mxu0 0.0
    %v4792 = vand.u32 %v3784, 4294901760
    %v4793 = vsub.f32 %v3784, %v4792
    %v4794 = vand.u32 %v4793, 4294901760
    %4795 = vmatpush1.msra.mxu0 %v4794
    %4796 = vmatprep.subr.mxu0 0.0
    %v4797 = vand.u32 %v3783, 4294901760
    %v4798 = vsub.f32 %v3783, %v4797
    %v4799 = vand.u32 %v4798, 4294901760
    %4800 = vmatpush1.msra.mxu0 %v4799
    %4801 = vmatprep.subr.mxu0 0.0
    %v4802 = vand.u32 %v3782, 4294901760
    %v4803 = vsub.f32 %v3782, %v4802
    %v4804 = vand.u32 %v4803, 4294901760
    %4805 = vmatpush1.msra.mxu0 %v4804
    %4806 = vmatprep.subr.mxu0 0.0
    %v4807 = vand.u32 %v3781, 4294901760
    %v4808 = vsub.f32 %v3781, %v4807
    %v4809 = vand.u32 %v4808, 4294901760
    %4810 = vmatpush1.msra.mxu0 %v4809
    %4811 = vmatprep.subr.mxu0 0.0
    %v4812 = vand.u32 %v3780, 4294901760
    %v4813 = vsub.f32 %v3780, %v4812
    %v4814 = vand.u32 %v4813, 4294901760
    %4815 = vmatpush1.msra.mxu0 %v4814
    %4816 = vmatprep.subr.mxu0 0.0
    %v4817 = vand.u32 %v3779, 4294901760
    %v4818 = vsub.f32 %v3779, %v4817
    %v4819 = vand.u32 %v4818, 4294901760
    %4820 = vmatpush1.msra.mxu0 %v4819
    %4821 = vmatprep.subr.mxu0 0.0
    %v4822 = vand.u32 %v3778, 4294901760
    %v4823 = vsub.f32 %v3778, %v4822
    %v4824 = vand.u32 %v4823, 4294901760
    %4825 = vmatpush1.msra.mxu0 %v4824
    %4826 = vmatprep.subr.mxu0 0.0
    %v4827 = vand.u32 %v3777, 4294901760
    %v4828 = vsub.f32 %v3777, %v4827
    %v4829 = vand.u32 %v4828, 4294901760
    %4830 = vmatpush1.msra.mxu0 %v4829
    %4831 = vmatprep.subr.mxu0 0.0
    %v4832 = vand.u32 %v3776, 4294901760
    %v4833 = vsub.f32 %v3776, %v4832
    %v4834 = vand.u32 %v4833, 4294901760
    %4835 = vmatpush1.msra.mxu0 %v4834
    %4836 = vmatprep.subr.mxu0 0.0
    %v4837 = vand.u32 %v3775, 4294901760
    %v4838 = vsub.f32 %v3775, %v4837
    %v4839 = vand.u32 %v4838, 4294901760
    %4840 = vmatpush1.msra.mxu0 %v4839
    %4841 = vmatprep.subr.mxu0 0.0
    %v4842 = vand.u32 %v3774, 4294901760
    %v4843 = vsub.f32 %v3774, %v4842
    %v4844 = vand.u32 %v4843, 4294901760
    %4845 = vmatpush1.msra.mxu0 %v4844
    %4846 = vmatprep.subr.mxu0 0.0
    %v4847 = vand.u32 %v3773, 4294901760
    %v4848 = vsub.f32 %v3773, %v4847
    %v4849 = vand.u32 %v4848, 4294901760
    %4850 = vmatpush1.msra.mxu0 %v4849
    %4851 = vmatprep.subr.mxu0 0.0
    %v4852 = vand.u32 %v3772, 4294901760
    %v4853 = vsub.f32 %v3772, %v4852
    %v4854 = vand.u32 %v4853, 4294901760
    %4855 = vmatpush1.msra.mxu0 %v4854
    %4856 = vmatprep.subr.mxu0 0.0
    %v4857 = vand.u32 %v3771, 4294901760
    %v4858 = vsub.f32 %v3771, %v4857
    %v4859 = vand.u32 %v4858, 4294901760
    %4860 = vmatpush1.msra.mxu0 %v4859
    %4861 = vmatprep.subr.mxu0 0.0
    %v4862 = vand.u32 %v3770, 4294901760
    %v4863 = vsub.f32 %v3770, %v4862
    %v4864 = vand.u32 %v4863, 4294901760
    %4865 = vmatpush1.msra.mxu0 %v4864
    %4866 = vmatprep.subr.mxu0 0.0
    %v4867 = vand.u32 %v3801, 4294901760
    %v4868 = vsub.f32 %v3801, %v4867
    %v4869 = vand.u32 %v4868, 4294901760
    %4870 = vmatpush2.msra.mxu0 %v4869
    %4871 = vmatprep.subr.mxu0 0.0
    %v4872 = vand.u32 %v3800, 4294901760
    %v4873 = vsub.f32 %v3800, %v4872
    %v4874 = vand.u32 %v4873, 4294901760
    %4875 = vmatpush2.msra.mxu0 %v4874
    %4876 = vmatprep.subr.mxu0 0.0
    %v4877 = vand.u32 %v3799, 4294901760
    %v4878 = vsub.f32 %v3799, %v4877
    %v4879 = vand.u32 %v4878, 4294901760
    %4880 = vmatpush2.msra.mxu0 %v4879
    %4881 = vmatprep.subr.mxu0 0.0
    %v4882 = vand.u32 %v3798, 4294901760
    %v4883 = vsub.f32 %v3798, %v4882
    %v4884 = vand.u32 %v4883, 4294901760
    %4885 = vmatpush2.msra.mxu0 %v4884
    %4886 = vmatprep.subr.mxu0 0.0
    %v4887 = vand.u32 %v3797, 4294901760
    %v4888 = vsub.f32 %v3797, %v4887
    %v4889 = vand.u32 %v4888, 4294901760
    %4890 = vmatpush2.msra.mxu0 %v4889
    %4891 = vmatprep.subr.mxu0 0.0
    %v4892 = vand.u32 %v3796, 4294901760
    %v4893 = vsub.f32 %v3796, %v4892
    %v4894 = vand.u32 %v4893, 4294901760
    %4895 = vmatpush2.msra.mxu0 %v4894
    %4896 = vmatprep.subr.mxu0 0.0
    %v4897 = vand.u32 %v3795, 4294901760
    %v4898 = vsub.f32 %v3795, %v4897
    %v4899 = vand.u32 %v4898, 4294901760
    %4900 = vmatpush2.msra.mxu0 %v4899
    %4901 = vmatprep.subr.mxu0 0.0
    %v4902 = vand.u32 %v3794, 4294901760
    %v4903 = vsub.f32 %v3794, %v4902
    %v4904 = vand.u32 %v4903, 4294901760
    %4905 = vmatpush2.msra.mxu0 %v4904
    %4906 = vmatprep.subr.mxu0 0.0
    %v4907 = vand.u32 %v3793, 4294901760
    %v4908 = vsub.f32 %v3793, %v4907
    %v4909 = vand.u32 %v4908, 4294901760
    %4910 = vmatpush2.msra.mxu0 %v4909
    %4911 = vmatprep.subr.mxu0 0.0
    %v4912 = vand.u32 %v3792, 4294901760
    %v4913 = vsub.f32 %v3792, %v4912
    %v4914 = vand.u32 %v4913, 4294901760
    %4915 = vmatpush2.msra.mxu0 %v4914
    %4916 = vmatprep.subr.mxu0 0.0
    %v4917 = vand.u32 %v3791, 4294901760
    %v4918 = vsub.f32 %v3791, %v4917
    %v4919 = vand.u32 %v4918, 4294901760
    %4920 = vmatpush2.msra.mxu0 %v4919
    %4921 = vmatprep.subr.mxu0 0.0
    %v4922 = vand.u32 %v3790, 4294901760
    %v4923 = vsub.f32 %v3790, %v4922
    %v4924 = vand.u32 %v4923, 4294901760
    %4925 = vmatpush2.msra.mxu0 %v4924
    %4926 = vmatprep.subr.mxu0 0.0
    %v4927 = vand.u32 %v3789, 4294901760
    %v4928 = vsub.f32 %v3789, %v4927
    %v4929 = vand.u32 %v4928, 4294901760
    %4930 = vmatpush2.msra.mxu0 %v4929
    %4931 = vmatprep.subr.mxu0 0.0
    %v4932 = vand.u32 %v3788, 4294901760
    %v4933 = vsub.f32 %v3788, %v4932
    %v4934 = vand.u32 %v4933, 4294901760
    %4935 = vmatpush2.msra.mxu0 %v4934
    %4936 = vmatprep.subr.mxu0 0.0
    %v4937 = vand.u32 %v3787, 4294901760
    %v4938 = vsub.f32 %v3787, %v4937
    %v4939 = vand.u32 %v4938, 4294901760
    %4940 = vmatpush2.msra.mxu0 %v4939
    %4941 = vmatprep.subr.mxu0 0.0
    %v4942 = vand.u32 %v3786, 4294901760
    %v4943 = vsub.f32 %v3786, %v4942
    %v4944 = vand.u32 %v4943, 4294901760
    %4945 = vmatpush2.msra.mxu0 %v4944
    %v4946 = vand.u32 %v3807, 4294901760
    %4947 = vmatprep.mubr.f32.mxu0 %v4946
    %v4948 = vand.u32 %v3806, 4294901760
    %4949 = vmatmul.mubr.f32.gmra.mxu0 %v4948
    %v4950 = vpop.f32.mrf.mxu0
    %v4951 = vadd.f32 %v4706, %v4950
    %v4952 = vpop.f32.mrf.mxu0
    %v4953 = vand.u32 %v3810, 4294901760
    %4954 = vmatprep.mubr.f32.mxu0 %v4953
    %v4955 = vand.u32 %v3809, 4294901760
    %4956 = vmatmul.mubr.f32.gmra.mxu0 %v4955
    %v4957 = vpop.f32.mrf.mxu0
    %v4958 = vadd.f32 %v4717, %v4957
    %v4959 = vpop.f32.mrf.mxu0
    %v4960 = vand.u32 %v3813, 4294901760
    %4961 = vmatprep.mubr.f32.mxu0 %v4960
    %v4962 = vand.u32 %v3812, 4294901760
    %4963 = vmatmul.mubr.f32.gmra.mxu0 %v4962
    %v4964 = vpop.f32.mrf.mxu0
    %v4965 = vadd.f32 %v4728, %v4964
    %v4966 = vpop.f32.mrf.mxu0
    %v4967 = vand.u32 %v3816, 4294901760
    %4968 = vmatprep.mubr.f32.mxu0 %v4967
    %v4969 = vand.u32 %v3815, 4294901760
    %4970 = vmatmul.mubr.f32.gmra.mxu0 %v4969
    %v4971 = vpop.f32.mrf.mxu0
    %v4972 = vadd.f32 %v4739, %v4971
    %v4973 = vpop.f32.mrf.mxu0
    %v4974 = vand.u32 %v3819, 4294901760
    %4975 = vmatprep.mubr.f32.mxu0 %v4974
    %v4976 = vand.u32 %v3818, 4294901760
    %4977 = vmatmul.mubr.f32.gmra.mxu0 %v4976
    %v4978 = vpop.f32.mrf.mxu0
    %v4979 = vadd.f32 %v4750, %v4978
    %v4980 = vpop.f32.mrf.mxu0
    %v4981 = vand.u32 %v3822, 4294901760
    %4982 = vmatprep.mubr.f32.mxu0 %v4981
    %v4983 = vand.u32 %v3821, 4294901760
    %4984 = vmatmul.mubr.f32.gmra.mxu0 %v4983
    %v4985 = vpop.f32.mrf.mxu0
    %v4986 = vadd.f32 %v4761, %v4985
    %v4987 = vpop.f32.mrf.mxu0
    %v4988 = vand.u32 %v3825, 4294901760
    %4989 = vmatprep.mubr.f32.mxu0 %v4988
    %v4990 = vand.u32 %v3824, 4294901760
    %4991 = vmatmul.mubr.f32.gmra.mxu0 %v4990
    %v4992 = vpop.f32.mrf.mxu0
    %v4993 = vadd.f32 %v4772, %v4992
    %v4994 = vpop.f32.mrf.mxu0
    %v4995 = vand.u32 %v3828, 4294901760
    %4996 = vmatprep.mubr.f32.mxu0 %v4995
    %v4997 = vand.u32 %v3827, 4294901760
    %4998 = vmatmul.mubr.f32.gmra.mxu0 %v4997
    %v4999 = vpop.f32.mrf.mxu0
    %v5000 = vadd.f32 %v4783, %v4999
    %v5001 = vpop.f32.mrf.mxu0
    %5002 = vdwg.mxu0
    %5003 = vmatprep.subr.mxu0 0.0
    %v5004 = vand.u32 %v3785, 4294901760
    %5005 = vmatpush1.msra.mxu0 %v5004
    %5006 = vmatprep.subr.mxu0 0.0
    %v5007 = vand.u32 %v3784, 4294901760
    %5008 = vmatpush1.msra.mxu0 %v5007
    %5009 = vmatprep.subr.mxu0 0.0
    %v5010 = vand.u32 %v3783, 4294901760
    %5011 = vmatpush1.msra.mxu0 %v5010
    %5012 = vmatprep.subr.mxu0 0.0
    %v5013 = vand.u32 %v3782, 4294901760
    %5014 = vmatpush1.msra.mxu0 %v5013
    %5015 = vmatprep.subr.mxu0 0.0
    %v5016 = vand.u32 %v3781, 4294901760
    %5017 = vmatpush1.msra.mxu0 %v5016
    %5018 = vmatprep.subr.mxu0 0.0
    %v5019 = vand.u32 %v3780, 4294901760
    %5020 = vmatpush1.msra.mxu0 %v5019
    %5021 = vmatprep.subr.mxu0 0.0
    %v5022 = vand.u32 %v3779, 4294901760
    %5023 = vmatpush1.msra.mxu0 %v5022
    %5024 = vmatprep.subr.mxu0 0.0
    %v5025 = vand.u32 %v3778, 4294901760
    %5026 = vmatpush1.msra.mxu0 %v5025
    %5027 = vmatprep.subr.mxu0 0.0
    %v5028 = vand.u32 %v3777, 4294901760
    %5029 = vmatpush1.msra.mxu0 %v5028
    %5030 = vmatprep.subr.mxu0 0.0
    %v5031 = vand.u32 %v3776, 4294901760
    %5032 = vmatpush1.msra.mxu0 %v5031
    %5033 = vmatprep.subr.mxu0 0.0
    %v5034 = vand.u32 %v3775, 4294901760
    %5035 = vmatpush1.msra.mxu0 %v5034
    %5036 = vmatprep.subr.mxu0 0.0
    %v5037 = vand.u32 %v3774, 4294901760
    %5038 = vmatpush1.msra.mxu0 %v5037
    %5039 = vmatprep.subr.mxu0 0.0
    %v5040 = vand.u32 %v3773, 4294901760
    %5041 = vmatpush1.msra.mxu0 %v5040
    %5042 = vmatprep.subr.mxu0 0.0
    %v5043 = vand.u32 %v3772, 4294901760
    %5044 = vmatpush1.msra.mxu0 %v5043
    %5045 = vmatprep.subr.mxu0 0.0
    %v5046 = vand.u32 %v3771, 4294901760
    %5047 = vmatpush1.msra.mxu0 %v5046
    %5048 = vmatprep.subr.mxu0 0.0
    %v5049 = vand.u32 %v3770, 4294901760
    %5050 = vmatpush1.msra.mxu0 %v5049
    %5051 = vmatprep.subr.mxu0 0.0
    %v5052 = vand.u32 %v3801, 4294901760
    %5053 = vmatpush2.msra.mxu0 %v5052
    %5054 = vmatprep.subr.mxu0 0.0
    %v5055 = vand.u32 %v3800, 4294901760
    %5056 = vmatpush2.msra.mxu0 %v5055
    %5057 = vmatprep.subr.mxu0 0.0
    %v5058 = vand.u32 %v3799, 4294901760
    %5059 = vmatpush2.msra.mxu0 %v5058
    %5060 = vmatprep.subr.mxu0 0.0
    %v5061 = vand.u32 %v3798, 4294901760
    %5062 = vmatpush2.msra.mxu0 %v5061
    %5063 = vmatprep.subr.mxu0 0.0
    %v5064 = vand.u32 %v3797, 4294901760
    %5065 = vmatpush2.msra.mxu0 %v5064
    %5066 = vmatprep.subr.mxu0 0.0
    %v5067 = vand.u32 %v3796, 4294901760
    %5068 = vmatpush2.msra.mxu0 %v5067
    %5069 = vmatprep.subr.mxu0 0.0
    %v5070 = vand.u32 %v3795, 4294901760
    %5071 = vmatpush2.msra.mxu0 %v5070
    %5072 = vmatprep.subr.mxu0 0.0
    %v5073 = vand.u32 %v3794, 4294901760
    %5074 = vmatpush2.msra.mxu0 %v5073
    %5075 = vmatprep.subr.mxu0 0.0
    %v5076 = vand.u32 %v3793, 4294901760
    %5077 = vmatpush2.msra.mxu0 %v5076
    %5078 = vmatprep.subr.mxu0 0.0
    %v5079 = vand.u32 %v3792, 4294901760
    %5080 = vmatpush2.msra.mxu0 %v5079
    %5081 = vmatprep.subr.mxu0 0.0
    %v5082 = vand.u32 %v3791, 4294901760
    %5083 = vmatpush2.msra.mxu0 %v5082
    %5084 = vmatprep.subr.mxu0 0.0
    %v5085 = vand.u32 %v3790, 4294901760
    %5086 = vmatpush2.msra.mxu0 %v5085
    %5087 = vmatprep.subr.mxu0 0.0
    %v5088 = vand.u32 %v3789, 4294901760
    %5089 = vmatpush2.msra.mxu0 %v5088
    %5090 = vmatprep.subr.mxu0 0.0
    %v5091 = vand.u32 %v3788, 4294901760
    %5092 = vmatpush2.msra.mxu0 %v5091
    %5093 = vmatprep.subr.mxu0 0.0
    %v5094 = vand.u32 %v3787, 4294901760
    %5095 = vmatpush2.msra.mxu0 %v5094
    %5096 = vmatprep.subr.mxu0 0.0
    %v5097 = vand.u32 %v3786, 4294901760
    %5098 = vmatpush2.msra.mxu0 %v5097
    %v5099 = vand.u32 %v3807, 4294901760
    %5100 = vmatprep.mubr.f32.mxu0 %v5099
    %v5101 = vand.u32 %v3806, 4294901760
    %5102 = vmatmul.mubr.f32.gmra.mxu0 %v5101
    %v5103 = vpop.f32.mrf.mxu0
    %v5104 = vadd.f32 %v4951, %v5103
    %v5105 = vpop.f32.mrf.mxu0
    %v5106 = vand.u32 %v3810, 4294901760
    %5107 = vmatprep.mubr.f32.mxu0 %v5106
    %v5108 = vand.u32 %v3809, 4294901760
    %5109 = vmatmul.mubr.f32.gmra.mxu0 %v5108
    %v5110 = vpop.f32.mrf.mxu0
    %v5111 = vadd.f32 %v4958, %v5110
    %v5112 = vpop.f32.mrf.mxu0
    %v5113 = vand.u32 %v3813, 4294901760
    %5114 = vmatprep.mubr.f32.mxu0 %v5113
    %v5115 = vand.u32 %v3812, 4294901760
    %5116 = vmatmul.mubr.f32.gmra.mxu0 %v5115
    %v5117 = vpop.f32.mrf.mxu0
    %v5118 = vadd.f32 %v4965, %v5117
    %v5119 = vpop.f32.mrf.mxu0
    %v5120 = vand.u32 %v3816, 4294901760
    %5121 = vmatprep.mubr.f32.mxu0 %v5120
    %v5122 = vand.u32 %v3815, 4294901760
    %5123 = vmatmul.mubr.f32.gmra.mxu0 %v5122
    %v5124 = vpop.f32.mrf.mxu0
    %v5125 = vadd.f32 %v4972, %v5124
    %v5126 = vpop.f32.mrf.mxu0
    %v5127 = vand.u32 %v3819, 4294901760
    %5128 = vmatprep.mubr.f32.mxu0 %v5127
    %v5129 = vand.u32 %v3818, 4294901760
    %5130 = vmatmul.mubr.f32.gmra.mxu0 %v5129
    %v5131 = vpop.f32.mrf.mxu0
    %v5132 = vadd.f32 %v4979, %v5131
    %v5133 = vpop.f32.mrf.mxu0
    %v5134 = vand.u32 %v3822, 4294901760
    %5135 = vmatprep.mubr.f32.mxu0 %v5134
    %v5136 = vand.u32 %v3821, 4294901760
    %5137 = vmatmul.mubr.f32.gmra.mxu0 %v5136
    %v5138 = vpop.f32.mrf.mxu0
    %v5139 = vadd.f32 %v4986, %v5138
    %v5140 = vpop.f32.mrf.mxu0
    %v5141 = vand.u32 %v3825, 4294901760
    %5142 = vmatprep.mubr.f32.mxu0 %v5141
    %v5143 = vand.u32 %v3824, 4294901760
    %5144 = vmatmul.mubr.f32.gmra.mxu0 %v5143
    %v5145 = vpop.f32.mrf.mxu0
    %v5146 = vadd.f32 %v4993, %v5145
    %v5147 = vpop.f32.mrf.mxu0
    %v5148 = vand.u32 %v3828, 4294901760
    %5149 = vmatprep.mubr.f32.mxu0 %v5148
    %v5150 = vand.u32 %v3827, 4294901760
    %5151 = vmatmul.mubr.f32.gmra.mxu0 %v5150
    %v5152 = vpop.f32.mrf.mxu0
    %v5153 = vadd.f32 %v5000, %v5152
    %v5154 = vpop.f32.mrf.mxu0
    %5155 = vdwg.mxu0
    %5156 = vmatprep.subr.mxu0 0.0
    %5157 = vmatpush1.msra.mxu0 0.0
    %5158 = vmatprep.subr.mxu0 0.0
    %5159 = vmatpush1.msra.mxu0 0.0
    %5160 = vmatprep.subr.mxu0 0.0
    %5161 = vmatpush1.msra.mxu0 0.0
    %5162 = vmatprep.subr.mxu0 0.0
    %5163 = vmatpush1.msra.mxu0 0.0
    %5164 = vmatprep.subr.mxu0 0.0
    %5165 = vmatpush1.msra.mxu0 0.0
    %5166 = vmatprep.subr.mxu0 0.0
    %5167 = vmatpush1.msra.mxu0 0.0
    %5168 = vmatprep.subr.mxu0 0.0
    %5169 = vmatpush1.msra.mxu0 0.0
    %5170 = vmatprep.subr.mxu0 0.0
    %5171 = vmatpush1.msra.mxu0 0.0
    %5172 = vmatprep.subr.mxu0 0.0
    %5173 = vmatpush1.msra.mxu0 0.0
    %5174 = vmatprep.subr.mxu0 0.0
    %5175 = vmatpush1.msra.mxu0 0.0
    %5176 = vmatprep.subr.mxu0 0.0
    %5177 = vmatpush1.msra.mxu0 0.0
    %5178 = vmatprep.subr.mxu0 0.0
    %5179 = vmatpush1.msra.mxu0 0.0
    %5180 = vmatprep.subr.mxu0 0.0
    %v5181 = vand.u32 %v3805, 4294901760
    %5182 = vmatpush1.msra.mxu0 %v5181
    %5183 = vmatprep.subr.mxu0 0.0
    %v5184 = vand.u32 %v3804, 4294901760
    %5185 = vmatpush1.msra.mxu0 %v5184
    %5186 = vmatprep.subr.mxu0 0.0
    %v5187 = vand.u32 %v3803, 4294901760
    %5188 = vmatpush1.msra.mxu0 %v5187
    %5189 = vmatprep.subr.mxu0 0.0
    %v5190 = vand.u32 %v3802, 4294901760
    %5191 = vmatpush1.msra.mxu0 %v5190
    %5192 = vmatprep.subr.mxu0 0.0
    %5193 = vmatpush2.msra.mxu0 0.0
    %5194 = vmatprep.subr.mxu0 0.0
    %5195 = vmatpush2.msra.mxu0 0.0
    %5196 = vmatprep.subr.mxu0 0.0
    %5197 = vmatpush2.msra.mxu0 0.0
    %5198 = vmatprep.subr.mxu0 0.0
    %5199 = vmatpush2.msra.mxu0 0.0
    %5200 = vmatprep.subr.mxu0 0.0
    %5201 = vmatpush2.msra.mxu0 0.0
    %5202 = vmatprep.subr.mxu0 0.0
    %5203 = vmatpush2.msra.mxu0 0.0
    %5204 = vmatprep.subr.mxu0 0.0
    %5205 = vmatpush2.msra.mxu0 0.0
    %5206 = vmatprep.subr.mxu0 0.0
    %5207 = vmatpush2.msra.mxu0 0.0
    %5208 = vmatprep.subr.mxu0 0.0
    %5209 = vmatpush2.msra.mxu0 0.0
    %5210 = vmatprep.subr.mxu0 0.0
    %5211 = vmatpush2.msra.mxu0 0.0
    %5212 = vmatprep.subr.mxu0 0.0
    %5213 = vmatpush2.msra.mxu0 0.0
    %5214 = vmatprep.subr.mxu0 0.0
    %5215 = vmatpush2.msra.mxu0 0.0
    %5216 = vmatprep.subr.mxu0 0.0
    %5217 = vmatpush2.msra.mxu0 0.0
    %5218 = vmatprep.subr.mxu0 0.0
    %5219 = vmatpush2.msra.mxu0 0.0
    %5220 = vmatprep.subr.mxu0 0.0
    %5221 = vmatpush2.msra.mxu0 0.0
    %5222 = vmatprep.subr.mxu0 0.0
    %5223 = vmatpush2.msra.mxu0 0.0
    %5224 = vmatprep.mubr.f32.mxu0 0.0
    %v5225 = vand.u32 %v3879, 4294901760
    %v5226 = vsub.f32 %v3879, %v5225
    %v5227 = vand.u32 %v5226, 4294901760
    %v5228 = vsub.f32 %v5226, %v5227
    %v5229 = vand.u32 %v5228, 4294901760
    %5230 = vmatmul.mubr.f32.gmra.mxu0 %v5229
    %v5231 = vpop.f32.mrf.mxu0
    %v5232 = vadd.f32 %v5104, %v5231
    %v5233 = vpop.f32.mrf.mxu0
    %5234 = vmatprep.mubr.f32.mxu0 0.0
    %v5235 = vand.u32 %v3882, 4294901760
    %v5236 = vsub.f32 %v3882, %v5235
    %v5237 = vand.u32 %v5236, 4294901760
    %v5238 = vsub.f32 %v5236, %v5237
    %v5239 = vand.u32 %v5238, 4294901760
    %5240 = vmatmul.mubr.f32.gmra.mxu0 %v5239
    %v5241 = vpop.f32.mrf.mxu0
    %v5242 = vadd.f32 %v5111, %v5241
    %v5243 = vpop.f32.mrf.mxu0
    %5244 = vmatprep.mubr.f32.mxu0 0.0
    %v5245 = vand.u32 %v3885, 4294901760
    %v5246 = vsub.f32 %v3885, %v5245
    %v5247 = vand.u32 %v5246, 4294901760
    %v5248 = vsub.f32 %v5246, %v5247
    %v5249 = vand.u32 %v5248, 4294901760
    %5250 = vmatmul.mubr.f32.gmra.mxu0 %v5249
    %v5251 = vpop.f32.mrf.mxu0
    %v5252 = vadd.f32 %v5118, %v5251
    %v5253 = vpop.f32.mrf.mxu0
    %5254 = vmatprep.mubr.f32.mxu0 0.0
    %v5255 = vand.u32 %v3888, 4294901760
    %v5256 = vsub.f32 %v3888, %v5255
    %v5257 = vand.u32 %v5256, 4294901760
    %v5258 = vsub.f32 %v5256, %v5257
    %v5259 = vand.u32 %v5258, 4294901760
    %5260 = vmatmul.mubr.f32.gmra.mxu0 %v5259
    %v5261 = vpop.f32.mrf.mxu0
    %v5262 = vadd.f32 %v5125, %v5261
    %v5263 = vpop.f32.mrf.mxu0
    %5264 = vmatprep.mubr.f32.mxu0 0.0
    %v5265 = vand.u32 %v3891, 4294901760
    %v5266 = vsub.f32 %v3891, %v5265
    %v5267 = vand.u32 %v5266, 4294901760
    %v5268 = vsub.f32 %v5266, %v5267
    %v5269 = vand.u32 %v5268, 4294901760
    %5270 = vmatmul.mubr.f32.gmra.mxu0 %v5269
    %v5271 = vpop.f32.mrf.mxu0
    %v5272 = vadd.f32 %v5132, %v5271
    %v5273 = vpop.f32.mrf.mxu0
    %5274 = vmatprep.mubr.f32.mxu0 0.0
    %v5275 = vand.u32 %v3894, 4294901760
    %v5276 = vsub.f32 %v3894, %v5275
    %v5277 = vand.u32 %v5276, 4294901760
    %v5278 = vsub.f32 %v5276, %v5277
    %v5279 = vand.u32 %v5278, 4294901760
    %5280 = vmatmul.mubr.f32.gmra.mxu0 %v5279
    %v5281 = vpop.f32.mrf.mxu0
    %v5282 = vadd.f32 %v5139, %v5281
    %v5283 = vpop.f32.mrf.mxu0
    %5284 = vmatprep.mubr.f32.mxu0 0.0
    %v5285 = vand.u32 %v3897, 4294901760
    %v5286 = vsub.f32 %v3897, %v5285
    %v5287 = vand.u32 %v5286, 4294901760
    %v5288 = vsub.f32 %v5286, %v5287
    %v5289 = vand.u32 %v5288, 4294901760
    %5290 = vmatmul.mubr.f32.gmra.mxu0 %v5289
    %v5291 = vpop.f32.mrf.mxu0
    %v5292 = vadd.f32 %v5146, %v5291
    %v5293 = vpop.f32.mrf.mxu0
    %5294 = vmatprep.mubr.f32.mxu0 0.0
    %v5295 = vand.u32 %v3900, 4294901760
    %v5296 = vsub.f32 %v3900, %v5295
    %v5297 = vand.u32 %v5296, 4294901760
    %v5298 = vsub.f32 %v5296, %v5297
    %v5299 = vand.u32 %v5298, 4294901760
    %5300 = vmatmul.mubr.f32.gmra.mxu0 %v5299
    %v5301 = vpop.f32.mrf.mxu0
    %v5302 = vadd.f32 %v5153, %v5301
    %v5303 = vpop.f32.mrf.mxu0
    %5304 = vdwg.mxu0
    %5305 = vmatprep.subr.mxu0 0.0
    %5306 = vmatpush1.msra.mxu0 0.0
    %5307 = vmatprep.subr.mxu0 0.0
    %5308 = vmatpush1.msra.mxu0 0.0
    %5309 = vmatprep.subr.mxu0 0.0
    %5310 = vmatpush1.msra.mxu0 0.0
    %5311 = vmatprep.subr.mxu0 0.0
    %5312 = vmatpush1.msra.mxu0 0.0
    %5313 = vmatprep.subr.mxu0 0.0
    %5314 = vmatpush1.msra.mxu0 0.0
    %5315 = vmatprep.subr.mxu0 0.0
    %5316 = vmatpush1.msra.mxu0 0.0
    %5317 = vmatprep.subr.mxu0 0.0
    %5318 = vmatpush1.msra.mxu0 0.0
    %5319 = vmatprep.subr.mxu0 0.0
    %5320 = vmatpush1.msra.mxu0 0.0
    %5321 = vmatprep.subr.mxu0 0.0
    %5322 = vmatpush1.msra.mxu0 0.0
    %5323 = vmatprep.subr.mxu0 0.0
    %5324 = vmatpush1.msra.mxu0 0.0
    %5325 = vmatprep.subr.mxu0 0.0
    %5326 = vmatpush1.msra.mxu0 0.0
    %5327 = vmatprep.subr.mxu0 0.0
    %5328 = vmatpush1.msra.mxu0 0.0
    %5329 = vmatprep.subr.mxu0 0.0
    %v5330 = vand.u32 %v3805, 4294901760
    %v5331 = vsub.f32 %v3805, %v5330
    %v5332 = vand.u32 %v5331, 4294901760
    %v5333 = vsub.f32 %v5331, %v5332
    %v5334 = vand.u32 %v5333, 4294901760
    %5335 = vmatpush1.msra.mxu0 %v5334
    %5336 = vmatprep.subr.mxu0 0.0
    %v5337 = vand.u32 %v3804, 4294901760
    %v5338 = vsub.f32 %v3804, %v5337
    %v5339 = vand.u32 %v5338, 4294901760
    %v5340 = vsub.f32 %v5338, %v5339
    %v5341 = vand.u32 %v5340, 4294901760
    %5342 = vmatpush1.msra.mxu0 %v5341
    %5343 = vmatprep.subr.mxu0 0.0
    %v5344 = vand.u32 %v3803, 4294901760
    %v5345 = vsub.f32 %v3803, %v5344
    %v5346 = vand.u32 %v5345, 4294901760
    %v5347 = vsub.f32 %v5345, %v5346
    %v5348 = vand.u32 %v5347, 4294901760
    %5349 = vmatpush1.msra.mxu0 %v5348
    %5350 = vmatprep.subr.mxu0 0.0
    %v5351 = vand.u32 %v3802, 4294901760
    %v5352 = vsub.f32 %v3802, %v5351
    %v5353 = vand.u32 %v5352, 4294901760
    %v5354 = vsub.f32 %v5352, %v5353
    %v5355 = vand.u32 %v5354, 4294901760
    %5356 = vmatpush1.msra.mxu0 %v5355
    %5357 = vmatprep.subr.mxu0 0.0
    %5358 = vmatpush2.msra.mxu0 0.0
    %5359 = vmatprep.subr.mxu0 0.0
    %5360 = vmatpush2.msra.mxu0 0.0
    %5361 = vmatprep.subr.mxu0 0.0
    %5362 = vmatpush2.msra.mxu0 0.0
    %5363 = vmatprep.subr.mxu0 0.0
    %5364 = vmatpush2.msra.mxu0 0.0
    %5365 = vmatprep.subr.mxu0 0.0
    %5366 = vmatpush2.msra.mxu0 0.0
    %5367 = vmatprep.subr.mxu0 0.0
    %5368 = vmatpush2.msra.mxu0 0.0
    %5369 = vmatprep.subr.mxu0 0.0
    %5370 = vmatpush2.msra.mxu0 0.0
    %5371 = vmatprep.subr.mxu0 0.0
    %5372 = vmatpush2.msra.mxu0 0.0
    %5373 = vmatprep.subr.mxu0 0.0
    %5374 = vmatpush2.msra.mxu0 0.0
    %5375 = vmatprep.subr.mxu0 0.0
    %5376 = vmatpush2.msra.mxu0 0.0
    %5377 = vmatprep.subr.mxu0 0.0
    %5378 = vmatpush2.msra.mxu0 0.0
    %5379 = vmatprep.subr.mxu0 0.0
    %5380 = vmatpush2.msra.mxu0 0.0
    %5381 = vmatprep.subr.mxu0 0.0
    %5382 = vmatpush2.msra.mxu0 0.0
    %5383 = vmatprep.subr.mxu0 0.0
    %5384 = vmatpush2.msra.mxu0 0.0
    %5385 = vmatprep.subr.mxu0 0.0
    %5386 = vmatpush2.msra.mxu0 0.0
    %5387 = vmatprep.subr.mxu0 0.0
    %5388 = vmatpush2.msra.mxu0 0.0
    %5389 = vmatprep.mubr.f32.mxu0 0.0
    %v5390 = vand.u32 %v3879, 4294901760
    %5391 = vmatmul.mubr.f32.gmra.mxu0 %v5390
    %v5392 = vpop.f32.mrf.mxu0
    %v5393 = vadd.f32 %v5232, %v5392
    %v5394 = vpop.f32.mrf.mxu0
    %5395 = vmatprep.mubr.f32.mxu0 0.0
    %v5396 = vand.u32 %v3882, 4294901760
    %5397 = vmatmul.mubr.f32.gmra.mxu0 %v5396
    %v5398 = vpop.f32.mrf.mxu0
    %v5399 = vadd.f32 %v5242, %v5398
    %v5400 = vpop.f32.mrf.mxu0
    %5401 = vmatprep.mubr.f32.mxu0 0.0
    %v5402 = vand.u32 %v3885, 4294901760
    %5403 = vmatmul.mubr.f32.gmra.mxu0 %v5402
    %v5404 = vpop.f32.mrf.mxu0
    %v5405 = vadd.f32 %v5252, %v5404
    %v5406 = vpop.f32.mrf.mxu0
    %5407 = vmatprep.mubr.f32.mxu0 0.0
    %v5408 = vand.u32 %v3888, 4294901760
    %5409 = vmatmul.mubr.f32.gmra.mxu0 %v5408
    %v5410 = vpop.f32.mrf.mxu0
    %v5411 = vadd.f32 %v5262, %v5410
    %v5412 = vpop.f32.mrf.mxu0
    %5413 = vmatprep.mubr.f32.mxu0 0.0
    %v5414 = vand.u32 %v3891, 4294901760
    %5415 = vmatmul.mubr.f32.gmra.mxu0 %v5414
    %v5416 = vpop.f32.mrf.mxu0
    %v5417 = vadd.f32 %v5272, %v5416
    %v5418 = vpop.f32.mrf.mxu0
    %5419 = vmatprep.mubr.f32.mxu0 0.0
    %v5420 = vand.u32 %v3894, 4294901760
    %5421 = vmatmul.mubr.f32.gmra.mxu0 %v5420
    %v5422 = vpop.f32.mrf.mxu0
    %v5423 = vadd.f32 %v5282, %v5422
    %v5424 = vpop.f32.mrf.mxu0
    %5425 = vmatprep.mubr.f32.mxu0 0.0
    %v5426 = vand.u32 %v3897, 4294901760
    %5427 = vmatmul.mubr.f32.gmra.mxu0 %v5426
    %v5428 = vpop.f32.mrf.mxu0
    %v5429 = vadd.f32 %v5292, %v5428
    %v5430 = vpop.f32.mrf.mxu0
    %5431 = vmatprep.mubr.f32.mxu0 0.0
    %v5432 = vand.u32 %v3900, 4294901760
    %5433 = vmatmul.mubr.f32.gmra.mxu0 %v5432
    %v5434 = vpop.f32.mrf.mxu0
    %v5435 = vadd.f32 %v5302, %v5434
    %v5436 = vpop.f32.mrf.mxu0
    %5437 = vdwg.mxu0
    %5438 = vmatprep.subr.mxu0 0.0
    %5439 = vmatpush1.msra.mxu0 0.0
    %5440 = vmatprep.subr.mxu0 0.0
    %5441 = vmatpush1.msra.mxu0 0.0
    %5442 = vmatprep.subr.mxu0 0.0
    %5443 = vmatpush1.msra.mxu0 0.0
    %5444 = vmatprep.subr.mxu0 0.0
    %5445 = vmatpush1.msra.mxu0 0.0
    %5446 = vmatprep.subr.mxu0 0.0
    %5447 = vmatpush1.msra.mxu0 0.0
    %5448 = vmatprep.subr.mxu0 0.0
    %5449 = vmatpush1.msra.mxu0 0.0
    %5450 = vmatprep.subr.mxu0 0.0
    %5451 = vmatpush1.msra.mxu0 0.0
    %5452 = vmatprep.subr.mxu0 0.0
    %5453 = vmatpush1.msra.mxu0 0.0
    %5454 = vmatprep.subr.mxu0 0.0
    %5455 = vmatpush1.msra.mxu0 0.0
    %5456 = vmatprep.subr.mxu0 0.0
    %5457 = vmatpush1.msra.mxu0 0.0
    %5458 = vmatprep.subr.mxu0 0.0
    %5459 = vmatpush1.msra.mxu0 0.0
    %5460 = vmatprep.subr.mxu0 0.0
    %5461 = vmatpush1.msra.mxu0 0.0
    %5462 = vmatprep.subr.mxu0 0.0
    %v5463 = vand.u32 %v3805, 4294901760
    %v5464 = vsub.f32 %v3805, %v5463
    %5465 = vmatpush1.msra.mxu0 %v5464
    %5466 = vmatprep.subr.mxu0 0.0
    %v5467 = vand.u32 %v3804, 4294901760
    %v5468 = vsub.f32 %v3804, %v5467
    %5469 = vmatpush1.msra.mxu0 %v5468
    %5470 = vmatprep.subr.mxu0 0.0
    %v5471 = vand.u32 %v3803, 4294901760
    %v5472 = vsub.f32 %v3803, %v5471
    %5473 = vmatpush1.msra.mxu0 %v5472
    %5474 = vmatprep.subr.mxu0 0.0
    %v5475 = vand.u32 %v3802, 4294901760
    %v5476 = vsub.f32 %v3802, %v5475
    %5477 = vmatpush1.msra.mxu0 %v5476
    %5478 = vmatprep.subr.mxu0 0.0
    %5479 = vmatpush2.msra.mxu0 0.0
    %5480 = vmatprep.subr.mxu0 0.0
    %5481 = vmatpush2.msra.mxu0 0.0
    %5482 = vmatprep.subr.mxu0 0.0
    %5483 = vmatpush2.msra.mxu0 0.0
    %5484 = vmatprep.subr.mxu0 0.0
    %5485 = vmatpush2.msra.mxu0 0.0
    %5486 = vmatprep.subr.mxu0 0.0
    %5487 = vmatpush2.msra.mxu0 0.0
    %5488 = vmatprep.subr.mxu0 0.0
    %5489 = vmatpush2.msra.mxu0 0.0
    %5490 = vmatprep.subr.mxu0 0.0
    %5491 = vmatpush2.msra.mxu0 0.0
    %5492 = vmatprep.subr.mxu0 0.0
    %5493 = vmatpush2.msra.mxu0 0.0
    %5494 = vmatprep.subr.mxu0 0.0
    %5495 = vmatpush2.msra.mxu0 0.0
    %5496 = vmatprep.subr.mxu0 0.0
    %5497 = vmatpush2.msra.mxu0 0.0
    %5498 = vmatprep.subr.mxu0 0.0
    %5499 = vmatpush2.msra.mxu0 0.0
    %5500 = vmatprep.subr.mxu0 0.0
    %5501 = vmatpush2.msra.mxu0 0.0
    %5502 = vmatprep.subr.mxu0 0.0
    %5503 = vmatpush2.msra.mxu0 0.0
    %5504 = vmatprep.subr.mxu0 0.0
    %5505 = vmatpush2.msra.mxu0 0.0
    %5506 = vmatprep.subr.mxu0 0.0
    %5507 = vmatpush2.msra.mxu0 0.0
    %5508 = vmatprep.subr.mxu0 0.0
    %5509 = vmatpush2.msra.mxu0 0.0
    %5510 = vmatprep.mubr.f32.mxu0 0.0
    %v5511 = vand.u32 %v3879, 4294901760
    %v5512 = vsub.f32 %v3879, %v5511
    %5513 = vmatmul.mubr.f32.gmra.mxu0 %v5512
    %v5514 = vpop.f32.mrf.mxu0
    %v5515 = vadd.f32 %v5393, %v5514
    %v5516 = vpop.f32.mrf.mxu0
    %5517 = vmatprep.mubr.f32.mxu0 0.0
    %v5518 = vand.u32 %v3882, 4294901760
    %v5519 = vsub.f32 %v3882, %v5518
    %5520 = vmatmul.mubr.f32.gmra.mxu0 %v5519
    %v5521 = vpop.f32.mrf.mxu0
    %v5522 = vadd.f32 %v5399, %v5521
    %v5523 = vpop.f32.mrf.mxu0
    %5524 = vmatprep.mubr.f32.mxu0 0.0
    %v5525 = vand.u32 %v3885, 4294901760
    %v5526 = vsub.f32 %v3885, %v5525
    %5527 = vmatmul.mubr.f32.gmra.mxu0 %v5526
    %v5528 = vpop.f32.mrf.mxu0
    %v5529 = vadd.f32 %v5405, %v5528
    %v5530 = vpop.f32.mrf.mxu0
    %5531 = vmatprep.mubr.f32.mxu0 0.0
    %v5532 = vand.u32 %v3888, 4294901760
    %v5533 = vsub.f32 %v3888, %v5532
    %5534 = vmatmul.mubr.f32.gmra.mxu0 %v5533
    %v5535 = vpop.f32.mrf.mxu0
    %v5536 = vadd.f32 %v5411, %v5535
    %v5537 = vpop.f32.mrf.mxu0
    %5538 = vmatprep.mubr.f32.mxu0 0.0
    %v5539 = vand.u32 %v3891, 4294901760
    %v5540 = vsub.f32 %v3891, %v5539
    %5541 = vmatmul.mubr.f32.gmra.mxu0 %v5540
    %v5542 = vpop.f32.mrf.mxu0
    %v5543 = vadd.f32 %v5417, %v5542
    %v5544 = vpop.f32.mrf.mxu0
    %5545 = vmatprep.mubr.f32.mxu0 0.0
    %v5546 = vand.u32 %v3894, 4294901760
    %v5547 = vsub.f32 %v3894, %v5546
    %5548 = vmatmul.mubr.f32.gmra.mxu0 %v5547
    %v5549 = vpop.f32.mrf.mxu0
    %v5550 = vadd.f32 %v5423, %v5549
    %v5551 = vpop.f32.mrf.mxu0
    %5552 = vmatprep.mubr.f32.mxu0 0.0
    %v5553 = vand.u32 %v3897, 4294901760
    %v5554 = vsub.f32 %v3897, %v5553
    %5555 = vmatmul.mubr.f32.gmra.mxu0 %v5554
    %v5556 = vpop.f32.mrf.mxu0
    %v5557 = vadd.f32 %v5429, %v5556
    %v5558 = vpop.f32.mrf.mxu0
    %5559 = vmatprep.mubr.f32.mxu0 0.0
    %v5560 = vand.u32 %v3900, 4294901760
    %v5561 = vsub.f32 %v3900, %v5560
    %5562 = vmatmul.mubr.f32.gmra.mxu0 %v5561
    %v5563 = vpop.f32.mrf.mxu0
    %v5564 = vadd.f32 %v5435, %v5563
    %v5565 = vpop.f32.mrf.mxu0
    %5566 = vdwg.mxu0
    %5567 = vmatprep.subr.mxu0 0.0
    %5568 = vmatpush1.msra.mxu0 0.0
    %5569 = vmatprep.subr.mxu0 0.0
    %5570 = vmatpush1.msra.mxu0 0.0
    %5571 = vmatprep.subr.mxu0 0.0
    %5572 = vmatpush1.msra.mxu0 0.0
    %5573 = vmatprep.subr.mxu0 0.0
    %5574 = vmatpush1.msra.mxu0 0.0
    %5575 = vmatprep.subr.mxu0 0.0
    %5576 = vmatpush1.msra.mxu0 0.0
    %5577 = vmatprep.subr.mxu0 0.0
    %5578 = vmatpush1.msra.mxu0 0.0
    %5579 = vmatprep.subr.mxu0 0.0
    %5580 = vmatpush1.msra.mxu0 0.0
    %5581 = vmatprep.subr.mxu0 0.0
    %5582 = vmatpush1.msra.mxu0 0.0
    %5583 = vmatprep.subr.mxu0 0.0
    %5584 = vmatpush1.msra.mxu0 0.0
    %5585 = vmatprep.subr.mxu0 0.0
    %5586 = vmatpush1.msra.mxu0 0.0
    %5587 = vmatprep.subr.mxu0 0.0
    %5588 = vmatpush1.msra.mxu0 0.0
    %5589 = vmatprep.subr.mxu0 0.0
    %5590 = vmatpush1.msra.mxu0 0.0
    %5591 = vmatprep.subr.mxu0 0.0
    %v5592 = vand.u32 %v3805, 4294901760
    %5593 = vmatpush1.msra.mxu0 %v5592
    %5594 = vmatprep.subr.mxu0 0.0
    %v5595 = vand.u32 %v3804, 4294901760
    %5596 = vmatpush1.msra.mxu0 %v5595
    %5597 = vmatprep.subr.mxu0 0.0
    %v5598 = vand.u32 %v3803, 4294901760
    %5599 = vmatpush1.msra.mxu0 %v5598
    %5600 = vmatprep.subr.mxu0 0.0
    %v5601 = vand.u32 %v3802, 4294901760
    %5602 = vmatpush1.msra.mxu0 %v5601
    %5603 = vmatprep.subr.mxu0 0.0
    %5604 = vmatpush2.msra.mxu0 0.0
    %5605 = vmatprep.subr.mxu0 0.0
    %5606 = vmatpush2.msra.mxu0 0.0
    %5607 = vmatprep.subr.mxu0 0.0
    %5608 = vmatpush2.msra.mxu0 0.0
    %5609 = vmatprep.subr.mxu0 0.0
    %5610 = vmatpush2.msra.mxu0 0.0
    %5611 = vmatprep.subr.mxu0 0.0
    %5612 = vmatpush2.msra.mxu0 0.0
    %5613 = vmatprep.subr.mxu0 0.0
    %5614 = vmatpush2.msra.mxu0 0.0
    %5615 = vmatprep.subr.mxu0 0.0
    %5616 = vmatpush2.msra.mxu0 0.0
    %5617 = vmatprep.subr.mxu0 0.0
    %5618 = vmatpush2.msra.mxu0 0.0
    %5619 = vmatprep.subr.mxu0 0.0
    %5620 = vmatpush2.msra.mxu0 0.0
    %5621 = vmatprep.subr.mxu0 0.0
    %5622 = vmatpush2.msra.mxu0 0.0
    %5623 = vmatprep.subr.mxu0 0.0
    %5624 = vmatpush2.msra.mxu0 0.0
    %5625 = vmatprep.subr.mxu0 0.0
    %5626 = vmatpush2.msra.mxu0 0.0
    %5627 = vmatprep.subr.mxu0 0.0
    %5628 = vmatpush2.msra.mxu0 0.0
    %5629 = vmatprep.subr.mxu0 0.0
    %5630 = vmatpush2.msra.mxu0 0.0
    %5631 = vmatprep.subr.mxu0 0.0
    %5632 = vmatpush2.msra.mxu0 0.0
    %5633 = vmatprep.subr.mxu0 0.0
    %5634 = vmatpush2.msra.mxu0 0.0
    %5635 = vmatprep.mubr.f32.mxu0 0.0
    %v5636 = vand.u32 %v3879, 4294901760
    %v5637 = vsub.f32 %v3879, %v5636
    %v5638 = vand.u32 %v5637, 4294901760
    %5639 = vmatmul.mubr.f32.gmra.mxu0 %v5638
    %v5640 = vpop.f32.mrf.mxu0
    %v5641 = vadd.f32 %v5515, %v5640
    %v5642 = vpop.f32.mrf.mxu0
    %5643 = vmatprep.mubr.f32.mxu0 0.0
    %v5644 = vand.u32 %v3882, 4294901760
    %v5645 = vsub.f32 %v3882, %v5644
    %v5646 = vand.u32 %v5645, 4294901760
    %5647 = vmatmul.mubr.f32.gmra.mxu0 %v5646
    %v5648 = vpop.f32.mrf.mxu0
    %v5649 = vadd.f32 %v5522, %v5648
    %v5650 = vpop.f32.mrf.mxu0
    %5651 = vmatprep.mubr.f32.mxu0 0.0
    %v5652 = vand.u32 %v3885, 4294901760
    %v5653 = vsub.f32 %v3885, %v5652
    %v5654 = vand.u32 %v5653, 4294901760
    %5655 = vmatmul.mubr.f32.gmra.mxu0 %v5654
    %v5656 = vpop.f32.mrf.mxu0
    %v5657 = vadd.f32 %v5529, %v5656
    %v5658 = vpop.f32.mrf.mxu0
    %5659 = vmatprep.mubr.f32.mxu0 0.0
    %v5660 = vand.u32 %v3888, 4294901760
    %v5661 = vsub.f32 %v3888, %v5660
    %v5662 = vand.u32 %v5661, 4294901760
    %5663 = vmatmul.mubr.f32.gmra.mxu0 %v5662
    %v5664 = vpop.f32.mrf.mxu0
    %v5665 = vadd.f32 %v5536, %v5664
    %v5666 = vpop.f32.mrf.mxu0
    %5667 = vmatprep.mubr.f32.mxu0 0.0
    %v5668 = vand.u32 %v3891, 4294901760
    %v5669 = vsub.f32 %v3891, %v5668
    %v5670 = vand.u32 %v5669, 4294901760
    %5671 = vmatmul.mubr.f32.gmra.mxu0 %v5670
    %v5672 = vpop.f32.mrf.mxu0
    %v5673 = vadd.f32 %v5543, %v5672
    %v5674 = vpop.f32.mrf.mxu0
    %5675 = vmatprep.mubr.f32.mxu0 0.0
    %v5676 = vand.u32 %v3894, 4294901760
    %v5677 = vsub.f32 %v3894, %v5676
    %v5678 = vand.u32 %v5677, 4294901760
    %5679 = vmatmul.mubr.f32.gmra.mxu0 %v5678
    %v5680 = vpop.f32.mrf.mxu0
    %v5681 = vadd.f32 %v5550, %v5680
    %v5682 = vpop.f32.mrf.mxu0
    %5683 = vmatprep.mubr.f32.mxu0 0.0
    %v5684 = vand.u32 %v3897, 4294901760
    %v5685 = vsub.f32 %v3897, %v5684
    %v5686 = vand.u32 %v5685, 4294901760
    %5687 = vmatmul.mubr.f32.gmra.mxu0 %v5686
    %v5688 = vpop.f32.mrf.mxu0
    %v5689 = vadd.f32 %v5557, %v5688
    %v5690 = vpop.f32.mrf.mxu0
    %5691 = vmatprep.mubr.f32.mxu0 0.0
    %v5692 = vand.u32 %v3900, 4294901760
    %v5693 = vsub.f32 %v3900, %v5692
    %v5694 = vand.u32 %v5693, 4294901760
    %5695 = vmatmul.mubr.f32.gmra.mxu0 %v5694
    %v5696 = vpop.f32.mrf.mxu0
    %v5697 = vadd.f32 %v5564, %v5696
    %v5698 = vpop.f32.mrf.mxu0
    %5699 = vdwg.mxu0
    %5700 = vmatprep.subr.mxu0 0.0
    %5701 = vmatpush1.msra.mxu0 0.0
    %5702 = vmatprep.subr.mxu0 0.0
    %5703 = vmatpush1.msra.mxu0 0.0
    %5704 = vmatprep.subr.mxu0 0.0
    %5705 = vmatpush1.msra.mxu0 0.0
    %5706 = vmatprep.subr.mxu0 0.0
    %5707 = vmatpush1.msra.mxu0 0.0
    %5708 = vmatprep.subr.mxu0 0.0
    %5709 = vmatpush1.msra.mxu0 0.0
    %5710 = vmatprep.subr.mxu0 0.0
    %5711 = vmatpush1.msra.mxu0 0.0
    %5712 = vmatprep.subr.mxu0 0.0
    %5713 = vmatpush1.msra.mxu0 0.0
    %5714 = vmatprep.subr.mxu0 0.0
    %5715 = vmatpush1.msra.mxu0 0.0
    %5716 = vmatprep.subr.mxu0 0.0
    %5717 = vmatpush1.msra.mxu0 0.0
    %5718 = vmatprep.subr.mxu0 0.0
    %5719 = vmatpush1.msra.mxu0 0.0
    %5720 = vmatprep.subr.mxu0 0.0
    %5721 = vmatpush1.msra.mxu0 0.0
    %5722 = vmatprep.subr.mxu0 0.0
    %5723 = vmatpush1.msra.mxu0 0.0
    %5724 = vmatprep.subr.mxu0 0.0
    %v5725 = vand.u32 %v3805, 4294901760
    %v5726 = vsub.f32 %v3805, %v5725
    %v5727 = vand.u32 %v5726, 4294901760
    %5728 = vmatpush1.msra.mxu0 %v5727
    %5729 = vmatprep.subr.mxu0 0.0
    %v5730 = vand.u32 %v3804, 4294901760
    %v5731 = vsub.f32 %v3804, %v5730
    %v5732 = vand.u32 %v5731, 4294901760
    %5733 = vmatpush1.msra.mxu0 %v5732
    %5734 = vmatprep.subr.mxu0 0.0
    %v5735 = vand.u32 %v3803, 4294901760
    %v5736 = vsub.f32 %v3803, %v5735
    %v5737 = vand.u32 %v5736, 4294901760
    %5738 = vmatpush1.msra.mxu0 %v5737
    %5739 = vmatprep.subr.mxu0 0.0
    %v5740 = vand.u32 %v3802, 4294901760
    %v5741 = vsub.f32 %v3802, %v5740
    %v5742 = vand.u32 %v5741, 4294901760
    %5743 = vmatpush1.msra.mxu0 %v5742
    %5744 = vmatprep.subr.mxu0 0.0
    %5745 = vmatpush2.msra.mxu0 0.0
    %5746 = vmatprep.subr.mxu0 0.0
    %5747 = vmatpush2.msra.mxu0 0.0
    %5748 = vmatprep.subr.mxu0 0.0
    %5749 = vmatpush2.msra.mxu0 0.0
    %5750 = vmatprep.subr.mxu0 0.0
    %5751 = vmatpush2.msra.mxu0 0.0
    %5752 = vmatprep.subr.mxu0 0.0
    %5753 = vmatpush2.msra.mxu0 0.0
    %5754 = vmatprep.subr.mxu0 0.0
    %5755 = vmatpush2.msra.mxu0 0.0
    %5756 = vmatprep.subr.mxu0 0.0
    %5757 = vmatpush2.msra.mxu0 0.0
    %5758 = vmatprep.subr.mxu0 0.0
    %5759 = vmatpush2.msra.mxu0 0.0
    %5760 = vmatprep.subr.mxu0 0.0
    %5761 = vmatpush2.msra.mxu0 0.0
    %5762 = vmatprep.subr.mxu0 0.0
    %5763 = vmatpush2.msra.mxu0 0.0
    %5764 = vmatprep.subr.mxu0 0.0
    %5765 = vmatpush2.msra.mxu0 0.0
    %5766 = vmatprep.subr.mxu0 0.0
    %5767 = vmatpush2.msra.mxu0 0.0
    %5768 = vmatprep.subr.mxu0 0.0
    %5769 = vmatpush2.msra.mxu0 0.0
    %5770 = vmatprep.subr.mxu0 0.0
    %5771 = vmatpush2.msra.mxu0 0.0
    %5772 = vmatprep.subr.mxu0 0.0
    %5773 = vmatpush2.msra.mxu0 0.0
    %5774 = vmatprep.subr.mxu0 0.0
    %5775 = vmatpush2.msra.mxu0 0.0
    %5776 = vmatprep.mubr.f32.mxu0 0.0
    %v5777 = vand.u32 %v3879, 4294901760
    %5778 = vmatmul.mubr.f32.gmra.mxu0 %v5777
    %v5779 = vpop.f32.mrf.mxu0
    %v5780 = vadd.f32 %v5641, %v5779
    %v5781 = vpop.f32.mrf.mxu0
    %5782 = vmatprep.mubr.f32.mxu0 0.0
    %v5783 = vand.u32 %v3882, 4294901760
    %5784 = vmatmul.mubr.f32.gmra.mxu0 %v5783
    %v5785 = vpop.f32.mrf.mxu0
    %v5786 = vadd.f32 %v5649, %v5785
    %v5787 = vpop.f32.mrf.mxu0
    %5788 = vmatprep.mubr.f32.mxu0 0.0
    %v5789 = vand.u32 %v3885, 4294901760
    %5790 = vmatmul.mubr.f32.gmra.mxu0 %v5789
    %v5791 = vpop.f32.mrf.mxu0
    %v5792 = vadd.f32 %v5657, %v5791
    %v5793 = vpop.f32.mrf.mxu0
    %5794 = vmatprep.mubr.f32.mxu0 0.0
    %v5795 = vand.u32 %v3888, 4294901760
    %5796 = vmatmul.mubr.f32.gmra.mxu0 %v5795
    %v5797 = vpop.f32.mrf.mxu0
    %v5798 = vadd.f32 %v5665, %v5797
    %v5799 = vpop.f32.mrf.mxu0
    %5800 = vmatprep.mubr.f32.mxu0 0.0
    %v5801 = vand.u32 %v3891, 4294901760
    %5802 = vmatmul.mubr.f32.gmra.mxu0 %v5801
    %v5803 = vpop.f32.mrf.mxu0
    %v5804 = vadd.f32 %v5673, %v5803
    %v5805 = vpop.f32.mrf.mxu0
    %5806 = vmatprep.mubr.f32.mxu0 0.0
    %v5807 = vand.u32 %v3894, 4294901760
    %5808 = vmatmul.mubr.f32.gmra.mxu0 %v5807
    %v5809 = vpop.f32.mrf.mxu0
    %v5810 = vadd.f32 %v5681, %v5809
    %v5811 = vpop.f32.mrf.mxu0
    %5812 = vmatprep.mubr.f32.mxu0 0.0
    %v5813 = vand.u32 %v3897, 4294901760
    %5814 = vmatmul.mubr.f32.gmra.mxu0 %v5813
    %v5815 = vpop.f32.mrf.mxu0
    %v5816 = vadd.f32 %v5689, %v5815
    %v5817 = vpop.f32.mrf.mxu0
    %5818 = vmatprep.mubr.f32.mxu0 0.0
    %v5819 = vand.u32 %v3900, 4294901760
    %5820 = vmatmul.mubr.f32.gmra.mxu0 %v5819
    %v5821 = vpop.f32.mrf.mxu0
    %v5822 = vadd.f32 %v5697, %v5821
    %v5823 = vpop.f32.mrf.mxu0
    %5824 = vdwg.mxu0
    %5825 = vmatprep.subr.mxu0 0.0
    %5826 = vmatpush1.msra.mxu0 0.0
    %5827 = vmatprep.subr.mxu0 0.0
    %5828 = vmatpush1.msra.mxu0 0.0
    %5829 = vmatprep.subr.mxu0 0.0
    %5830 = vmatpush1.msra.mxu0 0.0
    %5831 = vmatprep.subr.mxu0 0.0
    %5832 = vmatpush1.msra.mxu0 0.0
    %5833 = vmatprep.subr.mxu0 0.0
    %5834 = vmatpush1.msra.mxu0 0.0
    %5835 = vmatprep.subr.mxu0 0.0
    %5836 = vmatpush1.msra.mxu0 0.0
    %5837 = vmatprep.subr.mxu0 0.0
    %5838 = vmatpush1.msra.mxu0 0.0
    %5839 = vmatprep.subr.mxu0 0.0
    %5840 = vmatpush1.msra.mxu0 0.0
    %5841 = vmatprep.subr.mxu0 0.0
    %5842 = vmatpush1.msra.mxu0 0.0
    %5843 = vmatprep.subr.mxu0 0.0
    %5844 = vmatpush1.msra.mxu0 0.0
    %5845 = vmatprep.subr.mxu0 0.0
    %5846 = vmatpush1.msra.mxu0 0.0
    %5847 = vmatprep.subr.mxu0 0.0
    %5848 = vmatpush1.msra.mxu0 0.0
    %5849 = vmatprep.subr.mxu0 0.0
    %v5850 = vand.u32 %v3805, 4294901760
    %5851 = vmatpush1.msra.mxu0 %v5850
    %5852 = vmatprep.subr.mxu0 0.0
    %v5853 = vand.u32 %v3804, 4294901760
    %5854 = vmatpush1.msra.mxu0 %v5853
    %5855 = vmatprep.subr.mxu0 0.0
    %v5856 = vand.u32 %v3803, 4294901760
    %5857 = vmatpush1.msra.mxu0 %v5856
    %5858 = vmatprep.subr.mxu0 0.0
    %v5859 = vand.u32 %v3802, 4294901760
    %5860 = vmatpush1.msra.mxu0 %v5859
    %5861 = vmatprep.subr.mxu0 0.0
    %5862 = vmatpush2.msra.mxu0 0.0
    %5863 = vmatprep.subr.mxu0 0.0
    %5864 = vmatpush2.msra.mxu0 0.0
    %5865 = vmatprep.subr.mxu0 0.0
    %5866 = vmatpush2.msra.mxu0 0.0
    %5867 = vmatprep.subr.mxu0 0.0
    %5868 = vmatpush2.msra.mxu0 0.0
    %5869 = vmatprep.subr.mxu0 0.0
    %5870 = vmatpush2.msra.mxu0 0.0
    %5871 = vmatprep.subr.mxu0 0.0
    %5872 = vmatpush2.msra.mxu0 0.0
    %5873 = vmatprep.subr.mxu0 0.0
    %5874 = vmatpush2.msra.mxu0 0.0
    %5875 = vmatprep.subr.mxu0 0.0
    %5876 = vmatpush2.msra.mxu0 0.0
    %5877 = vmatprep.subr.mxu0 0.0
    %5878 = vmatpush2.msra.mxu0 0.0
    %5879 = vmatprep.subr.mxu0 0.0
    %5880 = vmatpush2.msra.mxu0 0.0
    %5881 = vmatprep.subr.mxu0 0.0
    %5882 = vmatpush2.msra.mxu0 0.0
    %5883 = vmatprep.subr.mxu0 0.0
    %5884 = vmatpush2.msra.mxu0 0.0
    %5885 = vmatprep.subr.mxu0 0.0
    %5886 = vmatpush2.msra.mxu0 0.0
    %5887 = vmatprep.subr.mxu0 0.0
    %5888 = vmatpush2.msra.mxu0 0.0
    %5889 = vmatprep.subr.mxu0 0.0
    %5890 = vmatpush2.msra.mxu0 0.0
    %5891 = vmatprep.subr.mxu0 0.0
    %5892 = vmatpush2.msra.mxu0 0.0
    %5893 = vmatprep.mubr.f32.mxu0 0.0
    %v5894 = vand.u32 %v3879, 4294901760
    %5895 = vmatmul.mubr.f32.gmra.mxu0 %v5894
    %v5896 = vpop.f32.mrf.mxu0
    %v5897 = vadd.f32 %v5780, %v5896
    %v5898 = vpop.f32.mrf.mxu0
    %5899 = vmatprep.mubr.f32.mxu0 0.0
    %v5900 = vand.u32 %v3882, 4294901760
    %5901 = vmatmul.mubr.f32.gmra.mxu0 %v5900
    %v5902 = vpop.f32.mrf.mxu0
    %v5903 = vadd.f32 %v5786, %v5902
    %v5904 = vpop.f32.mrf.mxu0
    %5905 = vmatprep.mubr.f32.mxu0 0.0
    %v5906 = vand.u32 %v3885, 4294901760
    %5907 = vmatmul.mubr.f32.gmra.mxu0 %v5906
    %v5908 = vpop.f32.mrf.mxu0
    %v5909 = vadd.f32 %v5792, %v5908
    %v5910 = vpop.f32.mrf.mxu0
    %5911 = vmatprep.mubr.f32.mxu0 0.0
    %v5912 = vand.u32 %v3888, 4294901760
    %5913 = vmatmul.mubr.f32.gmra.mxu0 %v5912
    %v5914 = vpop.f32.mrf.mxu0
    %v5915 = vadd.f32 %v5798, %v5914
    %v5916 = vpop.f32.mrf.mxu0
    %5917 = vmatprep.mubr.f32.mxu0 0.0
    %v5918 = vand.u32 %v3891, 4294901760
    %5919 = vmatmul.mubr.f32.gmra.mxu0 %v5918
    %v5920 = vpop.f32.mrf.mxu0
    %v5921 = vadd.f32 %v5804, %v5920
    %v5922 = vpop.f32.mrf.mxu0
    %5923 = vmatprep.mubr.f32.mxu0 0.0
    %v5924 = vand.u32 %v3894, 4294901760
    %5925 = vmatmul.mubr.f32.gmra.mxu0 %v5924
    %v5926 = vpop.f32.mrf.mxu0
    %v5927 = vadd.f32 %v5810, %v5926
    %v5928 = vpop.f32.mrf.mxu0
    %5929 = vmatprep.mubr.f32.mxu0 0.0
    %v5930 = vand.u32 %v3897, 4294901760
    %5931 = vmatmul.mubr.f32.gmra.mxu0 %v5930
    %v5932 = vpop.f32.mrf.mxu0
    %v5933 = vadd.f32 %v5816, %v5932
    %v5934 = vpop.f32.mrf.mxu0
    %5935 = vmatprep.mubr.f32.mxu0 0.0
    %v5936 = vand.u32 %v3900, 4294901760
    %5937 = vmatmul.mubr.f32.gmra.mxu0 %v5936
    %v5938 = vpop.f32.mrf.mxu0
    %v5939 = vadd.f32 %v5822, %v5938
    %v5940 = vpop.f32.mrf.mxu0
    %5941 = vdwg.mxu0
    %v5942 = vld [vmem:[%s7] sm:$0xff]
    %v5943 = vld [vmem:[%s7 + $0x8] sm:$0xff]
    %v5944 = vld [vmem:[%s7 + $0x10] sm:$0xff]
    %v5945 = vld [vmem:[%s7 + $0x18] sm:$0xff]
    %v5946 = vld [vmem:[%s7 + $0x20] sm:$0xff]
    %v5947 = vld [vmem:[%s7 + $0x28] sm:$0xff]
    %v5948 = vld [vmem:[%s7 + $0x30] sm:$0xff]
    %v5949 = vld [vmem:[%s7 + $0x38] sm:$0xff]
    %5950 = vset.pattern.permute.xlu0 1
    %5951 = vperm.xlu0 %5950, %v3830
    %v5952 = vpop.permute.xlu0 %5951
    %5954 = vset.pattern.permute.xlu0 1
    %5955 = vperm.xlu0 %5954, %v3831
    %v5956 = vpop.permute.xlu0 %5955
    %5958 = vset.pattern.permute.xlu0 1
    %5959 = vperm.xlu0 %5958, %v3832
    %v5960 = vpop.permute.xlu0 %5959
    %5962 = vset.pattern.permute.xlu0 1
    %5963 = vperm.xlu0 %5962, %v3833
    %v5964 = vpop.permute.xlu0 %5963
    %5966 = vset.pattern.permute.xlu0 1
    %5967 = vperm.xlu0 %5966, %v3834
    %v5968 = vpop.permute.xlu0 %5967
    %5970 = vset.pattern.permute.xlu0 1
    %5971 = vperm.xlu0 %5970, %v3835
    %v5972 = vpop.permute.xlu0 %5971
    %5974 = vset.pattern.permute.xlu0 1
    %5975 = vperm.xlu0 %5974, %v3836
    %v5976 = vpop.permute.xlu0 %5975
    %5978 = vset.pattern.permute.xlu0 1
    %5979 = vperm.xlu0 %5978, %v3837
    %v5980 = vpop.permute.xlu0 %5979
    %5982 = vmatprep.subr.mxu0 0.0
    %5983 = vmatpush1.msra.mxu0 %v351
    %5984 = vmatprep.subr.mxu0 0.0
    %5985 = vmatpush1.msra.mxu0 %v350
    %5986 = vmatprep.subr.mxu0 0.0
    %5987 = vmatpush1.msra.mxu0 %v349
    %5988 = vmatprep.subr.mxu0 0.0
    %5989 = vmatpush1.msra.mxu0 %v348
    %5990 = vmatprep.subr.mxu0 0.0
    %5991 = vmatpush1.msra.mxu0 %v347
    %5992 = vmatprep.subr.mxu0 0.0
    %5993 = vmatpush1.msra.mxu0 %v346
    %5994 = vmatprep.subr.mxu0 0.0
    %5995 = vmatpush1.msra.mxu0 %v345
    %5996 = vmatprep.subr.mxu0 0.0
    %5997 = vmatpush1.msra.mxu0 %v344
    %5998 = vmatprep.subr.mxu0 0.0
    %5999 = vmatpush1.msra.mxu0 %v343
    %6000 = vmatprep.subr.mxu0 0.0
    %6001 = vmatpush1.msra.mxu0 %v342
    %6002 = vmatprep.subr.mxu0 0.0
    %6003 = vmatpush1.msra.mxu0 %v341
    %6004 = vmatprep.subr.mxu0 0.0
    %6005 = vmatpush1.msra.mxu0 %v340
    %6006 = vmatprep.subr.mxu0 0.0
    %6007 = vmatpush1.msra.mxu0 %v339
    %6008 = vmatprep.subr.mxu0 0.0
    %6009 = vmatpush1.msra.mxu0 %v338
    %6010 = vmatprep.subr.mxu0 0.0
    %6011 = vmatpush1.msra.mxu0 %v337
    %6012 = vmatprep.subr.mxu0 0.0
    %6013 = vmatpush1.msra.mxu0 %v336
    %6014 = vmatprep.subr.mxu0 0.0
    %6015 = vmatpush2.msra.mxu0 0.0
    %6016 = vmatprep.subr.mxu0 0.0
    %6017 = vmatpush2.msra.mxu0 0.0
    %6018 = vmatprep.subr.mxu0 0.0
    %6019 = vmatpush2.msra.mxu0 0.0
    %6020 = vmatprep.subr.mxu0 0.0
    %6021 = vmatpush2.msra.mxu0 0.0
    %6022 = vmatprep.subr.mxu0 0.0
    %6023 = vmatpush2.msra.mxu0 0.0
    %6024 = vmatprep.subr.mxu0 0.0
    %6025 = vmatpush2.msra.mxu0 0.0
    %6026 = vmatprep.subr.mxu0 0.0
    %6027 = vmatpush2.msra.mxu0 0.0
    %6028 = vmatprep.subr.mxu0 0.0
    %6029 = vmatpush2.msra.mxu0 0.0
    %6030 = vmatprep.subr.mxu0 0.0
    %6031 = vmatpush2.msra.mxu0 0.0
    %6032 = vmatprep.subr.mxu0 0.0
    %6033 = vmatpush2.msra.mxu0 0.0
    %6034 = vmatprep.subr.mxu0 0.0
    %6035 = vmatpush2.msra.mxu0 0.0
    %6036 = vmatprep.subr.mxu0 0.0
    %6037 = vmatpush2.msra.mxu0 0.0
    %6038 = vmatprep.subr.mxu0 0.0
    %6039 = vmatpush2.msra.mxu0 0.0
    %6040 = vmatprep.subr.mxu0 0.0
    %6041 = vmatpush2.msra.mxu0 0.0
    %6042 = vmatprep.subr.mxu0 0.0
    %6043 = vmatpush2.msra.mxu0 0.0
    %6044 = vmatprep.subr.mxu0 0.0
    %6045 = vmatpush2.msra.mxu0 0.0
    %6046 = vmatprep.mubr.f32.mxu0 0.0
    %6047 = vmatmul.mubr.f32.gmra.mxu0 %v5942
    %v6048 = vpop.f32.mrf.mxu0
    %v6049 = vadd.f32 %v5952, %v6048
    %v6050 = vpop.f32.mrf.mxu0
    %6051 = vmatprep.mubr.f32.mxu0 0.0
    %6052 = vmatmul.mubr.f32.gmra.mxu0 %v5943
    %v6053 = vpop.f32.mrf.mxu0
    %v6054 = vadd.f32 %v5956, %v6053
    %v6055 = vpop.f32.mrf.mxu0
    %6056 = vmatprep.mubr.f32.mxu0 0.0
    %6057 = vmatmul.mubr.f32.gmra.mxu0 %v5944
    %v6058 = vpop.f32.mrf.mxu0
    %v6059 = vadd.f32 %v5960, %v6058
    %v6060 = vpop.f32.mrf.mxu0
    %6061 = vmatprep.mubr.f32.mxu0 0.0
    %6062 = vmatmul.mubr.f32.gmra.mxu0 %v5945
    %v6063 = vpop.f32.mrf.mxu0
    %v6064 = vadd.f32 %v5964, %v6063
    %v6065 = vpop.f32.mrf.mxu0
    %6066 = vmatprep.mubr.f32.mxu0 0.0
    %6067 = vmatmul.mubr.f32.gmra.mxu0 %v5946
    %v6068 = vpop.f32.mrf.mxu0
    %v6069 = vadd.f32 %v5968, %v6068
    %v6070 = vpop.f32.mrf.mxu0
    %6071 = vmatprep.mubr.f32.mxu0 0.0
    %6072 = vmatmul.mubr.f32.gmra.mxu0 %v5947
    %v6073 = vpop.f32.mrf.mxu0
    %v6074 = vadd.f32 %v5972, %v6073
    %v6075 = vpop.f32.mrf.mxu0
    %6076 = vmatprep.mubr.f32.mxu0 0.0
    %6077 = vmatmul.mubr.f32.gmra.mxu0 %v5948
    %v6078 = vpop.f32.mrf.mxu0
    %v6079 = vadd.f32 %v5976, %v6078
    %v6080 = vpop.f32.mrf.mxu0
    %6081 = vmatprep.mubr.f32.mxu0 0.0
    %6082 = vmatmul.mubr.f32.gmra.mxu0 %v5949
    %v6083 = vpop.f32.mrf.mxu0
    %v6084 = vadd.f32 %v5980, %v6083
    %v6085 = vpop.f32.mrf.mxu0
    %6086 = vdwg.mxu0
    %v6087 = vmul.f32 %v5897, %v6049
    %v6088 = vmul.f32 %v5903, %v6054
    %v6089 = vmul.f32 %v5909, %v6059
    %v6090 = vmul.f32 %v5915, %v6064
    %v6091 = vmul.f32 %v5921, %v6069
    %v6092 = vmul.f32 %v5927, %v6074
    %v6093 = vmul.f32 %v5933, %v6079
    %v6094 = vmul.f32 %v5939, %v6084
    %v6095 = vld [vmem:[#allocation2] sm:$0xff]
    %v6096 = vld [vmem:[#allocation2 + $0x8] sm:$0xff]
    %v6097 = vld [vmem:[#allocation2 + $0x10] sm:$0xff]
    %v6098 = vld [vmem:[#allocation2 + $0x18] sm:$0xff]
    %v6099 = vld [vmem:[#allocation2 + $0x20] sm:$0xff]
    %v6100 = vld [vmem:[#allocation2 + $0x28] sm:$0xff]
    %v6101 = vld [vmem:[#allocation2 + $0x30] sm:$0xff]
    %v6102 = vld [vmem:[#allocation2 + $0x38] sm:$0xff]
    %6103 = vset.pattern.permute.xlu0 2
    %6104 = vperm.xlu0 %6103, %v3830
    %v6105 = vpop.permute.xlu0 %6104
    %6107 = vset.pattern.permute.xlu0 2
    %6108 = vperm.xlu0 %6107, %v3831
    %v6109 = vpop.permute.xlu0 %6108
    %6111 = vset.pattern.permute.xlu0 2
    %6112 = vperm.xlu0 %6111, %v3832
    %v6113 = vpop.permute.xlu0 %6112
    %6115 = vset.pattern.permute.xlu0 2
    %6116 = vperm.xlu0 %6115, %v3833
    %v6117 = vpop.permute.xlu0 %6116
    %6119 = vset.pattern.permute.xlu0 2
    %6120 = vperm.xlu0 %6119, %v3834
    %v6121 = vpop.permute.xlu0 %6120
    %6123 = vset.pattern.permute.xlu0 2
    %6124 = vperm.xlu0 %6123, %v3835
    %v6125 = vpop.permute.xlu0 %6124
    %6127 = vset.pattern.permute.xlu0 2
    %6128 = vperm.xlu0 %6127, %v3836
    %v6129 = vpop.permute.xlu0 %6128
    %6131 = vset.pattern.permute.xlu0 2
    %6132 = vperm.xlu0 %6131, %v3837
    %v6133 = vpop.permute.xlu0 %6132
    %vm6135 = vcmask 523264
    %v6137 = vsel %vm6135, %v6095, 0
    %v6140 = vsel %vm6135, %v6096, 0
    %v6143 = vsel %vm6135, %v6097, 0
    %v6146 = vsel %vm6135, %v6098, 0
    %v6149 = vsel %vm6135, %v6099, 0
    %v6152 = vsel %vm6135, %v6100, 0
    %v6155 = vsel %vm6135, %v6101, 0
    %v6158 = vsel %vm6135, %v6102, 0
    %6160 = vmatprep.subr.mxu0 0.0
    %6161 = vmatpush1.msra.mxu0 0.0
    %6162 = vmatprep.subr.mxu0 0.0
    %6163 = vmatpush1.msra.mxu0 0.0
    %6164 = vmatprep.subr.mxu0 0.0
    %6165 = vmatpush1.msra.mxu0 0.0
    %6166 = vmatprep.subr.mxu0 0.0
    %6167 = vmatpush1.msra.mxu0 0.0
    %6168 = vmatprep.subr.mxu0 0.0
    %6169 = vmatpush1.msra.mxu0 0.0
    %6170 = vmatprep.subr.mxu0 0.0
    %6171 = vmatpush1.msra.mxu0 0.0
    %6172 = vmatprep.subr.mxu0 0.0
    %6173 = vmatpush1.msra.mxu0 0.0
    %6174 = vmatprep.subr.mxu0 0.0
    %6175 = vmatpush1.msra.mxu0 0.0
    %6176 = vmatprep.subr.mxu0 0.0
    %6177 = vmatpush1.msra.mxu0 %v6094
    %6178 = vmatprep.subr.mxu0 0.0
    %6179 = vmatpush1.msra.mxu0 %v6093
    %6180 = vmatprep.subr.mxu0 0.0
    %6181 = vmatpush1.msra.mxu0 %v6092
    %6182 = vmatprep.subr.mxu0 0.0
    %6183 = vmatpush1.msra.mxu0 %v6091
    %6184 = vmatprep.subr.mxu0 0.0
    %6185 = vmatpush1.msra.mxu0 %v6090
    %6186 = vmatprep.subr.mxu0 0.0
    %6187 = vmatpush1.msra.mxu0 %v6089
    %6188 = vmatprep.subr.mxu0 0.0
    %6189 = vmatpush1.msra.mxu0 %v6088
    %6190 = vmatprep.subr.mxu0 0.0
    %6191 = vmatpush1.msra.mxu0 %v6087
    %6192 = vmatprep.subr.mxu0 0.0
    %6193 = vmatpush2.msra.mxu0 0.0
    %6194 = vmatprep.subr.mxu0 0.0
    %6195 = vmatpush2.msra.mxu0 0.0
    %6196 = vmatprep.subr.mxu0 0.0
    %6197 = vmatpush2.msra.mxu0 0.0
    %6198 = vmatprep.subr.mxu0 0.0
    %6199 = vmatpush2.msra.mxu0 0.0
    %6200 = vmatprep.subr.mxu0 0.0
    %6201 = vmatpush2.msra.mxu0 0.0
    %6202 = vmatprep.subr.mxu0 0.0
    %6203 = vmatpush2.msra.mxu0 0.0
    %6204 = vmatprep.subr.mxu0 0.0
    %6205 = vmatpush2.msra.mxu0 0.0
    %6206 = vmatprep.subr.mxu0 0.0
    %6207 = vmatpush2.msra.mxu0 0.0
    %6208 = vmatprep.subr.mxu0 0.0
    %6209 = vmatpush2.msra.mxu0 0.0
    %6210 = vmatprep.subr.mxu0 0.0
    %6211 = vmatpush2.msra.mxu0 0.0
    %6212 = vmatprep.subr.mxu0 0.0
    %6213 = vmatpush2.msra.mxu0 0.0
    %6214 = vmatprep.subr.mxu0 0.0
    %6215 = vmatpush2.msra.mxu0 0.0
    %6216 = vmatprep.subr.mxu0 0.0
    %6217 = vmatpush2.msra.mxu0 0.0
    %6218 = vmatprep.subr.mxu0 0.0
    %6219 = vmatpush2.msra.mxu0 0.0
    %6220 = vmatprep.subr.mxu0 0.0
    %6221 = vmatpush2.msra.mxu0 0.0
    %6222 = vmatprep.subr.mxu0 0.0
    %6223 = vmatpush2.msra.mxu0 0.0
    %6224 = vmatprep.mubr.f32.mxu0 0.0
    %6225 = vmatmul.mubr.f32.gmra.mxu0 %v6137
    %v6226 = vpop.f32.mrf.mxu0
    %v6227 = vadd.f32 %v6105, %v6226
    %v6228 = vpop.f32.mrf.mxu0
    %6229 = vmatprep.mubr.f32.mxu0 0.0
    %6230 = vmatmul.mubr.f32.gmra.mxu0 %v6140
    %v6231 = vpop.f32.mrf.mxu0
    %v6232 = vadd.f32 %v6109, %v6231
    %v6233 = vpop.f32.mrf.mxu0
    %6234 = vmatprep.mubr.f32.mxu0 0.0
    %6235 = vmatmul.mubr.f32.gmra.mxu0 %v6143
    %v6236 = vpop.f32.mrf.mxu0
    %v6237 = vadd.f32 %v6113, %v6236
    %v6238 = vpop.f32.mrf.mxu0
    %6239 = vmatprep.mubr.f32.mxu0 0.0
    %6240 = vmatmul.mubr.f32.gmra.mxu0 %v6146
    %v6241 = vpop.f32.mrf.mxu0
    %v6242 = vadd.f32 %v6117, %v6241
    %v6243 = vpop.f32.mrf.mxu0
    %6244 = vmatprep.mubr.f32.mxu0 0.0
    %6245 = vmatmul.mubr.f32.gmra.mxu0 %v6149
    %v6246 = vpop.f32.mrf.mxu0
    %v6247 = vadd.f32 %v6121, %v6246
    %v6248 = vpop.f32.mrf.mxu0
    %6249 = vmatprep.mubr.f32.mxu0 0.0
    %6250 = vmatmul.mubr.f32.gmra.mxu0 %v6152
    %v6251 = vpop.f32.mrf.mxu0
    %v6252 = vadd.f32 %v6125, %v6251
    %v6253 = vpop.f32.mrf.mxu0
    %6254 = vmatprep.mubr.f32.mxu0 0.0
    %6255 = vmatmul.mubr.f32.gmra.mxu0 %v6155
    %v6256 = vpop.f32.mrf.mxu0
    %v6257 = vadd.f32 %v6129, %v6256
    %v6258 = vpop.f32.mrf.mxu0
    %6259 = vmatprep.mubr.f32.mxu0 0.0
    %6260 = vmatmul.mubr.f32.gmra.mxu0 %v6158
    %v6261 = vpop.f32.mrf.mxu0
    %v6262 = vadd.f32 %v6133, %v6261
    %v6263 = vpop.f32.mrf.mxu0
    %6264 = vdwg.mxu0
    %6265 = vst [vmem:[#allocation5] sm:$0xff] %v6227
    %6266 = vst [vmem:[#allocation5 + $0x8] sm:$0xff] %v6232
    %6267 = vst [vmem:[#allocation5 + $0x10] sm:$0xff] %v6237
    %6268 = vst [vmem:[#allocation5 + $0x18] sm:$0xff] %v6242
    %6269 = vst [vmem:[#allocation5 + $0x20] sm:$0xff] %v6247
    %6270 = vst [vmem:[#allocation5 + $0x28] sm:$0xff] %v6252
    %6271 = vst [vmem:[#allocation5 + $0x30] sm:$0xff] %v6257
    %6272 = vst [vmem:[#allocation5 + $0x38] sm:$0xff] %v6262
    // Predicated region
    $region46: #{tpu_custom_call.1} parent=1 // pred_check
      _
    $region47: #{tpu_custom_call.1} parent=1 // pred_check_branch
      %6274 = sbr.rel (0) target = $region49
    $region48: #{tpu_custom_call.1} parent=1 // pred_region
      %s6276 = ssub.s32 1024, 1024
      %6277 = vsyncadd [#allocation4], %s6276
      %s6278 = sshll.u32 [#allocation5], 4
      %s6279 = int_to_ptr.vmem [resolvable:$true] %s6278
      %6284 = dma.vmem_to_hbm [thread:$0]  %s6279, 1024, %s10, [#allocation4], 128, 128, 8
    $region49: #{tpu_custom_call.1} parent=1 // pred_fallthru
      _
    // Predicated region
    $region50: #{tpu_custom_call.1} parent=1 // pred_check
      _
    $region51: #{tpu_custom_call.1} parent=1 // pred_check_branch
      %6286 = sbr.rel (0) target = $region53
    $region52: #{tpu_custom_call.1} parent=1 // pred_region
      %6287 = dma.done [#allocation4], 1024
    $region53: #{tpu_custom_call.1} parent=1 // pred_fallthru
      _
    %6288 = vsyncpa [#allocation3], 1
    %6289 = vsyncpa [#allocation4], 1

</llo_original>
